<compile_context>
chip_gen: v6e
topology: v6e:2x2x1
jax: 0.10.0
libtpu: 0.0.40
codegen_flags: <defaults>
</compile_context>

<pallas_src>
import jax
import jax.numpy as jnp
from jax.experimental import pallas as pl
from jax.experimental.pallas import tpu as pltpu


D_IN = 16 * 10          # 160
D_H1 = 512
D_H2 = 1024
D_OUT = 28 * 28         # 784
D_OUT_PAD = 896         # 7 * 128  (lane-dense padded output width)


def _round_up(x, m):
    return (x + m - 1) // m * m


def _default_tiling():
    """Pick (tile_m, vmem_limit_bytes) per TPU generation."""
    vmem = 64 << 20  # conservative default (v7x-sized)
    try:
        info = pltpu.get_tpu_info()
        vmem = int(getattr(info, "vmem_capacity_bytes", vmem))
    except Exception:
        pass
    if vmem >= (96 << 20):          # v5e / v6e: 128 MiB physical VMEM
        return 1024, 64 << 20
    return 256, 32 << 20            # v7x: 64 MiB physical VMEM


def _decoder_kernel(x_ref, w1_ref, b1_ref, w2_ref, b2_ref, w3_ref, b3_ref, out_ref):
    # Linear(160 -> 512) + ReLU  (bf16 operands, f32 MXU accumulation)
    h1 = jnp.dot(x_ref[...], w1_ref[...], preferred_element_type=jnp.float32)
    h1 = jnp.maximum(h1 + b1_ref[...], 0.0)
    # Linear(512 -> 1024) + ReLU
    h2 = jnp.dot(h1.astype(jnp.bfloat16), w2_ref[...], preferred_element_type=jnp.float32)
    h2 = jnp.maximum(h2 + b2_ref[...], 0.0)
    # Linear(1024 -> 896 padded) + Sigmoid (cols 784..895 are zero padding).
    h3 = jnp.dot(h2.astype(jnp.bfloat16), w3_ref[...], preferred_element_type=jnp.float32)
    z = h3 + b3_ref[...]
    # sigmoid(z) == 0.5*tanh(0.5*z) + 0.5  -> tanh runs on the EUP slot.
    y = 0.5 * jnp.tanh(0.5 * z) + 0.5
    out_ref[...] = y.astype(out_ref.dtype)   # bf16 store (half the writeback bytes)


def prepare_params(params):
    """Cast matmul weights to bf16 and lane-pad the last layer to 896 outputs."""
    w1, b1, w2, b2, w3, b3 = params
    w3p = jnp.pad(w3, ((0, 0), (0, D_OUT_PAD - D_OUT)))
    b3p = jnp.pad(b3, ((0, 0), (0, D_OUT_PAD - D_OUT)))
    return (w1.astype(jnp.bfloat16), b1.astype(jnp.float32),
            w2.astype(jnp.bfloat16), b2.astype(jnp.float32),
            w3p.astype(jnp.bfloat16), b3p.astype(jnp.float32))


def decoder_forward(x, kernel_params, *, tile_m=None, vmem_limit_bytes=None):
    """x: (b, n, d) = (b, 10, 16) float32 -> (b, 1, 28, 28) float32."""
    w1, b1, w2, b2, w3, b3 = kernel_params
    b = x.shape[0]

    auto_tm, auto_vmem = _default_tiling()
    if tile_m is None:
        tile_m = auto_tm
    if vmem_limit_bytes is None:
        vmem_limit_bytes = auto_vmem

    # Flatten capsules (torch .view semantics); cast streamed operand to bf16.
    x_flat = x.reshape(b, D_IN).astype(jnp.bfloat16)

    # Pad batch to a sublane multiple (>=8) and tile it in tile_m-row blocks.
    b_pad = _round_up(b, 8)
    tm = min(tile_m, b_pad)
    # Guarantee >= 2 grid steps when the batch allows it, so the "parallel"
    # batch axis can be split across both v7x TensorCores.
    if b_pad >= 16:
        tm = min(tm, _round_up(pl.cdiv(b_pad, 2), 8))
    b_pad = _round_up(b_pad, tm)
    if b_pad != b:
        x_flat = jnp.pad(x_flat, ((0, b_pad - b), (0, 0)))

    grid = (b_pad // tm,)

    # Weights/biases: constant index_map (VMEM-resident) + single buffer.
    def resident(shape):
        return pl.BlockSpec(shape, lambda i: (0, 0), pipeline_mode=pl.Buffered(1))

    flops = 2 * b_pad * (D_IN * D_H1 + D_H1 * D_H2 + D_H2 * D_OUT_PAD)
    weight_bytes = (D_IN * D_H1 + D_H1 * D_H2 + D_H2 * D_OUT_PAD) * 2 \
                   + (D_H1 + D_H2 + D_OUT_PAD) * 4
    bytes_accessed = b_pad * D_IN * 2 + weight_bytes + b_pad * D_OUT_PAD * 2

    out_flat = pl.pallas_call(
        _decoder_kernel,
        out_shape=jax.ShapeDtypeStruct((b_pad, D_OUT_PAD), jnp.bfloat16),
        grid=grid,
        in_specs=[
            pl.BlockSpec((tm, D_IN), lambda i: (i, 0)),       # streamed activations
            resident((D_IN, D_H1)), resident((1, D_H1)),
            resident((D_H1, D_H2)), resident((1, D_H2)),
            resident((D_H2, D_OUT_PAD)), resident((1, D_OUT_PAD)),
        ],
        out_specs=pl.BlockSpec((tm, D_OUT_PAD), lambda i: (i, 0)),
        compiler_params=pltpu.CompilerParams(
            dimension_semantics=("parallel",),
            vmem_limit_bytes=vmem_limit_bytes,
        ),
        cost_estimate=pl.CostEstimate(
            flops=flops,
            transcendentals=b_pad * D_OUT_PAD,
            bytes_accessed=bytes_accessed,
        ),
    )(x_flat, w1, b1, w2, b2, w3, b3)

    # Strip batch/lane padding, upcast, then reshape like the torch module.
    return out_flat[:b, :D_OUT].astype(jnp.float32).reshape(b, 1, 28, 28)


def init_params(key):
    """Deterministic synthetic weights (shapes/init match torch.nn.Linear)."""
    ks = jax.random.split(key, 6)

    def lin(kw, kb, fan_in, fan_out):
        bound = 1.0 / jnp.sqrt(fan_in)
        w = jax.random.uniform(kw, (fan_in, fan_out), jnp.float32, -bound, bound)
        b = jax.random.uniform(kb, (1, fan_out), jnp.float32, -bound, bound)
        return w, b

    w1, b1 = lin(ks[0], ks[1], D_IN, D_H1)
    w2, b2 = lin(ks[2], ks[3], D_H1, D_H2)
    w3, b3 = lin(ks[4], ks[5], D_H2, D_OUT)
    return (w1, b1, w2, b2, w3, b3)


def decoder_reference(x, params, matmul_dtype=jnp.float32):
    """Pure-JAX reference. matmul_dtype=bf16 mirrors the kernel's operand cast."""
    w1, b1, w2, b2, w3, b3 = params

    def lin(h, w, bias):
        return jnp.dot(h.astype(matmul_dtype), w.astype(matmul_dtype),
                       preferred_element_type=jnp.float32) + bias

    h = x.reshape(x.shape[0], D_IN)
    h = jnp.maximum(lin(h, w1, b1), 0.0)
    h = jnp.maximum(lin(h, w2, b2), 0.0)
    h = jax.nn.sigmoid(lin(h, w3, b3))
    return h.reshape(-1, 1, 28, 28)


if __name__ == "__main__":
    key = jax.random.PRNGKey(0)
    k_x, k_p = jax.random.split(key)

    batch = 2
    x = jax.random.normal(k_x, (batch, 10, 16), dtype=jnp.float32)
    params = init_params(k_p)
    kparams = prepare_params(params)

    out = decoder_forward(x, kparams)
    out = jax.block_until_ready(out)
    assert out.shape == (batch, 1, 28, 28), out.shape
    assert jnp.all(jnp.isfinite(out))

    # Same-precision reference (bf16 operands, f32 accumulation). Kernel output
    # additionally rounds through bf16 (half-ulp ~1e-3 near 1.0) -> 1e-2 atol.
    ref_bf16 = decoder_reference(x, params, matmul_dtype=jnp.bfloat16)
    err_bf16 = float(jnp.max(jnp.abs(out - ref_bf16)))
    assert err_bf16 < 1e-2, err_bf16

    # Full-f32 reference -> bounded drift from bf16 operand cast + bf16 store.
    ref_f32 = decoder_reference(x, params, matmul_dtype=jnp.float32)
    err_f32 = float(jnp.max(jnp.abs(out - ref_f32)))
    assert err_f32 < 4e-2, err_f32

    print("KERNEL_OK")
</pallas_src>

<mosaic_0001>
module attributes {stable_mosaic.version = 11 : i64} {
  func.func @_decoder_kernel(%arg0: i32, %arg1: memref<8x160xbf16, #tpu.memory_space<vmem>>, %arg2: memref<160x512xbf16, #tpu.memory_space<vmem>>, %arg3: memref<1x512xf32, #tpu.memory_space<vmem>>, %arg4: memref<512x1024xbf16, #tpu.memory_space<vmem>>, %arg5: memref<1x1024xf32, #tpu.memory_space<vmem>>, %arg6: memref<1024x896xbf16, #tpu.memory_space<vmem>>, %arg7: memref<1x896xf32, #tpu.memory_space<vmem>>, %arg8: memref<8x896xbf16, #tpu.memory_space<vmem>>) attributes {dimension_semantics = [#tpu.dimension_semantics<parallel>], iteration_bounds = array<i64: 1>, scalar_prefetch = 0 : i64, scratch_operands = 0 : i64, tpu.core_type = #tpu.core_type<tc>, window_params = [{transform_indices = @transform_0, window_bounds = array<i64: 8, 160>}, {pipeline_mode = #tpu.pipeline_mode<synchronous>, transform_indices = @transform_1, window_bounds = array<i64: 160, 512>}, {pipeline_mode = #tpu.pipeline_mode<synchronous>, transform_indices = @transform_2, window_bounds = array<i64: 1, 512>}, {pipeline_mode = #tpu.pipeline_mode<synchronous>, transform_indices = @transform_3, window_bounds = array<i64: 512, 1024>}, {pipeline_mode = #tpu.pipeline_mode<synchronous>, transform_indices = @transform_4, window_bounds = array<i64: 1, 1024>}, {pipeline_mode = #tpu.pipeline_mode<synchronous>, transform_indices = @transform_5, window_bounds = array<i64: 1024, 896>}, {pipeline_mode = #tpu.pipeline_mode<synchronous>, transform_indices = @transform_6, window_bounds = array<i64: 1, 896>}, {transform_indices = @transform_7, window_bounds = array<i64: 8, 896>}]} {
    %c0 = arith.constant 0 : index
    %c0_0 = arith.constant 0 : index
    %0 = vector.load %arg1[%c0, %c0_0] : memref<8x160xbf16, #tpu.memory_space<vmem>>, vector<8x160xbf16>
    %c0_1 = arith.constant 0 : index
    %c0_2 = arith.constant 0 : index
    %1 = vector.load %arg2[%c0_1, %c0_2] : memref<160x512xbf16, #tpu.memory_space<vmem>>, vector<160x512xbf16>
    %cst = arith.constant dense<0.000000e+00> : vector<8x512xf32>
    %2 = tpu.matmul %0, %1, %cst {dimension_numbers = #tpu.dot_dimension_numbers<[1], [0], [0], [1], [0, 0, 1, 1], [], []>} : vector<8x160xbf16>, vector<160x512xbf16>, vector<8x512xf32> -> vector<8x512xf32>
    %c0_3 = arith.constant 0 : index
    %c0_4 = arith.constant 0 : index
    %3 = vector.load %arg3[%c0_3, %c0_4] : memref<1x512xf32, #tpu.memory_space<vmem>>, vector<1x512xf32>
    %4 = vector.broadcast %3 : vector<1x512xf32> to vector<8x512xf32>
    %5 = arith.addf %2, %4 : vector<8x512xf32>
    %cst_5 = arith.constant 0.000000e+00 : f32
    %6 = vector.broadcast %cst_5 : f32 to vector<8x512xf32>
    %7 = arith.maximumf %5, %6 : vector<8x512xf32>
    %8 = arith.truncf %7 : vector<8x512xf32> to vector<8x512xbf16>
    %c0_6 = arith.constant 0 : index
    %c0_7 = arith.constant 0 : index
    %9 = vector.load %arg4[%c0_6, %c0_7] : memref<512x1024xbf16, #tpu.memory_space<vmem>>, vector<512x1024xbf16>
    %cst_8 = arith.constant dense<0.000000e+00> : vector<8x1024xf32>
    %10 = tpu.matmul %8, %9, %cst_8 {dimension_numbers = #tpu.dot_dimension_numbers<[1], [0], [0], [1], [0, 0, 1, 1], [], []>} : vector<8x512xbf16>, vector<512x1024xbf16>, vector<8x1024xf32> -> vector<8x1024xf32>
    %c0_9 = arith.constant 0 : index
    %c0_10 = arith.constant 0 : index
    %11 = vector.load %arg5[%c0_9, %c0_10] : memref<1x1024xf32, #tpu.memory_space<vmem>>, vector<1x1024xf32>
    %12 = vector.broadcast %11 : vector<1x1024xf32> to vector<8x1024xf32>
    %13 = arith.addf %10, %12 : vector<8x1024xf32>
    %cst_11 = arith.constant 0.000000e+00 : f32
    %14 = vector.broadcast %cst_11 : f32 to vector<8x1024xf32>
    %15 = arith.maximumf %13, %14 : vector<8x1024xf32>
    %16 = arith.truncf %15 : vector<8x1024xf32> to vector<8x1024xbf16>
    %c0_12 = arith.constant 0 : index
    %c0_13 = arith.constant 0 : index
    %17 = vector.load %arg6[%c0_12, %c0_13] : memref<1024x896xbf16, #tpu.memory_space<vmem>>, vector<1024x896xbf16>
    %cst_14 = arith.constant dense<0.000000e+00> : vector<8x896xf32>
    %18 = tpu.matmul %16, %17, %cst_14 {dimension_numbers = #tpu.dot_dimension_numbers<[1], [0], [0], [1], [0, 0, 1, 1], [], []>} : vector<8x1024xbf16>, vector<1024x896xbf16>, vector<8x896xf32> -> vector<8x896xf32>
    %c0_15 = arith.constant 0 : index
    %c0_16 = arith.constant 0 : index
    %19 = vector.load %arg7[%c0_15, %c0_16] : memref<1x896xf32, #tpu.memory_space<vmem>>, vector<1x896xf32>
    %20 = vector.broadcast %19 : vector<1x896xf32> to vector<8x896xf32>
    %21 = arith.addf %18, %20 : vector<8x896xf32>
    %cst_17 = arith.constant 5.000000e-01 : f32
    %22 = vector.broadcast %cst_17 : f32 to vector<8x896xf32>
    %23 = arith.mulf %22, %21 : vector<8x896xf32>
    %24 = math.tanh %23 : vector<8x896xf32>
    %cst_18 = arith.constant 5.000000e-01 : f32
    %25 = vector.broadcast %cst_18 : f32 to vector<8x896xf32>
    %26 = arith.mulf %25, %24 : vector<8x896xf32>
    %cst_19 = arith.constant 5.000000e-01 : f32
    %27 = vector.broadcast %cst_19 : f32 to vector<8x896xf32>
    %28 = arith.addf %26, %27 : vector<8x896xf32>
    %29 = arith.truncf %28 : vector<8x896xf32> to vector<8x896xbf16>
    %c0_20 = arith.constant 0 : index
    %c0_21 = arith.constant 0 : index
    %30 = vector.load %arg8[%c0_20, %c0_21] : memref<8x896xbf16, #tpu.memory_space<vmem>>, vector<8x896xbf16>
    tpu.vector_store %arg8[%c0_20, %c0_21], %29 {strides = array<i32>} : memref<8x896xbf16, #tpu.memory_space<vmem>>, vector<8x896xbf16>,
    return
  }
  func.func @transform_0(%arg0: i32) -> (i32, i32) {
    %c0_i32 = arith.constant 0 : i32
    %c0_i32_0 = arith.constant 0 : i32
    return %arg0, %c0_i32 : i32, i32
  }
  func.func @transform_1(%arg0: i32) -> (i32, i32) {
    %c0_i32 = arith.constant 0 : i32
    %c0_i32_0 = arith.constant 0 : i32
    %c0_i32_1 = arith.constant 0 : i32
    return %c0_i32, %c0_i32_0 : i32, i32
  }
  func.func @transform_2(%arg0: i32) -> (i32, i32) {
    %c0_i32 = arith.constant 0 : i32
    %c0_i32_0 = arith.constant 0 : i32
    %c0_i32_1 = arith.constant 0 : i32
    return %c0_i32, %c0_i32_0 : i32, i32
  }
  func.func @transform_3(%arg0: i32) -> (i32, i32) {
    %c0_i32 = arith.constant 0 : i32
    %c0_i32_0 = arith.constant 0 : i32
    %c0_i32_1 = arith.constant 0 : i32
    return %c0_i32, %c0_i32_0 : i32, i32
  }
  func.func @transform_4(%arg0: i32) -> (i32, i32) {
    %c0_i32 = arith.constant 0 : i32
    %c0_i32_0 = arith.constant 0 : i32
    %c0_i32_1 = arith.constant 0 : i32
    return %c0_i32, %c0_i32_0 : i32, i32
  }
  func.func @transform_5(%arg0: i32) -> (i32, i32) {
    %c0_i32 = arith.constant 0 : i32
    %c0_i32_0 = arith.constant 0 : i32
    %c0_i32_1 = arith.constant 0 : i32
    return %c0_i32, %c0_i32_0 : i32, i32
  }
  func.func @transform_6(%arg0: i32) -> (i32, i32) {
    %c0_i32 = arith.constant 0 : i32
    %c0_i32_0 = arith.constant 0 : i32
    %c0_i32_1 = arith.constant 0 : i32
    return %c0_i32, %c0_i32_0 : i32, i32
  }
  func.func @transform_7(%arg0: i32) -> (i32, i32) {
    %c0_i32 = arith.constant 0 : i32
    %c0_i32_0 = arith.constant 0 : i32
    return %arg0, %c0_i32 : i32, i32
  }
}

</mosaic_0001>

<llo_original>
// kernel: tpu_custom_call.1
$region0: #{tpu_custom_call.1}
  #allocation0 [shape = 'u32[]', space=smem, size = 0x4, offset = 0x4, fixed_abs, tag = 'smem constant byte address 0x4 - core index']
  #allocation1 [shape = 'u32[144,128]{1,0:T(1,128)}', space=vmem, size = 0x12000, scoped, tag = 'internal scratch']
  %s0 = inlined_call_operand.hbm [shape: bf16[8,160], index: 0, kind: input, shape index: {}]
  %s1 = inlined_call_operand.hbm [shape: bf16[160,512], index: 1, kind: input, shape index: {}]
  %s2 = inlined_call_operand.hbm [shape: f32[1,512], index: 2, kind: input, shape index: {}]
  %s3 = inlined_call_operand.hbm [shape: bf16[512,1024], index: 3, kind: input, shape index: {}]
  %s4 = inlined_call_operand.hbm [shape: f32[1,1024], index: 4, kind: input, shape index: {}]
  %s5 = inlined_call_operand.hbm [shape: bf16[1024,896], index: 5, kind: input, shape index: {}]
  %s6 = inlined_call_operand.hbm [shape: f32[1,896], index: 6, kind: input, shape index: {}]
  %s7 = inlined_call_operand.hbm [shape: bf16[8,896], index: 7, kind: output, shape index: {}]
  %s8 = sld [smem:[#allocation0]]
  $region66: #{tpu_custom_call.1} parent=0
    _
  %s10 = ssub.s32 1, %s8
  %s11 = scalar_select 0, %s10, %s8
  $region1: #{tpu_custom_call.1} parent=0
    #allocation2 [shape = 'u8[4096]{0}', space=vmem, size = 0x1000, scoped, tag = 'input window, operand 0, single buffered']
    #allocation3 [shape = 's32[1]{0}', space=sflag, size = 0x4, scoped, tag = 'scoped memory for tpu_custom_call.1']
    #allocation4 [shape = 's32[1]{0}', space=sflag, size = 0x4, scoped, tag = 'scoped memory for tpu_custom_call.1']
    #allocation5 [shape = 'u8[163840]{0}', space=vmem, size = 0x28000, scoped, tag = 'input window, operand 1, single buffered']
    #allocation6 [shape = 's32[1]{0}', space=sflag, size = 0x4, scoped, tag = 'scoped memory for tpu_custom_call.1']
    #allocation7 [shape = 'u8[2048]{0}', space=vmem, size = 0x800, scoped, tag = 'input window, operand 2, single buffered']
    #allocation8 [shape = 'u8[1048576]{0}', space=vmem, size = 0x100000, scoped, tag = 'input window, operand 3, single buffered']
    #allocation9 [shape = 's32[1]{0}', space=sflag, size = 0x4, scoped, tag = 'scoped memory for tpu_custom_call.1']
    #allocation10 [shape = 'u8[4096]{0}', space=vmem, size = 0x1000, scoped, tag = 'input window, operand 4, single buffered']
    #allocation11 [shape = 'u8[1835008]{0}', space=vmem, size = 0x1c0000, scoped, tag = 'input window, operand 5, single buffered']
    #allocation12 [shape = 's32[1]{0}', space=sflag, size = 0x4, scoped, tag = 'scoped memory for tpu_custom_call.1']
    #allocation13 [shape = 'u8[3584]{0}', space=vmem, size = 0x1000, scoped, tag = 'input window, operand 6, single buffered']
    #allocation14 [shape = 'u8[14336]{0}', space=vmem, size = 0x3800, scoped, tag = 'output window, operand 0, single buffered']
    %12 = vsyncpa [#allocation3], 0
    %13 = vsyncpa [#allocation6], 0
    %14 = vsyncpa [#allocation9], 0
    %15 = vsyncpa [#allocation12], 0
    %16 = vsyncpa [#allocation4], 0
    // Predicated region
    $region2: #{tpu_custom_call.1} parent=1 // pred_check
      _
    $region3: #{tpu_custom_call.1} parent=1 // pred_check_branch
      %18 = sbr.rel (0) target = $region5
    $region4: #{tpu_custom_call.1} parent=1 // pred_region
      %s20 = ssub.s32 128, 128
      %21 = vsyncadd [#allocation3], %s20
      %s23 = sshll.u32 [#allocation2], 4
      %s24 = int_to_ptr.vmem [resolvable:$true] %s23
      %26 = dma.hbm_to_vmem [thread:$0]  %s0, 128, %s24, [#allocation3]
    $region5: #{tpu_custom_call.1} parent=1 // pred_fallthru
      _
    // Predicated region
    $region6: #{tpu_custom_call.1} parent=1 // pred_check
      _
    $region7: #{tpu_custom_call.1} parent=1 // pred_check_branch
      %28 = sbr.rel (0) target = $region9
    $region8: #{tpu_custom_call.1} parent=1 // pred_region
      %s30 = ssub.s32 5120, 5120
      %31 = vsyncadd [#allocation6], %s30
      %s32 = sshll.u32 [#allocation5], 4
      %s33 = int_to_ptr.vmem [resolvable:$true] %s32
      %38 = dma.hbm_to_vmem [thread:$0]  %s1, 5120, %s33, [#allocation6], 256, 256, 16
    $region9: #{tpu_custom_call.1} parent=1 // pred_fallthru
      _
    // Predicated region
    $region10: #{tpu_custom_call.1} parent=1 // pred_check
      _
    $region11: #{tpu_custom_call.1} parent=1 // pred_check_branch
      %40 = sbr.rel (0) target = $region13
    $region12: #{tpu_custom_call.1} parent=1 // pred_region
      %s42 = ssub.s32 64, 64
      %43 = vsyncadd [#allocation6], %s42
      %s45 = sshll.u32 [#allocation7], 4
      %s46 = int_to_ptr.vmem [resolvable:$true] %s45
      %48 = dma.hbm_to_vmem [thread:$0]  %s2, 64, %s46, [#allocation6]
    $region13: #{tpu_custom_call.1} parent=1 // pred_fallthru
      _
    // Predicated region
    $region14: #{tpu_custom_call.1} parent=1 // pred_check
      _
    $region15: #{tpu_custom_call.1} parent=1 // pred_check_branch
      %50 = sbr.rel (0) target = $region17
    $region16: #{tpu_custom_call.1} parent=1 // pred_region
      %s52 = ssub.s32 32768, 32768
      %53 = vsyncadd [#allocation9], %s52
      %s54 = sshll.u32 [#allocation8], 4
      %s55 = int_to_ptr.vmem [resolvable:$true] %s54
      %60 = dma.hbm_to_vmem [thread:$0]  %s3, 32768, %s55, [#allocation9], 512, 512, 32
    $region17: #{tpu_custom_call.1} parent=1 // pred_fallthru
      _
    // Predicated region
    $region18: #{tpu_custom_call.1} parent=1 // pred_check
      _
    $region19: #{tpu_custom_call.1} parent=1 // pred_check_branch
      %62 = sbr.rel (0) target = $region21
    $region20: #{tpu_custom_call.1} parent=1 // pred_region
      %s64 = ssub.s32 128, 128
      %65 = vsyncadd [#allocation9], %s64
      %s67 = sshll.u32 [#allocation10], 4
      %s68 = int_to_ptr.vmem [resolvable:$true] %s67
      %70 = dma.hbm_to_vmem [thread:$0]  %s4, 128, %s68, [#allocation9]
    $region21: #{tpu_custom_call.1} parent=1 // pred_fallthru
      _
    // Predicated region
    $region22: #{tpu_custom_call.1} parent=1 // pred_check
      _
    $region23: #{tpu_custom_call.1} parent=1 // pred_check_branch
      %72 = sbr.rel (0) target = $region25
    $region24: #{tpu_custom_call.1} parent=1 // pred_region
      %s74 = ssub.s32 57344, 57344
      %75 = vsyncadd [#allocation12], %s74
      %s76 = sshll.u32 [#allocation11], 4
      %s77 = int_to_ptr.vmem [resolvable:$true] %s76
      %82 = dma.hbm_to_vmem [thread:$0]  %s5, 57344, %s77, [#allocation12], 448, 448, 28
    $region25: #{tpu_custom_call.1} parent=1 // pred_fallthru
      _
    // Predicated region
    $region26: #{tpu_custom_call.1} parent=1 // pred_check
      _
    $region27: #{tpu_custom_call.1} parent=1 // pred_check_branch
      %84 = sbr.rel (0) target = $region29
    $region28: #{tpu_custom_call.1} parent=1 // pred_region
      %s86 = ssub.s32 112, 112
      %87 = vsyncadd [#allocation12], %s86
      %s89 = sshll.u32 [#allocation13], 4
      %s90 = int_to_ptr.vmem [resolvable:$true] %s89
      %92 = dma.hbm_to_vmem [thread:$0]  %s6, 112, %s90, [#allocation12]
    $region29: #{tpu_custom_call.1} parent=1 // pred_fallthru
      _
    // Predicated region
    $region30: #{tpu_custom_call.1} parent=1 // pred_check
      _
    $region31: #{tpu_custom_call.1} parent=1 // pred_check_branch
      %94 = sbr.rel (0) target = $region33
    $region32: #{tpu_custom_call.1} parent=1 // pred_region
      %95 = dma.done [#allocation3], 128
    $region33: #{tpu_custom_call.1} parent=1 // pred_fallthru
      _
    // Predicated region
    $region34: #{tpu_custom_call.1} parent=1 // pred_check
      _
    $region35: #{tpu_custom_call.1} parent=1 // pred_check_branch
      %97 = sbr.rel (0) target = $region37
    $region36: #{tpu_custom_call.1} parent=1 // pred_region
      %98 = dma.done [#allocation6], 5120
    $region37: #{tpu_custom_call.1} parent=1 // pred_fallthru
      _
    // Predicated region
    $region38: #{tpu_custom_call.1} parent=1 // pred_check
      _
    $region39: #{tpu_custom_call.1} parent=1 // pred_check_branch
      %100 = sbr.rel (0) target = $region41
    $region40: #{tpu_custom_call.1} parent=1 // pred_region
      %101 = dma.done [#allocation6], 64
    $region41: #{tpu_custom_call.1} parent=1 // pred_fallthru
      _
    // Predicated region
    $region42: #{tpu_custom_call.1} parent=1 // pred_check
      _
    $region43: #{tpu_custom_call.1} parent=1 // pred_check_branch
      %103 = sbr.rel (0) target = $region45
    $region44: #{tpu_custom_call.1} parent=1 // pred_region
      %104 = dma.done [#allocation9], 32768
    $region45: #{tpu_custom_call.1} parent=1 // pred_fallthru
      _
    // Predicated region
    $region46: #{tpu_custom_call.1} parent=1 // pred_check
      _
    $region47: #{tpu_custom_call.1} parent=1 // pred_check_branch
      %106 = sbr.rel (0) target = $region49
    $region48: #{tpu_custom_call.1} parent=1 // pred_region
      %107 = dma.done [#allocation9], 128
    $region49: #{tpu_custom_call.1} parent=1 // pred_fallthru
      _
    // Predicated region
    $region50: #{tpu_custom_call.1} parent=1 // pred_check
      _
    $region51: #{tpu_custom_call.1} parent=1 // pred_check_branch
      %109 = sbr.rel (0) target = $region53
    $region52: #{tpu_custom_call.1} parent=1 // pred_region
      %110 = dma.done [#allocation12], 57344
    $region53: #{tpu_custom_call.1} parent=1 // pred_fallthru
      _
    // Predicated region
    $region54: #{tpu_custom_call.1} parent=1 // pred_check
      _
    $region55: #{tpu_custom_call.1} parent=1 // pred_check_branch
      %112 = sbr.rel (0) target = $region57
    $region56: #{tpu_custom_call.1} parent=1 // pred_region
      %113 = dma.done [#allocation12], 112
    $region57: #{tpu_custom_call.1} parent=1 // pred_fallthru
      _
    %v115 = vld [vmem:[#allocation2] sm:$0xff]
    %v116 = vld [vmem:[#allocation5] sm:$0xff]
    %v117 = vld [vmem:[#allocation5 + $0x8] sm:$0xff]
    %v118 = vld [vmem:[#allocation5 + $0x10] sm:$0xff]
    %v119 = vld [vmem:[#allocation5 + $0x18] sm:$0xff]
    %v120 = vld [vmem:[#allocation5 + $0x20] sm:$0xff]
    %v121 = vld [vmem:[#allocation5 + $0x28] sm:$0xff]
    %v122 = vld [vmem:[#allocation5 + $0x30] sm:$0xff]
    %v123 = vld [vmem:[#allocation5 + $0x38] sm:$0xff]
    %v124 = vld [vmem:[#allocation5 + $0x40] sm:$0xff]
    %v125 = vld [vmem:[#allocation5 + $0x48] sm:$0xff]
    %v126 = vld [vmem:[#allocation5 + $0x50] sm:$0xff]
    %v127 = vld [vmem:[#allocation5 + $0x58] sm:$0xff]
    %v128 = vld [vmem:[#allocation5 + $0x60] sm:$0xff]
    %v129 = vld [vmem:[#allocation5 + $0x68] sm:$0xff]
    %v130 = vld [vmem:[#allocation5 + $0x70] sm:$0xff]
    %v131 = vld [vmem:[#allocation5 + $0x78] sm:$0xff]
    %v132 = vld [vmem:[#allocation5 + $0x80] sm:$0xff]
    %v133 = vld [vmem:[#allocation5 + $0x88] sm:$0xff]
    %v134 = vld [vmem:[#allocation5 + $0x90] sm:$0xff]
    %v135 = vld [vmem:[#allocation5 + $0x98] sm:$0xff]
    %v136 = vld [vmem:[#allocation5 + $0xa0] sm:$0xff]
    %v137 = vld [vmem:[#allocation5 + $0xa8] sm:$0xff]
    %v138 = vld [vmem:[#allocation5 + $0xb0] sm:$0xff]
    %v139 = vld [vmem:[#allocation5 + $0xb8] sm:$0xff]
    %v140 = vld [vmem:[#allocation5 + $0xc0] sm:$0xff]
    %v141 = vld [vmem:[#allocation5 + $0xc8] sm:$0xff]
    %v142 = vld [vmem:[#allocation5 + $0xd0] sm:$0xff]
    %v143 = vld [vmem:[#allocation5 + $0xd8] sm:$0xff]
    %v144 = vld [vmem:[#allocation5 + $0xe0] sm:$0xff]
    %v145 = vld [vmem:[#allocation5 + $0xe8] sm:$0xff]
    %v146 = vld [vmem:[#allocation5 + $0xf0] sm:$0xff]
    %v147 = vld [vmem:[#allocation5 + $0xf8] sm:$0xff]
    %v148 = vld [vmem:[#allocation5 + $0x100] sm:$0xff]
    %v149 = vld [vmem:[#allocation5 + $0x108] sm:$0xff]
    %v150 = vld [vmem:[#allocation5 + $0x110] sm:$0xff]
    %v151 = vld [vmem:[#allocation5 + $0x118] sm:$0xff]
    %v152 = vld [vmem:[#allocation5 + $0x120] sm:$0xff]
    %v153 = vld [vmem:[#allocation5 + $0x128] sm:$0xff]
    %v154 = vld [vmem:[#allocation5 + $0x130] sm:$0xff]
    %v155 = vld [vmem:[#allocation5 + $0x138] sm:$0xff]
    %v156 = vld [vmem:[#allocation7] sm:$0xf]
    %v158 = vlaneseq
    %v159 = vshrl.u32 %v158, 7
    %v160 = vsub.s32 0, %v159
    %v161 = vrot.slane %v156, %v160
    %v162 = vlaneseq
    %v163 = vshrl.u32 %v162, 7
    %v164 = vsub.s32 1, %v163
    %v165 = vrot.slane %v156, %v164
    %v166 = vlaneseq
    %v167 = vshrl.u32 %v166, 7
    %v168 = vsub.s32 2, %v167
    %v169 = vrot.slane %v156, %v168
    %v170 = vlaneseq
    %v171 = vshrl.u32 %v170, 7
    %v172 = vsub.s32 3, %v171
    %v173 = vrot.slane %v156, %v172
    %v179 = vunpack.c.l.b16 %v115
    %v180 = vunpack.c.h.b16 %v115
    %v181 = vpack.c.b16 %v179, %v179
    %v182 = vpack.c.b16 %v180, %v180
    %v224 = vunpack.c.l.b16 %v116
    %v225 = vunpack.c.h.b16 %v116
    %v226 = vunpack.c.l.b16 %v117
    %v227 = vunpack.c.h.b16 %v117
    %v228 = vunpack.c.l.b16 %v118
    %v229 = vunpack.c.h.b16 %v118
    %v230 = vunpack.c.l.b16 %v119
    %v231 = vunpack.c.h.b16 %v119
    %v232 = vunpack.c.l.b16 %v120
    %v233 = vunpack.c.h.b16 %v120
    %v234 = vunpack.c.l.b16 %v121
    %v235 = vunpack.c.h.b16 %v121
    %v236 = vunpack.c.l.b16 %v122
    %v237 = vunpack.c.h.b16 %v122
    %v238 = vunpack.c.l.b16 %v123
    %v239 = vunpack.c.h.b16 %v123
    %v240 = vunpack.c.l.b16 %v124
    %v241 = vunpack.c.h.b16 %v124
    %v242 = vunpack.c.l.b16 %v125
    %v243 = vunpack.c.h.b16 %v125
    %v244 = vunpack.c.l.b16 %v126
    %v245 = vunpack.c.h.b16 %v126
    %v246 = vunpack.c.l.b16 %v127
    %v247 = vunpack.c.h.b16 %v127
    %v248 = vunpack.c.l.b16 %v128
    %v249 = vunpack.c.h.b16 %v128
    %v250 = vunpack.c.l.b16 %v129
    %v251 = vunpack.c.h.b16 %v129
    %v252 = vunpack.c.l.b16 %v130
    %v253 = vunpack.c.h.b16 %v130
    %v254 = vunpack.c.l.b16 %v131
    %v255 = vunpack.c.h.b16 %v131
    %v256 = vunpack.c.l.b16 %v132
    %v257 = vunpack.c.h.b16 %v132
    %v258 = vunpack.c.l.b16 %v133
    %v259 = vunpack.c.h.b16 %v133
    %v260 = vunpack.c.l.b16 %v134
    %v261 = vunpack.c.h.b16 %v134
    %v262 = vunpack.c.l.b16 %v135
    %v263 = vunpack.c.h.b16 %v135
    %v264 = vunpack.c.l.b16 %v136
    %v265 = vunpack.c.h.b16 %v136
    %v266 = vunpack.c.l.b16 %v137
    %v267 = vunpack.c.h.b16 %v137
    %v268 = vunpack.c.l.b16 %v138
    %v269 = vunpack.c.h.b16 %v138
    %v270 = vunpack.c.l.b16 %v139
    %v271 = vunpack.c.h.b16 %v139
    %v272 = vunpack.c.l.b16 %v140
    %v273 = vunpack.c.h.b16 %v140
    %v274 = vunpack.c.l.b16 %v141
    %v275 = vunpack.c.h.b16 %v141
    %v276 = vunpack.c.l.b16 %v142
    %v277 = vunpack.c.h.b16 %v142
    %v278 = vunpack.c.l.b16 %v143
    %v279 = vunpack.c.h.b16 %v143
    %v280 = vunpack.c.l.b16 %v144
    %v281 = vunpack.c.h.b16 %v144
    %v282 = vunpack.c.l.b16 %v145
    %v283 = vunpack.c.h.b16 %v145
    %v284 = vunpack.c.l.b16 %v146
    %v285 = vunpack.c.h.b16 %v146
    %v286 = vunpack.c.l.b16 %v147
    %v287 = vunpack.c.h.b16 %v147
    %v288 = vunpack.c.l.b16 %v148
    %v289 = vunpack.c.h.b16 %v148
    %v290 = vunpack.c.l.b16 %v149
    %v291 = vunpack.c.h.b16 %v149
    %v292 = vunpack.c.l.b16 %v150
    %v293 = vunpack.c.h.b16 %v150
    %v294 = vunpack.c.l.b16 %v151
    %v295 = vunpack.c.h.b16 %v151
    %v296 = vunpack.c.l.b16 %v152
    %v297 = vunpack.c.h.b16 %v152
    %v298 = vunpack.c.l.b16 %v153
    %v299 = vunpack.c.h.b16 %v153
    %v300 = vunpack.c.l.b16 %v154
    %v301 = vunpack.c.h.b16 %v154
    %v302 = vunpack.c.l.b16 %v155
    %v303 = vunpack.c.h.b16 %v155
    %v304 = vpack.c.b16 %v228, %v224
    %v305 = vpack.c.b16 %v229, %v225
    %v306 = vpack.c.b16 %v230, %v226
    %v307 = vpack.c.b16 %v231, %v227
    %v308 = vpack.c.b16 %v236, %v232
    %v309 = vpack.c.b16 %v237, %v233
    %v310 = vpack.c.b16 %v238, %v234
    %v311 = vpack.c.b16 %v239, %v235
    %v312 = vpack.c.b16 %v244, %v240
    %v313 = vpack.c.b16 %v245, %v241
    %v314 = vpack.c.b16 %v246, %v242
    %v315 = vpack.c.b16 %v247, %v243
    %v316 = vpack.c.b16 %v252, %v248
    %v317 = vpack.c.b16 %v253, %v249
    %v318 = vpack.c.b16 %v254, %v250
    %v319 = vpack.c.b16 %v255, %v251
    %v320 = vpack.c.b16 %v260, %v256
    %v321 = vpack.c.b16 %v261, %v257
    %v322 = vpack.c.b16 %v262, %v258
    %v323 = vpack.c.b16 %v263, %v259
    %v324 = vpack.c.b16 %v268, %v264
    %v325 = vpack.c.b16 %v269, %v265
    %v326 = vpack.c.b16 %v270, %v266
    %v327 = vpack.c.b16 %v271, %v267
    %v328 = vpack.c.b16 %v276, %v272
    %v329 = vpack.c.b16 %v277, %v273
    %v330 = vpack.c.b16 %v278, %v274
    %v331 = vpack.c.b16 %v279, %v275
    %v332 = vpack.c.b16 %v284, %v280
    %v333 = vpack.c.b16 %v285, %v281
    %v334 = vpack.c.b16 %v286, %v282
    %v335 = vpack.c.b16 %v287, %v283
    %v336 = vpack.c.b16 %v292, %v288
    %v337 = vpack.c.b16 %v293, %v289
    %v338 = vpack.c.b16 %v294, %v290
    %v339 = vpack.c.b16 %v295, %v291
    %v340 = vpack.c.b16 %v300, %v296
    %v341 = vpack.c.b16 %v301, %v297
    %v342 = vpack.c.b16 %v302, %v298
    %v343 = vpack.c.b16 %v303, %v299
    %vm384 = vcmask 261120
    %v386 = vsel %vm384, %v182, 0
    %388 = vmatprep.subr.bf16.mxu0 %v333
    %389 = vmatpush1.bf16.msra.mxu0 %v332
    %390 = vmatprep.subr.bf16.mxu0 %v329
    %391 = vmatpush1.bf16.msra.mxu0 %v328
    %392 = vmatprep.subr.bf16.mxu0 %v325
    %393 = vmatpush1.bf16.msra.mxu0 %v324
    %394 = vmatprep.subr.bf16.mxu0 %v321
    %395 = vmatpush1.bf16.msra.mxu0 %v320
    %396 = vmatprep.subr.bf16.mxu0 %v317
    %397 = vmatpush1.bf16.msra.mxu0 %v316
    %398 = vmatprep.subr.bf16.mxu0 %v313
    %399 = vmatpush1.bf16.msra.mxu0 %v312
    %400 = vmatprep.subr.bf16.mxu0 %v309
    %401 = vmatpush1.bf16.msra.mxu0 %v308
    %402 = vmatprep.subr.bf16.mxu0 %v305
    %403 = vmatpush1.bf16.msra.mxu0 %v304
    %404 = vmatprep.subr.bf16.mxu0 0
    %405 = vmatpush2.bf16.msra.mxu0 0
    %406 = vmatprep.subr.bf16.mxu0 0
    %407 = vmatpush2.bf16.msra.mxu0 0
    %408 = vmatprep.subr.bf16.mxu0 0
    %409 = vmatpush2.bf16.msra.mxu0 0
    %410 = vmatprep.subr.bf16.mxu0 0
    %411 = vmatpush2.bf16.msra.mxu0 0
    %412 = vmatprep.subr.bf16.mxu0 0
    %413 = vmatpush2.bf16.msra.mxu0 0
    %414 = vmatprep.subr.bf16.mxu0 0
    %415 = vmatpush2.bf16.msra.mxu0 0
    %416 = vmatprep.subr.bf16.mxu0 %v341
    %417 = vmatpush2.bf16.msra.mxu0 %v340
    %418 = vmatprep.subr.bf16.mxu0 %v337
    %419 = vmatpush2.bf16.msra.mxu0 %v336
    %420 = vmatprep.mubr.bf16.mxu0 %v386
    %421 = vmatmul.mubr.bf16.gmra.mxu0 %v181
    %v422 = vpop.f32.mrf.mxu0
    %v423 = vadd.f32 %v161, %v422
    %v424 = vpop.f32.mrf.mxu0
    %v425 = vadd.f32 %v165, %v424
    %v426 = vpop.f32.mrf.mxu0
    %v427 = vpop.f32.mrf.mxu0
    %428 = vdwg.mxu0
    %429 = vmatprep.subr.bf16.mxu0 %v335
    %430 = vmatpush1.bf16.msra.mxu0 %v334
    %431 = vmatprep.subr.bf16.mxu0 %v331
    %432 = vmatpush1.bf16.msra.mxu0 %v330
    %433 = vmatprep.subr.bf16.mxu0 %v327
    %434 = vmatpush1.bf16.msra.mxu0 %v326
    %435 = vmatprep.subr.bf16.mxu0 %v323
    %436 = vmatpush1.bf16.msra.mxu0 %v322
    %437 = vmatprep.subr.bf16.mxu0 %v319
    %438 = vmatpush1.bf16.msra.mxu0 %v318
    %439 = vmatprep.subr.bf16.mxu0 %v315
    %440 = vmatpush1.bf16.msra.mxu0 %v314
    %441 = vmatprep.subr.bf16.mxu0 %v311
    %442 = vmatpush1.bf16.msra.mxu0 %v310
    %443 = vmatprep.subr.bf16.mxu0 %v307
    %444 = vmatpush1.bf16.msra.mxu0 %v306
    %445 = vmatprep.subr.bf16.mxu0 0
    %446 = vmatpush2.bf16.msra.mxu0 0
    %447 = vmatprep.subr.bf16.mxu0 0
    %448 = vmatpush2.bf16.msra.mxu0 0
    %449 = vmatprep.subr.bf16.mxu0 0
    %450 = vmatpush2.bf16.msra.mxu0 0
    %451 = vmatprep.subr.bf16.mxu0 0
    %452 = vmatpush2.bf16.msra.mxu0 0
    %453 = vmatprep.subr.bf16.mxu0 0
    %454 = vmatpush2.bf16.msra.mxu0 0
    %455 = vmatprep.subr.bf16.mxu0 0
    %456 = vmatpush2.bf16.msra.mxu0 0
    %457 = vmatprep.subr.bf16.mxu0 %v343
    %458 = vmatpush2.bf16.msra.mxu0 %v342
    %459 = vmatprep.subr.bf16.mxu0 %v339
    %460 = vmatpush2.bf16.msra.mxu0 %v338
    %461 = vmatprep.mubr.bf16.mxu0 %v386
    %462 = vmatmul.mubr.bf16.gmra.mxu0 %v181
    %v463 = vpop.f32.mrf.mxu0
    %v464 = vadd.f32 %v169, %v463
    %v465 = vpop.f32.mrf.mxu0
    %v466 = vadd.f32 %v173, %v465
    %v467 = vpop.f32.mrf.mxu0
    %v468 = vpop.f32.mrf.mxu0
    %469 = vdwg.mxu0
    %v470 = vmax.f32 %v423, 0.0
    %v471 = vmax.f32 %v425, 0.0
    %v472 = vmax.f32 %v464, 0.0
    %v473 = vmax.f32 %v466, 0.0
    %v474 = vpack.c.bf16 %v470, %v470
    %v475 = vpack.c.bf16 %v471, %v471
    %v476 = vpack.c.bf16 %v472, %v472
    %v477 = vpack.c.bf16 %v473, %v473
    %v478 = vld [vmem:[#allocation8] sm:$0xff]
    %v479 = vld [vmem:[#allocation8 + $0x8] sm:$0xff]
    %v480 = vld [vmem:[#allocation8 + $0x10] sm:$0xff]
    %v481 = vld [vmem:[#allocation8 + $0x18] sm:$0xff]
    %v482 = vld [vmem:[#allocation8 + $0x20] sm:$0xff]
    %v483 = vld [vmem:[#allocation8 + $0x28] sm:$0xff]
    %v484 = vld [vmem:[#allocation8 + $0x30] sm:$0xff]
    %v485 = vld [vmem:[#allocation8 + $0x38] sm:$0xff]
    %v486 = vld [vmem:[#allocation8 + $0x40] sm:$0xff]
    %v487 = vld [vmem:[#allocation8 + $0x48] sm:$0xff]
    %v488 = vld [vmem:[#allocation8 + $0x50] sm:$0xff]
    %v489 = vld [vmem:[#allocation8 + $0x58] sm:$0xff]
    %v490 = vld [vmem:[#allocation8 + $0x60] sm:$0xff]
    %v491 = vld [vmem:[#allocation8 + $0x68] sm:$0xff]
    %v492 = vld [vmem:[#allocation8 + $0x70] sm:$0xff]
    %v493 = vld [vmem:[#allocation8 + $0x78] sm:$0xff]
    %v494 = vld [vmem:[#allocation8 + $0x80] sm:$0xff]
    %v495 = vld [vmem:[#allocation8 + $0x88] sm:$0xff]
    %v496 = vld [vmem:[#allocation8 + $0x90] sm:$0xff]
    %v497 = vld [vmem:[#allocation8 + $0x98] sm:$0xff]
    %v498 = vld [vmem:[#allocation8 + $0xa0] sm:$0xff]
    %v499 = vld [vmem:[#allocation8 + $0xa8] sm:$0xff]
    %v500 = vld [vmem:[#allocation8 + $0xb0] sm:$0xff]
    %v501 = vld [vmem:[#allocation8 + $0xb8] sm:$0xff]
    %v502 = vld [vmem:[#allocation8 + $0xc0] sm:$0xff]
    %v503 = vld [vmem:[#allocation8 + $0xc8] sm:$0xff]
    %v504 = vld [vmem:[#allocation8 + $0xd0] sm:$0xff]
    %v505 = vld [vmem:[#allocation8 + $0xd8] sm:$0xff]
    %v506 = vld [vmem:[#allocation8 + $0xe0] sm:$0xff]
    %v507 = vld [vmem:[#allocation8 + $0xe8] sm:$0xff]
    %v508 = vld [vmem:[#allocation8 + $0xf0] sm:$0xff]
    %v509 = vld [vmem:[#allocation8 + $0xf8] sm:$0xff]
    %v510 = vld [vmem:[#allocation8 + $0x100] sm:$0xff]
    %v511 = vld [vmem:[#allocation8 + $0x108] sm:$0xff]
    %v512 = vld [vmem:[#allocation8 + $0x110] sm:$0xff]
    %v513 = vld [vmem:[#allocation8 + $0x118] sm:$0xff]
    %v514 = vld [vmem:[#allocation8 + $0x120] sm:$0xff]
    %v515 = vld [vmem:[#allocation8 + $0x128] sm:$0xff]
    %v516 = vld [vmem:[#allocation8 + $0x130] sm:$0xff]
    %v517 = vld [vmem:[#allocation8 + $0x138] sm:$0xff]
    %v518 = vld [vmem:[#allocation8 + $0x140] sm:$0xff]
    %v519 = vld [vmem:[#allocation8 + $0x148] sm:$0xff]
    %v520 = vld [vmem:[#allocation8 + $0x150] sm:$0xff]
    %v521 = vld [vmem:[#allocation8 + $0x158] sm:$0xff]
    %v522 = vld [vmem:[#allocation8 + $0x160] sm:$0xff]
    %v523 = vld [vmem:[#allocation8 + $0x168] sm:$0xff]
    %v524 = vld [vmem:[#allocation8 + $0x170] sm:$0xff]
    %v525 = vld [vmem:[#allocation8 + $0x178] sm:$0xff]
    %v526 = vld [vmem:[#allocation8 + $0x180] sm:$0xff]
    %v527 = vld [vmem:[#allocation8 + $0x188] sm:$0xff]
    %v528 = vld [vmem:[#allocation8 + $0x190] sm:$0xff]
    %v529 = vld [vmem:[#allocation8 + $0x198] sm:$0xff]
    %v530 = vld [vmem:[#allocation8 + $0x1a0] sm:$0xff]
    %v531 = vld [vmem:[#allocation8 + $0x1a8] sm:$0xff]
    %v532 = vld [vmem:[#allocation8 + $0x1b0] sm:$0xff]
    %v533 = vld [vmem:[#allocation8 + $0x1b8] sm:$0xff]
    %v534 = vld [vmem:[#allocation8 + $0x1c0] sm:$0xff]
    %v535 = vld [vmem:[#allocation8 + $0x1c8] sm:$0xff]
    %v536 = vld [vmem:[#allocation8 + $0x1d0] sm:$0xff]
    %v537 = vld [vmem:[#allocation8 + $0x1d8] sm:$0xff]
    %v538 = vld [vmem:[#allocation8 + $0x1e0] sm:$0xff]
    %v539 = vld [vmem:[#allocation8 + $0x1e8] sm:$0xff]
    %v540 = vld [vmem:[#allocation8 + $0x1f0] sm:$0xff]
    %v541 = vld [vmem:[#allocation8 + $0x1f8] sm:$0xff]
    %v542 = vld [vmem:[#allocation8 + $0x200] sm:$0xff]
    %v543 = vld [vmem:[#allocation8 + $0x208] sm:$0xff]
    %v544 = vld [vmem:[#allocation8 + $0x210] sm:$0xff]
    %v545 = vld [vmem:[#allocation8 + $0x218] sm:$0xff]
    %v546 = vld [vmem:[#allocation8 + $0x220] sm:$0xff]
    %v547 = vld [vmem:[#allocation8 + $0x228] sm:$0xff]
    %v548 = vld [vmem:[#allocation8 + $0x230] sm:$0xff]
    %v549 = vld [vmem:[#allocation8 + $0x238] sm:$0xff]
    %v550 = vld [vmem:[#allocation8 + $0x240] sm:$0xff]
    %v551 = vld [vmem:[#allocation8 + $0x248] sm:$0xff]
    %v552 = vld [vmem:[#allocation8 + $0x250] sm:$0xff]
    %v553 = vld [vmem:[#allocation8 + $0x258] sm:$0xff]
    %v554 = vld [vmem:[#allocation8 + $0x260] sm:$0xff]
    %v555 = vld [vmem:[#allocation8 + $0x268] sm:$0xff]
    %v556 = vld [vmem:[#allocation8 + $0x270] sm:$0xff]
    %v557 = vld [vmem:[#allocation8 + $0x278] sm:$0xff]
    %v558 = vld [vmem:[#allocation8 + $0x280] sm:$0xff]
    %v559 = vld [vmem:[#allocation8 + $0x288] sm:$0xff]
    %v560 = vld [vmem:[#allocation8 + $0x290] sm:$0xff]
    %v561 = vld [vmem:[#allocation8 + $0x298] sm:$0xff]
    %v562 = vld [vmem:[#allocation8 + $0x2a0] sm:$0xff]
    %v563 = vld [vmem:[#allocation8 + $0x2a8] sm:$0xff]
    %v564 = vld [vmem:[#allocation8 + $0x2b0] sm:$0xff]
    %v565 = vld [vmem:[#allocation8 + $0x2b8] sm:$0xff]
    %v566 = vld [vmem:[#allocation8 + $0x2c0] sm:$0xff]
    %v567 = vld [vmem:[#allocation8 + $0x2c8] sm:$0xff]
    %v568 = vld [vmem:[#allocation8 + $0x2d0] sm:$0xff]
    %v569 = vld [vmem:[#allocation8 + $0x2d8] sm:$0xff]
    %v570 = vld [vmem:[#allocation8 + $0x2e0] sm:$0xff]
    %v571 = vld [vmem:[#allocation8 + $0x2e8] sm:$0xff]
    %v572 = vld [vmem:[#allocation8 + $0x2f0] sm:$0xff]
    %v573 = vld [vmem:[#allocation8 + $0x2f8] sm:$0xff]
    %v574 = vld [vmem:[#allocation8 + $0x300] sm:$0xff]
    %v575 = vld [vmem:[#allocation8 + $0x308] sm:$0xff]
    %v576 = vld [vmem:[#allocation8 + $0x310] sm:$0xff]
    %v577 = vld [vmem:[#allocation8 + $0x318] sm:$0xff]
    %v578 = vld [vmem:[#allocation8 + $0x320] sm:$0xff]
    %v579 = vld [vmem:[#allocation8 + $0x328] sm:$0xff]
    %v580 = vld [vmem:[#allocation8 + $0x330] sm:$0xff]
    %v581 = vld [vmem:[#allocation8 + $0x338] sm:$0xff]
    %v582 = vld [vmem:[#allocation8 + $0x340] sm:$0xff]
    %v583 = vld [vmem:[#allocation8 + $0x348] sm:$0xff]
    %v584 = vld [vmem:[#allocation8 + $0x350] sm:$0xff]
    %v585 = vld [vmem:[#allocation8 + $0x358] sm:$0xff]
    %v586 = vld [vmem:[#allocation8 + $0x360] sm:$0xff]
    %v587 = vld [vmem:[#allocation8 + $0x368] sm:$0xff]
    %v588 = vld [vmem:[#allocation8 + $0x370] sm:$0xff]
    %v589 = vld [vmem:[#allocation8 + $0x378] sm:$0xff]
    %v590 = vld [vmem:[#allocation8 + $0x380] sm:$0xff]
    %v591 = vld [vmem:[#allocation8 + $0x388] sm:$0xff]
    %v592 = vld [vmem:[#allocation8 + $0x390] sm:$0xff]
    %v593 = vld [vmem:[#allocation8 + $0x398] sm:$0xff]
    %v594 = vld [vmem:[#allocation8 + $0x3a0] sm:$0xff]
    %v595 = vld [vmem:[#allocation8 + $0x3a8] sm:$0xff]
    %v596 = vld [vmem:[#allocation8 + $0x3b0] sm:$0xff]
    %v597 = vld [vmem:[#allocation8 + $0x3b8] sm:$0xff]
    %v598 = vld [vmem:[#allocation8 + $0x3c0] sm:$0xff]
    %v599 = vld [vmem:[#allocation8 + $0x3c8] sm:$0xff]
    %v600 = vld [vmem:[#allocation8 + $0x3d0] sm:$0xff]
    %v601 = vld [vmem:[#allocation8 + $0x3d8] sm:$0xff]
    %v602 = vld [vmem:[#allocation8 + $0x3e0] sm:$0xff]
    %v603 = vld [vmem:[#allocation8 + $0x3e8] sm:$0xff]
    %v604 = vld [vmem:[#allocation8 + $0x3f0] sm:$0xff]
    %v605 = vld [vmem:[#allocation8 + $0x3f8] sm:$0xff]
    %v606 = vld [vmem:[#allocation8 + $0x400] sm:$0xff]
    %v607 = vld [vmem:[#allocation8 + $0x408] sm:$0xff]
    %v608 = vld [vmem:[#allocation8 + $0x410] sm:$0xff]
    %v609 = vld [vmem:[#allocation8 + $0x418] sm:$0xff]
    %v610 = vld [vmem:[#allocation8 + $0x420] sm:$0xff]
    %v611 = vld [vmem:[#allocation8 + $0x428] sm:$0xff]
    %v612 = vld [vmem:[#allocation8 + $0x430] sm:$0xff]
    %v613 = vld [vmem:[#allocation8 + $0x438] sm:$0xff]
    %v614 = vld [vmem:[#allocation8 + $0x440] sm:$0xff]
    %v615 = vld [vmem:[#allocation8 + $0x448] sm:$0xff]
    %v616 = vld [vmem:[#allocation8 + $0x450] sm:$0xff]
    %v617 = vld [vmem:[#allocation8 + $0x458] sm:$0xff]
    %v618 = vld [vmem:[#allocation8 + $0x460] sm:$0xff]
    %v619 = vld [vmem:[#allocation8 + $0x468] sm:$0xff]
    %v620 = vld [vmem:[#allocation8 + $0x470] sm:$0xff]
    %v621 = vld [vmem:[#allocation8 + $0x478] sm:$0xff]
    %v622 = vld [vmem:[#allocation8 + $0x480] sm:$0xff]
    %v623 = vld [vmem:[#allocation8 + $0x488] sm:$0xff]
    %v624 = vld [vmem:[#allocation8 + $0x490] sm:$0xff]
    %v625 = vld [vmem:[#allocation8 + $0x498] sm:$0xff]
    %v626 = vld [vmem:[#allocation8 + $0x4a0] sm:$0xff]
    %v627 = vld [vmem:[#allocation8 + $0x4a8] sm:$0xff]
    %v628 = vld [vmem:[#allocation8 + $0x4b0] sm:$0xff]
    %v629 = vld [vmem:[#allocation8 + $0x4b8] sm:$0xff]
    %v630 = vld [vmem:[#allocation8 + $0x4c0] sm:$0xff]
    %v631 = vld [vmem:[#allocation8 + $0x4c8] sm:$0xff]
    %v632 = vld [vmem:[#allocation8 + $0x4d0] sm:$0xff]
    %v633 = vld [vmem:[#allocation8 + $0x4d8] sm:$0xff]
    %v634 = vld [vmem:[#allocation8 + $0x4e0] sm:$0xff]
    %v635 = vld [vmem:[#allocation8 + $0x4e8] sm:$0xff]
    %v636 = vld [vmem:[#allocation8 + $0x4f0] sm:$0xff]
    %v637 = vld [vmem:[#allocation8 + $0x4f8] sm:$0xff]
    %v638 = vld [vmem:[#allocation8 + $0x500] sm:$0xff]
    %v639 = vld [vmem:[#allocation8 + $0x508] sm:$0xff]
    %v640 = vld [vmem:[#allocation8 + $0x510] sm:$0xff]
    %v641 = vld [vmem:[#allocation8 + $0x518] sm:$0xff]
    %v642 = vld [vmem:[#allocation8 + $0x520] sm:$0xff]
    %v643 = vld [vmem:[#allocation8 + $0x528] sm:$0xff]
    %v644 = vld [vmem:[#allocation8 + $0x530] sm:$0xff]
    %v645 = vld [vmem:[#allocation8 + $0x538] sm:$0xff]
    %v646 = vld [vmem:[#allocation8 + $0x540] sm:$0xff]
    %v647 = vld [vmem:[#allocation8 + $0x548] sm:$0xff]
    %v648 = vld [vmem:[#allocation8 + $0x550] sm:$0xff]
    %v649 = vld [vmem:[#allocation8 + $0x558] sm:$0xff]
    %v650 = vld [vmem:[#allocation8 + $0x560] sm:$0xff]
    %v651 = vld [vmem:[#allocation8 + $0x568] sm:$0xff]
    %v652 = vld [vmem:[#allocation8 + $0x570] sm:$0xff]
    %v653 = vld [vmem:[#allocation8 + $0x578] sm:$0xff]
    %v654 = vld [vmem:[#allocation8 + $0x580] sm:$0xff]
    %v655 = vld [vmem:[#allocation8 + $0x588] sm:$0xff]
    %v656 = vld [vmem:[#allocation8 + $0x590] sm:$0xff]
    %v657 = vld [vmem:[#allocation8 + $0x598] sm:$0xff]
    %v658 = vld [vmem:[#allocation8 + $0x5a0] sm:$0xff]
    %v659 = vld [vmem:[#allocation8 + $0x5a8] sm:$0xff]
    %v660 = vld [vmem:[#allocation8 + $0x5b0] sm:$0xff]
    %v661 = vld [vmem:[#allocation8 + $0x5b8] sm:$0xff]
    %v662 = vld [vmem:[#allocation8 + $0x5c0] sm:$0xff]
    %v663 = vld [vmem:[#allocation8 + $0x5c8] sm:$0xff]
    %v664 = vld [vmem:[#allocation8 + $0x5d0] sm:$0xff]
    %v665 = vld [vmem:[#allocation8 + $0x5d8] sm:$0xff]
    %v666 = vld [vmem:[#allocation8 + $0x5e0] sm:$0xff]
    %v667 = vld [vmem:[#allocation8 + $0x5e8] sm:$0xff]
    %v668 = vld [vmem:[#allocation8 + $0x5f0] sm:$0xff]
    %v669 = vld [vmem:[#allocation8 + $0x5f8] sm:$0xff]
    %v670 = vld [vmem:[#allocation8 + $0x600] sm:$0xff]
    %v671 = vld [vmem:[#allocation8 + $0x608] sm:$0xff]
    %v672 = vld [vmem:[#allocation8 + $0x610] sm:$0xff]
    %v673 = vld [vmem:[#allocation8 + $0x618] sm:$0xff]
    %v674 = vld [vmem:[#allocation8 + $0x620] sm:$0xff]
    %v675 = vld [vmem:[#allocation8 + $0x628] sm:$0xff]
    %v676 = vld [vmem:[#allocation8 + $0x630] sm:$0xff]
    %v677 = vld [vmem:[#allocation8 + $0x638] sm:$0xff]
    %v678 = vld [vmem:[#allocation8 + $0x640] sm:$0xff]
    %v679 = vld [vmem:[#allocation8 + $0x648] sm:$0xff]
    %v680 = vld [vmem:[#allocation8 + $0x650] sm:$0xff]
    %v681 = vld [vmem:[#allocation8 + $0x658] sm:$0xff]
    %v682 = vld [vmem:[#allocation8 + $0x660] sm:$0xff]
    %v683 = vld [vmem:[#allocation8 + $0x668] sm:$0xff]
    %v684 = vld [vmem:[#allocation8 + $0x670] sm:$0xff]
    %v685 = vld [vmem:[#allocation8 + $0x678] sm:$0xff]
    %v686 = vld [vmem:[#allocation8 + $0x680] sm:$0xff]
    %v687 = vld [vmem:[#allocation8 + $0x688] sm:$0xff]
    %v688 = vld [vmem:[#allocation8 + $0x690] sm:$0xff]
    %v689 = vld [vmem:[#allocation8 + $0x698] sm:$0xff]
    %v690 = vld [vmem:[#allocation8 + $0x6a0] sm:$0xff]
    %v691 = vld [vmem:[#allocation8 + $0x6a8] sm:$0xff]
    %v692 = vld [vmem:[#allocation8 + $0x6b0] sm:$0xff]
    %v693 = vld [vmem:[#allocation8 + $0x6b8] sm:$0xff]
    %v694 = vld [vmem:[#allocation8 + $0x6c0] sm:$0xff]
    %v695 = vld [vmem:[#allocation8 + $0x6c8] sm:$0xff]
    %v696 = vld [vmem:[#allocation8 + $0x6d0] sm:$0xff]
    %v697 = vld [vmem:[#allocation8 + $0x6d8] sm:$0xff]
    %v698 = vld [vmem:[#allocation8 + $0x6e0] sm:$0xff]
    %v699 = vld [vmem:[#allocation8 + $0x6e8] sm:$0xff]
    %v700 = vld [vmem:[#allocation8 + $0x6f0] sm:$0xff]
    %v701 = vld [vmem:[#allocation8 + $0x6f8] sm:$0xff]
    %v702 = vld [vmem:[#allocation8 + $0x700] sm:$0xff]
    %v703 = vld [vmem:[#allocation8 + $0x708] sm:$0xff]
    %v704 = vld [vmem:[#allocation8 + $0x710] sm:$0xff]
    %v705 = vld [vmem:[#allocation8 + $0x718] sm:$0xff]
    %v706 = vld [vmem:[#allocation8 + $0x720] sm:$0xff]
    %v707 = vld [vmem:[#allocation8 + $0x728] sm:$0xff]
    %v708 = vld [vmem:[#allocation8 + $0x730] sm:$0xff]
    %v709 = vld [vmem:[#allocation8 + $0x738] sm:$0xff]
    %v710 = vld [vmem:[#allocation8 + $0x740] sm:$0xff]
    %v711 = vld [vmem:[#allocation8 + $0x748] sm:$0xff]
    %v712 = vld [vmem:[#allocation8 + $0x750] sm:$0xff]
    %v713 = vld [vmem:[#allocation8 + $0x758] sm:$0xff]
    %v714 = vld [vmem:[#allocation8 + $0x760] sm:$0xff]
    %v715 = vld [vmem:[#allocation8 + $0x768] sm:$0xff]
    %v716 = vld [vmem:[#allocation8 + $0x770] sm:$0xff]
    %v717 = vld [vmem:[#allocation8 + $0x778] sm:$0xff]
    %v718 = vld [vmem:[#allocation8 + $0x780] sm:$0xff]
    %v719 = vld [vmem:[#allocation8 + $0x788] sm:$0xff]
    %v720 = vld [vmem:[#allocation8 + $0x790] sm:$0xff]
    %v721 = vld [vmem:[#allocation8 + $0x798] sm:$0xff]
    %v722 = vld [vmem:[#allocation8 + $0x7a0] sm:$0xff]
    %v723 = vld [vmem:[#allocation8 + $0x7a8] sm:$0xff]
    %v724 = vld [vmem:[#allocation8 + $0x7b0] sm:$0xff]
    %v725 = vld [vmem:[#allocation8 + $0x7b8] sm:$0xff]
    %v726 = vld [vmem:[#allocation8 + $0x7c0] sm:$0xff]
    %v727 = vld [vmem:[#allocation8 + $0x7c8] sm:$0xff]
    %v728 = vld [vmem:[#allocation8 + $0x7d0] sm:$0xff]
    %v729 = vld [vmem:[#allocation8 + $0x7d8] sm:$0xff]
    %v730 = vld [vmem:[#allocation8 + $0x7e0] sm:$0xff]
    %v731 = vld [vmem:[#allocation8 + $0x7e8] sm:$0xff]
    %v732 = vld [vmem:[#allocation8 + $0x7f0] sm:$0xff]
    %v733 = vld [vmem:[#allocation8 + $0x7f8] sm:$0xff]
    %v734 = vld [vmem:[#allocation10] sm:$0xff]
    %v736 = vlaneseq
    %v737 = vshrl.u32 %v736, 7
    %v738 = vsub.s32 0, %v737
    %v739 = vrot.slane %v734, %v738
    %v740 = vlaneseq
    %v741 = vshrl.u32 %v740, 7
    %v742 = vsub.s32 1, %v741
    %v743 = vrot.slane %v734, %v742
    %v744 = vlaneseq
    %v745 = vshrl.u32 %v744, 7
    %v746 = vsub.s32 2, %v745
    %v747 = vrot.slane %v734, %v746
    %v748 = vlaneseq
    %v749 = vshrl.u32 %v748, 7
    %v750 = vsub.s32 3, %v749
    %v751 = vrot.slane %v734, %v750
    %v752 = vlaneseq
    %v753 = vshrl.u32 %v752, 7
    %v754 = vsub.s32 4, %v753
    %v755 = vrot.slane %v734, %v754
    %v756 = vlaneseq
    %v757 = vshrl.u32 %v756, 7
    %v758 = vsub.s32 5, %v757
    %v759 = vrot.slane %v734, %v758
    %v760 = vlaneseq
    %v761 = vshrl.u32 %v760, 7
    %v762 = vsub.s32 6, %v761
    %v763 = vrot.slane %v734, %v762
    %v764 = vlaneseq
    %v765 = vshrl.u32 %v764, 7
    %v766 = vsub.s32 7, %v765
    %v767 = vrot.slane %v734, %v766
    %v1032 = vunpack.c.l.b16 %v478
    %v1033 = vunpack.c.h.b16 %v478
    %v1034 = vunpack.c.l.b16 %v479
    %v1035 = vunpack.c.h.b16 %v479
    %v1036 = vunpack.c.l.b16 %v480
    %v1037 = vunpack.c.h.b16 %v480
    %v1038 = vunpack.c.l.b16 %v481
    %v1039 = vunpack.c.h.b16 %v481
    %v1040 = vunpack.c.l.b16 %v482
    %v1041 = vunpack.c.h.b16 %v482
    %v1042 = vunpack.c.l.b16 %v483
    %v1043 = vunpack.c.h.b16 %v483
    %v1044 = vunpack.c.l.b16 %v484
    %v1045 = vunpack.c.h.b16 %v484
    %v1046 = vunpack.c.l.b16 %v485
    %v1047 = vunpack.c.h.b16 %v485
    %v1048 = vunpack.c.l.b16 %v486
    %v1049 = vunpack.c.h.b16 %v486
    %v1050 = vunpack.c.l.b16 %v487
    %v1051 = vunpack.c.h.b16 %v487
    %v1052 = vunpack.c.l.b16 %v488
    %v1053 = vunpack.c.h.b16 %v488
    %v1054 = vunpack.c.l.b16 %v489
    %v1055 = vunpack.c.h.b16 %v489
    %v1056 = vunpack.c.l.b16 %v490
    %v1057 = vunpack.c.h.b16 %v490
    %v1058 = vunpack.c.l.b16 %v491
    %v1059 = vunpack.c.h.b16 %v491
    %v1060 = vunpack.c.l.b16 %v492
    %v1061 = vunpack.c.h.b16 %v492
    %v1062 = vunpack.c.l.b16 %v493
    %v1063 = vunpack.c.h.b16 %v493
    %v1064 = vunpack.c.l.b16 %v494
    %v1065 = vunpack.c.h.b16 %v494
    %v1066 = vunpack.c.l.b16 %v495
    %v1067 = vunpack.c.h.b16 %v495
    %v1068 = vunpack.c.l.b16 %v496
    %v1069 = vunpack.c.h.b16 %v496
    %v1070 = vunpack.c.l.b16 %v497
    %v1071 = vunpack.c.h.b16 %v497
    %v1072 = vunpack.c.l.b16 %v498
    %v1073 = vunpack.c.h.b16 %v498
    %v1074 = vunpack.c.l.b16 %v499
    %v1075 = vunpack.c.h.b16 %v499
    %v1076 = vunpack.c.l.b16 %v500
    %v1077 = vunpack.c.h.b16 %v500
    %v1078 = vunpack.c.l.b16 %v501
    %v1079 = vunpack.c.h.b16 %v501
    %v1080 = vunpack.c.l.b16 %v502
    %v1081 = vunpack.c.h.b16 %v502
    %v1082 = vunpack.c.l.b16 %v503
    %v1083 = vunpack.c.h.b16 %v503
    %v1084 = vunpack.c.l.b16 %v504
    %v1085 = vunpack.c.h.b16 %v504
    %v1086 = vunpack.c.l.b16 %v505
    %v1087 = vunpack.c.h.b16 %v505
    %v1088 = vunpack.c.l.b16 %v506
    %v1089 = vunpack.c.h.b16 %v506
    %v1090 = vunpack.c.l.b16 %v507
    %v1091 = vunpack.c.h.b16 %v507
    %v1092 = vunpack.c.l.b16 %v508
    %v1093 = vunpack.c.h.b16 %v508
    %v1094 = vunpack.c.l.b16 %v509
    %v1095 = vunpack.c.h.b16 %v509
    %v1096 = vunpack.c.l.b16 %v510
    %v1097 = vunpack.c.h.b16 %v510
    %v1098 = vunpack.c.l.b16 %v511
    %v1099 = vunpack.c.h.b16 %v511
    %v1100 = vunpack.c.l.b16 %v512
    %v1101 = vunpack.c.h.b16 %v512
    %v1102 = vunpack.c.l.b16 %v513
    %v1103 = vunpack.c.h.b16 %v513
    %v1104 = vunpack.c.l.b16 %v514
    %v1105 = vunpack.c.h.b16 %v514
    %v1106 = vunpack.c.l.b16 %v515
    %v1107 = vunpack.c.h.b16 %v515
    %v1108 = vunpack.c.l.b16 %v516
    %v1109 = vunpack.c.h.b16 %v516
    %v1110 = vunpack.c.l.b16 %v517
    %v1111 = vunpack.c.h.b16 %v517
    %v1112 = vunpack.c.l.b16 %v518
    %v1113 = vunpack.c.h.b16 %v518
    %v1114 = vunpack.c.l.b16 %v519
    %v1115 = vunpack.c.h.b16 %v519
    %v1116 = vunpack.c.l.b16 %v520
    %v1117 = vunpack.c.h.b16 %v520
    %v1118 = vunpack.c.l.b16 %v521
    %v1119 = vunpack.c.h.b16 %v521
    %v1120 = vunpack.c.l.b16 %v522
    %v1121 = vunpack.c.h.b16 %v522
    %v1122 = vunpack.c.l.b16 %v523
    %v1123 = vunpack.c.h.b16 %v523
    %v1124 = vunpack.c.l.b16 %v524
    %v1125 = vunpack.c.h.b16 %v524
    %v1126 = vunpack.c.l.b16 %v525
    %v1127 = vunpack.c.h.b16 %v525
    %v1128 = vunpack.c.l.b16 %v526
    %v1129 = vunpack.c.h.b16 %v526
    %v1130 = vunpack.c.l.b16 %v527
    %v1131 = vunpack.c.h.b16 %v527
    %v1132 = vunpack.c.l.b16 %v528
    %v1133 = vunpack.c.h.b16 %v528
    %v1134 = vunpack.c.l.b16 %v529
    %v1135 = vunpack.c.h.b16 %v529
    %v1136 = vunpack.c.l.b16 %v530
    %v1137 = vunpack.c.h.b16 %v530
    %v1138 = vunpack.c.l.b16 %v531
    %v1139 = vunpack.c.h.b16 %v531
    %v1140 = vunpack.c.l.b16 %v532
    %v1141 = vunpack.c.h.b16 %v532
    %v1142 = vunpack.c.l.b16 %v533
    %v1143 = vunpack.c.h.b16 %v533
    %v1144 = vunpack.c.l.b16 %v534
    %v1145 = vunpack.c.h.b16 %v534
    %v1146 = vunpack.c.l.b16 %v535
    %v1147 = vunpack.c.h.b16 %v535
    %v1148 = vunpack.c.l.b16 %v536
    %v1149 = vunpack.c.h.b16 %v536
    %v1150 = vunpack.c.l.b16 %v537
    %v1151 = vunpack.c.h.b16 %v537
    %v1152 = vunpack.c.l.b16 %v538
    %v1153 = vunpack.c.h.b16 %v538
    %v1154 = vunpack.c.l.b16 %v539
    %v1155 = vunpack.c.h.b16 %v539
    %v1156 = vunpack.c.l.b16 %v540
    %v1157 = vunpack.c.h.b16 %v540
    %v1158 = vunpack.c.l.b16 %v541
    %v1159 = vunpack.c.h.b16 %v541
    %v1160 = vunpack.c.l.b16 %v542
    %v1161 = vunpack.c.h.b16 %v542
    %v1162 = vunpack.c.l.b16 %v543
    %v1163 = vunpack.c.h.b16 %v543
    %v1164 = vunpack.c.l.b16 %v544
    %v1165 = vunpack.c.h.b16 %v544
    %v1166 = vunpack.c.l.b16 %v545
    %v1167 = vunpack.c.h.b16 %v545
    %v1168 = vunpack.c.l.b16 %v546
    %v1169 = vunpack.c.h.b16 %v546
    %v1170 = vunpack.c.l.b16 %v547
    %v1171 = vunpack.c.h.b16 %v547
    %v1172 = vunpack.c.l.b16 %v548
    %v1173 = vunpack.c.h.b16 %v548
    %v1174 = vunpack.c.l.b16 %v549
    %v1175 = vunpack.c.h.b16 %v549
    %v1176 = vunpack.c.l.b16 %v550
    %v1177 = vunpack.c.h.b16 %v550
    %v1178 = vunpack.c.l.b16 %v551
    %v1179 = vunpack.c.h.b16 %v551
    %v1180 = vunpack.c.l.b16 %v552
    %v1181 = vunpack.c.h.b16 %v552
    %v1182 = vunpack.c.l.b16 %v553
    %v1183 = vunpack.c.h.b16 %v553
    %v1184 = vunpack.c.l.b16 %v554
    %v1185 = vunpack.c.h.b16 %v554
    %v1186 = vunpack.c.l.b16 %v555
    %v1187 = vunpack.c.h.b16 %v555
    %v1188 = vunpack.c.l.b16 %v556
    %v1189 = vunpack.c.h.b16 %v556
    %v1190 = vunpack.c.l.b16 %v557
    %v1191 = vunpack.c.h.b16 %v557
    %v1192 = vunpack.c.l.b16 %v558
    %v1193 = vunpack.c.h.b16 %v558
    %v1194 = vunpack.c.l.b16 %v559
    %v1195 = vunpack.c.h.b16 %v559
    %v1196 = vunpack.c.l.b16 %v560
    %v1197 = vunpack.c.h.b16 %v560
    %v1198 = vunpack.c.l.b16 %v561
    %v1199 = vunpack.c.h.b16 %v561
    %v1200 = vunpack.c.l.b16 %v562
    %v1201 = vunpack.c.h.b16 %v562
    %v1202 = vunpack.c.l.b16 %v563
    %v1203 = vunpack.c.h.b16 %v563
    %v1204 = vunpack.c.l.b16 %v564
    %v1205 = vunpack.c.h.b16 %v564
    %v1206 = vunpack.c.l.b16 %v565
    %v1207 = vunpack.c.h.b16 %v565
    %v1208 = vunpack.c.l.b16 %v566
    %v1209 = vunpack.c.h.b16 %v566
    %v1210 = vunpack.c.l.b16 %v567
    %v1211 = vunpack.c.h.b16 %v567
    %v1212 = vunpack.c.l.b16 %v568
    %v1213 = vunpack.c.h.b16 %v568
    %v1214 = vunpack.c.l.b16 %v569
    %v1215 = vunpack.c.h.b16 %v569
    %v1216 = vunpack.c.l.b16 %v570
    %v1217 = vunpack.c.h.b16 %v570
    %v1218 = vunpack.c.l.b16 %v571
    %v1219 = vunpack.c.h.b16 %v571
    %v1220 = vunpack.c.l.b16 %v572
    %v1221 = vunpack.c.h.b16 %v572
    %v1222 = vunpack.c.l.b16 %v573
    %v1223 = vunpack.c.h.b16 %v573
    %v1224 = vunpack.c.l.b16 %v574
    %v1225 = vunpack.c.h.b16 %v574
    %v1226 = vunpack.c.l.b16 %v575
    %v1227 = vunpack.c.h.b16 %v575
    %v1228 = vunpack.c.l.b16 %v576
    %v1229 = vunpack.c.h.b16 %v576
    %v1230 = vunpack.c.l.b16 %v577
    %v1231 = vunpack.c.h.b16 %v577
    %v1232 = vunpack.c.l.b16 %v578
    %v1233 = vunpack.c.h.b16 %v578
    %v1234 = vunpack.c.l.b16 %v579
    %v1235 = vunpack.c.h.b16 %v579
    %v1236 = vunpack.c.l.b16 %v580
    %v1237 = vunpack.c.h.b16 %v580
    %v1238 = vunpack.c.l.b16 %v581
    %v1239 = vunpack.c.h.b16 %v581
    %v1240 = vunpack.c.l.b16 %v582
    %v1241 = vunpack.c.h.b16 %v582
    %v1242 = vunpack.c.l.b16 %v583
    %v1243 = vunpack.c.h.b16 %v583
    %v1244 = vunpack.c.l.b16 %v584
    %v1245 = vunpack.c.h.b16 %v584
    %v1246 = vunpack.c.l.b16 %v585
    %v1247 = vunpack.c.h.b16 %v585
    %v1248 = vunpack.c.l.b16 %v586
    %v1249 = vunpack.c.h.b16 %v586
    %v1250 = vunpack.c.l.b16 %v587
    %v1251 = vunpack.c.h.b16 %v587
    %v1252 = vunpack.c.l.b16 %v588
    %v1253 = vunpack.c.h.b16 %v588
    %v1254 = vunpack.c.l.b16 %v589
    %v1255 = vunpack.c.h.b16 %v589
    %v1256 = vunpack.c.l.b16 %v590
    %v1257 = vunpack.c.h.b16 %v590
    %v1258 = vunpack.c.l.b16 %v591
    %v1259 = vunpack.c.h.b16 %v591
    %v1260 = vunpack.c.l.b16 %v592
    %v1261 = vunpack.c.h.b16 %v592
    %v1262 = vunpack.c.l.b16 %v593
    %v1263 = vunpack.c.h.b16 %v593
    %v1264 = vunpack.c.l.b16 %v594
    %v1265 = vunpack.c.h.b16 %v594
    %v1266 = vunpack.c.l.b16 %v595
    %v1267 = vunpack.c.h.b16 %v595
    %v1268 = vunpack.c.l.b16 %v596
    %v1269 = vunpack.c.h.b16 %v596
    %v1270 = vunpack.c.l.b16 %v597
    %v1271 = vunpack.c.h.b16 %v597
    %v1272 = vunpack.c.l.b16 %v598
    %v1273 = vunpack.c.h.b16 %v598
    %v1274 = vunpack.c.l.b16 %v599
    %v1275 = vunpack.c.h.b16 %v599
    %v1276 = vunpack.c.l.b16 %v600
    %v1277 = vunpack.c.h.b16 %v600
    %v1278 = vunpack.c.l.b16 %v601
    %v1279 = vunpack.c.h.b16 %v601
    %v1280 = vunpack.c.l.b16 %v602
    %v1281 = vunpack.c.h.b16 %v602
    %v1282 = vunpack.c.l.b16 %v603
    %v1283 = vunpack.c.h.b16 %v603
    %v1284 = vunpack.c.l.b16 %v604
    %v1285 = vunpack.c.h.b16 %v604
    %v1286 = vunpack.c.l.b16 %v605
    %v1287 = vunpack.c.h.b16 %v605
    %v1288 = vunpack.c.l.b16 %v606
    %v1289 = vunpack.c.h.b16 %v606
    %v1290 = vunpack.c.l.b16 %v607
    %v1291 = vunpack.c.h.b16 %v607
    %v1292 = vunpack.c.l.b16 %v608
    %v1293 = vunpack.c.h.b16 %v608
    %v1294 = vunpack.c.l.b16 %v609
    %v1295 = vunpack.c.h.b16 %v609
    %v1296 = vunpack.c.l.b16 %v610
    %v1297 = vunpack.c.h.b16 %v610
    %v1298 = vunpack.c.l.b16 %v611
    %v1299 = vunpack.c.h.b16 %v611
    %v1300 = vunpack.c.l.b16 %v612
    %v1301 = vunpack.c.h.b16 %v612
    %v1302 = vunpack.c.l.b16 %v613
    %v1303 = vunpack.c.h.b16 %v613
    %v1304 = vunpack.c.l.b16 %v614
    %v1305 = vunpack.c.h.b16 %v614
    %v1306 = vunpack.c.l.b16 %v615
    %v1307 = vunpack.c.h.b16 %v615
    %v1308 = vunpack.c.l.b16 %v616
    %v1309 = vunpack.c.h.b16 %v616
    %v1310 = vunpack.c.l.b16 %v617
    %v1311 = vunpack.c.h.b16 %v617
    %v1312 = vunpack.c.l.b16 %v618
    %v1313 = vunpack.c.h.b16 %v618
    %v1314 = vunpack.c.l.b16 %v619
    %v1315 = vunpack.c.h.b16 %v619
    %v1316 = vunpack.c.l.b16 %v620
    %v1317 = vunpack.c.h.b16 %v620
    %v1318 = vunpack.c.l.b16 %v621
    %v1319 = vunpack.c.h.b16 %v621
    %v1320 = vunpack.c.l.b16 %v622
    %v1321 = vunpack.c.h.b16 %v622
    %v1322 = vunpack.c.l.b16 %v623
    %v1323 = vunpack.c.h.b16 %v623
    %v1324 = vunpack.c.l.b16 %v624
    %v1325 = vunpack.c.h.b16 %v624
    %v1326 = vunpack.c.l.b16 %v625
    %v1327 = vunpack.c.h.b16 %v625
    %v1328 = vunpack.c.l.b16 %v626
    %v1329 = vunpack.c.h.b16 %v626
    %v1330 = vunpack.c.l.b16 %v627
    %v1331 = vunpack.c.h.b16 %v627
    %v1332 = vunpack.c.l.b16 %v628
    %v1333 = vunpack.c.h.b16 %v628
    %v1334 = vunpack.c.l.b16 %v629
    %v1335 = vunpack.c.h.b16 %v629
    %v1336 = vunpack.c.l.b16 %v630
    %v1337 = vunpack.c.h.b16 %v630
    %v1338 = vunpack.c.l.b16 %v631
    %v1339 = vunpack.c.h.b16 %v631
    %v1340 = vunpack.c.l.b16 %v632
    %v1341 = vunpack.c.h.b16 %v632
    %v1342 = vunpack.c.l.b16 %v633
    %v1343 = vunpack.c.h.b16 %v633
    %v1344 = vunpack.c.l.b16 %v634
    %v1345 = vunpack.c.h.b16 %v634
    %v1346 = vunpack.c.l.b16 %v635
    %v1347 = vunpack.c.h.b16 %v635
    %v1348 = vunpack.c.l.b16 %v636
    %v1349 = vunpack.c.h.b16 %v636
    %v1350 = vunpack.c.l.b16 %v637
    %v1351 = vunpack.c.h.b16 %v637
    %v1352 = vunpack.c.l.b16 %v638
    %v1353 = vunpack.c.h.b16 %v638
    %v1354 = vunpack.c.l.b16 %v639
    %v1355 = vunpack.c.h.b16 %v639
    %v1356 = vunpack.c.l.b16 %v640
    %v1357 = vunpack.c.h.b16 %v640
    %v1358 = vunpack.c.l.b16 %v641
    %v1359 = vunpack.c.h.b16 %v641
    %v1360 = vunpack.c.l.b16 %v642
    %v1361 = vunpack.c.h.b16 %v642
    %v1362 = vunpack.c.l.b16 %v643
    %v1363 = vunpack.c.h.b16 %v643
    %v1364 = vunpack.c.l.b16 %v644
    %v1365 = vunpack.c.h.b16 %v644
    %v1366 = vunpack.c.l.b16 %v645
    %v1367 = vunpack.c.h.b16 %v645
    %v1368 = vunpack.c.l.b16 %v646
    %v1369 = vunpack.c.h.b16 %v646
    %v1370 = vunpack.c.l.b16 %v647
    %v1371 = vunpack.c.h.b16 %v647
    %v1372 = vunpack.c.l.b16 %v648
    %v1373 = vunpack.c.h.b16 %v648
    %v1374 = vunpack.c.l.b16 %v649
    %v1375 = vunpack.c.h.b16 %v649
    %v1376 = vunpack.c.l.b16 %v650
    %v1377 = vunpack.c.h.b16 %v650
    %v1378 = vunpack.c.l.b16 %v651
    %v1379 = vunpack.c.h.b16 %v651
    %v1380 = vunpack.c.l.b16 %v652
    %v1381 = vunpack.c.h.b16 %v652
    %v1382 = vunpack.c.l.b16 %v653
    %v1383 = vunpack.c.h.b16 %v653
    %v1384 = vunpack.c.l.b16 %v654
    %v1385 = vunpack.c.h.b16 %v654
    %v1386 = vunpack.c.l.b16 %v655
    %v1387 = vunpack.c.h.b16 %v655
    %v1388 = vunpack.c.l.b16 %v656
    %v1389 = vunpack.c.h.b16 %v656
    %v1390 = vunpack.c.l.b16 %v657
    %v1391 = vunpack.c.h.b16 %v657
    %v1392 = vunpack.c.l.b16 %v658
    %v1393 = vunpack.c.h.b16 %v658
    %v1394 = vunpack.c.l.b16 %v659
    %v1395 = vunpack.c.h.b16 %v659
    %v1396 = vunpack.c.l.b16 %v660
    %v1397 = vunpack.c.h.b16 %v660
    %v1398 = vunpack.c.l.b16 %v661
    %v1399 = vunpack.c.h.b16 %v661
    %v1400 = vunpack.c.l.b16 %v662
    %v1401 = vunpack.c.h.b16 %v662
    %v1402 = vunpack.c.l.b16 %v663
    %v1403 = vunpack.c.h.b16 %v663
    %v1404 = vunpack.c.l.b16 %v664
    %v1405 = vunpack.c.h.b16 %v664
    %v1406 = vunpack.c.l.b16 %v665
    %v1407 = vunpack.c.h.b16 %v665
    %v1408 = vunpack.c.l.b16 %v666
    %v1409 = vunpack.c.h.b16 %v666
    %v1410 = vunpack.c.l.b16 %v667
    %v1411 = vunpack.c.h.b16 %v667
    %v1412 = vunpack.c.l.b16 %v668
    %v1413 = vunpack.c.h.b16 %v668
    %v1414 = vunpack.c.l.b16 %v669
    %v1415 = vunpack.c.h.b16 %v669
    %v1416 = vunpack.c.l.b16 %v670
    %v1417 = vunpack.c.h.b16 %v670
    %v1418 = vunpack.c.l.b16 %v671
    %v1419 = vunpack.c.h.b16 %v671
    %v1420 = vunpack.c.l.b16 %v672
    %v1421 = vunpack.c.h.b16 %v672
    %v1422 = vunpack.c.l.b16 %v673
    %v1423 = vunpack.c.h.b16 %v673
    %v1424 = vunpack.c.l.b16 %v674
    %v1425 = vunpack.c.h.b16 %v674
    %v1426 = vunpack.c.l.b16 %v675
    %v1427 = vunpack.c.h.b16 %v675
    %v1428 = vunpack.c.l.b16 %v676
    %v1429 = vunpack.c.h.b16 %v676
    %v1430 = vunpack.c.l.b16 %v677
    %v1431 = vunpack.c.h.b16 %v677
    %v1432 = vunpack.c.l.b16 %v678
    %v1433 = vunpack.c.h.b16 %v678
    %v1434 = vunpack.c.l.b16 %v679
    %v1435 = vunpack.c.h.b16 %v679
    %v1436 = vunpack.c.l.b16 %v680
    %v1437 = vunpack.c.h.b16 %v680
    %v1438 = vunpack.c.l.b16 %v681
    %v1439 = vunpack.c.h.b16 %v681
    %v1440 = vunpack.c.l.b16 %v682
    %v1441 = vunpack.c.h.b16 %v682
    %v1442 = vunpack.c.l.b16 %v683
    %v1443 = vunpack.c.h.b16 %v683
    %v1444 = vunpack.c.l.b16 %v684
    %v1445 = vunpack.c.h.b16 %v684
    %v1446 = vunpack.c.l.b16 %v685
    %v1447 = vunpack.c.h.b16 %v685
    %v1448 = vunpack.c.l.b16 %v686
    %v1449 = vunpack.c.h.b16 %v686
    %v1450 = vunpack.c.l.b16 %v687
    %v1451 = vunpack.c.h.b16 %v687
    %v1452 = vunpack.c.l.b16 %v688
    %v1453 = vunpack.c.h.b16 %v688
    %v1454 = vunpack.c.l.b16 %v689
    %v1455 = vunpack.c.h.b16 %v689
    %v1456 = vunpack.c.l.b16 %v690
    %v1457 = vunpack.c.h.b16 %v690
    %v1458 = vunpack.c.l.b16 %v691
    %v1459 = vunpack.c.h.b16 %v691
    %v1460 = vunpack.c.l.b16 %v692
    %v1461 = vunpack.c.h.b16 %v692
    %v1462 = vunpack.c.l.b16 %v693
    %v1463 = vunpack.c.h.b16 %v693
    %v1464 = vunpack.c.l.b16 %v694
    %v1465 = vunpack.c.h.b16 %v694
    %v1466 = vunpack.c.l.b16 %v695
    %v1467 = vunpack.c.h.b16 %v695
    %v1468 = vunpack.c.l.b16 %v696
    %v1469 = vunpack.c.h.b16 %v696
    %v1470 = vunpack.c.l.b16 %v697
    %v1471 = vunpack.c.h.b16 %v697
    %v1472 = vunpack.c.l.b16 %v698
    %v1473 = vunpack.c.h.b16 %v698
    %v1474 = vunpack.c.l.b16 %v699
    %v1475 = vunpack.c.h.b16 %v699
    %v1476 = vunpack.c.l.b16 %v700
    %v1477 = vunpack.c.h.b16 %v700
    %v1478 = vunpack.c.l.b16 %v701
    %v1479 = vunpack.c.h.b16 %v701
    %v1480 = vunpack.c.l.b16 %v702
    %v1481 = vunpack.c.h.b16 %v702
    %v1482 = vunpack.c.l.b16 %v703
    %v1483 = vunpack.c.h.b16 %v703
    %v1484 = vunpack.c.l.b16 %v704
    %v1485 = vunpack.c.h.b16 %v704
    %v1486 = vunpack.c.l.b16 %v705
    %v1487 = vunpack.c.h.b16 %v705
    %v1488 = vunpack.c.l.b16 %v706
    %v1489 = vunpack.c.h.b16 %v706
    %v1490 = vunpack.c.l.b16 %v707
    %v1491 = vunpack.c.h.b16 %v707
    %v1492 = vunpack.c.l.b16 %v708
    %v1493 = vunpack.c.h.b16 %v708
    %v1494 = vunpack.c.l.b16 %v709
    %v1495 = vunpack.c.h.b16 %v709
    %v1496 = vunpack.c.l.b16 %v710
    %v1497 = vunpack.c.h.b16 %v710
    %v1498 = vunpack.c.l.b16 %v711
    %v1499 = vunpack.c.h.b16 %v711
    %v1500 = vunpack.c.l.b16 %v712
    %v1501 = vunpack.c.h.b16 %v712
    %v1502 = vunpack.c.l.b16 %v713
    %v1503 = vunpack.c.h.b16 %v713
    %v1504 = vunpack.c.l.b16 %v714
    %v1505 = vunpack.c.h.b16 %v714
    %v1506 = vunpack.c.l.b16 %v715
    %v1507 = vunpack.c.h.b16 %v715
    %v1508 = vunpack.c.l.b16 %v716
    %v1509 = vunpack.c.h.b16 %v716
    %v1510 = vunpack.c.l.b16 %v717
    %v1511 = vunpack.c.h.b16 %v717
    %v1512 = vunpack.c.l.b16 %v718
    %v1513 = vunpack.c.h.b16 %v718
    %v1514 = vunpack.c.l.b16 %v719
    %v1515 = vunpack.c.h.b16 %v719
    %v1516 = vunpack.c.l.b16 %v720
    %v1517 = vunpack.c.h.b16 %v720
    %v1518 = vunpack.c.l.b16 %v721
    %v1519 = vunpack.c.h.b16 %v721
    %v1520 = vunpack.c.l.b16 %v722
    %v1521 = vunpack.c.h.b16 %v722
    %v1522 = vunpack.c.l.b16 %v723
    %v1523 = vunpack.c.h.b16 %v723
    %v1524 = vunpack.c.l.b16 %v724
    %v1525 = vunpack.c.h.b16 %v724
    %v1526 = vunpack.c.l.b16 %v725
    %v1527 = vunpack.c.h.b16 %v725
    %v1528 = vunpack.c.l.b16 %v726
    %v1529 = vunpack.c.h.b16 %v726
    %v1530 = vunpack.c.l.b16 %v727
    %v1531 = vunpack.c.h.b16 %v727
    %v1532 = vunpack.c.l.b16 %v728
    %v1533 = vunpack.c.h.b16 %v728
    %v1534 = vunpack.c.l.b16 %v729
    %v1535 = vunpack.c.h.b16 %v729
    %v1536 = vunpack.c.l.b16 %v730
    %v1537 = vunpack.c.h.b16 %v730
    %v1538 = vunpack.c.l.b16 %v731
    %v1539 = vunpack.c.h.b16 %v731
    %v1540 = vunpack.c.l.b16 %v732
    %v1541 = vunpack.c.h.b16 %v732
    %v1542 = vunpack.c.l.b16 %v733
    %v1543 = vunpack.c.h.b16 %v733
    %v1544 = vpack.c.b16 %v1040, %v1032
    %v1545 = vpack.c.b16 %v1041, %v1033
    %v1546 = vpack.c.b16 %v1042, %v1034
    %v1547 = vpack.c.b16 %v1043, %v1035
    %v1548 = vpack.c.b16 %v1044, %v1036
    %v1549 = vpack.c.b16 %v1045, %v1037
    %v1550 = vpack.c.b16 %v1046, %v1038
    %v1551 = vpack.c.b16 %v1047, %v1039
    %v1552 = vpack.c.b16 %v1056, %v1048
    %v1553 = vpack.c.b16 %v1057, %v1049
    %v1554 = vpack.c.b16 %v1058, %v1050
    %v1555 = vpack.c.b16 %v1059, %v1051
    %v1556 = vpack.c.b16 %v1060, %v1052
    %v1557 = vpack.c.b16 %v1061, %v1053
    %v1558 = vpack.c.b16 %v1062, %v1054
    %v1559 = vpack.c.b16 %v1063, %v1055
    %v1560 = vpack.c.b16 %v1072, %v1064
    %v1561 = vpack.c.b16 %v1073, %v1065
    %v1562 = vpack.c.b16 %v1074, %v1066
    %v1563 = vpack.c.b16 %v1075, %v1067
    %v1564 = vpack.c.b16 %v1076, %v1068
    %v1565 = vpack.c.b16 %v1077, %v1069
    %v1566 = vpack.c.b16 %v1078, %v1070
    %v1567 = vpack.c.b16 %v1079, %v1071
    %v1568 = vpack.c.b16 %v1088, %v1080
    %v1569 = vpack.c.b16 %v1089, %v1081
    %v1570 = vpack.c.b16 %v1090, %v1082
    %v1571 = vpack.c.b16 %v1091, %v1083
    %v1572 = vpack.c.b16 %v1092, %v1084
    %v1573 = vpack.c.b16 %v1093, %v1085
    %v1574 = vpack.c.b16 %v1094, %v1086
    %v1575 = vpack.c.b16 %v1095, %v1087
    %v1576 = vpack.c.b16 %v1104, %v1096
    %v1577 = vpack.c.b16 %v1105, %v1097
    %v1578 = vpack.c.b16 %v1106, %v1098
    %v1579 = vpack.c.b16 %v1107, %v1099
    %v1580 = vpack.c.b16 %v1108, %v1100
    %v1581 = vpack.c.b16 %v1109, %v1101
    %v1582 = vpack.c.b16 %v1110, %v1102
    %v1583 = vpack.c.b16 %v1111, %v1103
    %v1584 = vpack.c.b16 %v1120, %v1112
    %v1585 = vpack.c.b16 %v1121, %v1113
    %v1586 = vpack.c.b16 %v1122, %v1114
    %v1587 = vpack.c.b16 %v1123, %v1115
    %v1588 = vpack.c.b16 %v1124, %v1116
    %v1589 = vpack.c.b16 %v1125, %v1117
    %v1590 = vpack.c.b16 %v1126, %v1118
    %v1591 = vpack.c.b16 %v1127, %v1119
    %v1592 = vpack.c.b16 %v1136, %v1128
    %v1593 = vpack.c.b16 %v1137, %v1129
    %v1594 = vpack.c.b16 %v1138, %v1130
    %v1595 = vpack.c.b16 %v1139, %v1131
    %v1596 = vpack.c.b16 %v1140, %v1132
    %v1597 = vpack.c.b16 %v1141, %v1133
    %v1598 = vpack.c.b16 %v1142, %v1134
    %v1599 = vpack.c.b16 %v1143, %v1135
    %v1600 = vpack.c.b16 %v1152, %v1144
    %v1601 = vpack.c.b16 %v1153, %v1145
    %v1602 = vpack.c.b16 %v1154, %v1146
    %v1603 = vpack.c.b16 %v1155, %v1147
    %v1604 = vpack.c.b16 %v1156, %v1148
    %v1605 = vpack.c.b16 %v1157, %v1149
    %v1606 = vpack.c.b16 %v1158, %v1150
    %v1607 = vpack.c.b16 %v1159, %v1151
    %v1608 = vpack.c.b16 %v1168, %v1160
    %v1609 = vpack.c.b16 %v1169, %v1161
    %v1610 = vpack.c.b16 %v1170, %v1162
    %v1611 = vpack.c.b16 %v1171, %v1163
    %v1612 = vpack.c.b16 %v1172, %v1164
    %v1613 = vpack.c.b16 %v1173, %v1165
    %v1614 = vpack.c.b16 %v1174, %v1166
    %v1615 = vpack.c.b16 %v1175, %v1167
    %v1616 = vpack.c.b16 %v1184, %v1176
    %v1617 = vpack.c.b16 %v1185, %v1177
    %v1618 = vpack.c.b16 %v1186, %v1178
    %v1619 = vpack.c.b16 %v1187, %v1179
    %v1620 = vpack.c.b16 %v1188, %v1180
    %v1621 = vpack.c.b16 %v1189, %v1181
    %v1622 = vpack.c.b16 %v1190, %v1182
    %v1623 = vpack.c.b16 %v1191, %v1183
    %v1624 = vpack.c.b16 %v1200, %v1192
    %v1625 = vpack.c.b16 %v1201, %v1193
    %v1626 = vpack.c.b16 %v1202, %v1194
    %v1627 = vpack.c.b16 %v1203, %v1195
    %v1628 = vpack.c.b16 %v1204, %v1196
    %v1629 = vpack.c.b16 %v1205, %v1197
    %v1630 = vpack.c.b16 %v1206, %v1198
    %v1631 = vpack.c.b16 %v1207, %v1199
    %v1632 = vpack.c.b16 %v1216, %v1208
    %v1633 = vpack.c.b16 %v1217, %v1209
    %v1634 = vpack.c.b16 %v1218, %v1210
    %v1635 = vpack.c.b16 %v1219, %v1211
    %v1636 = vpack.c.b16 %v1220, %v1212
    %v1637 = vpack.c.b16 %v1221, %v1213
    %v1638 = vpack.c.b16 %v1222, %v1214
    %v1639 = vpack.c.b16 %v1223, %v1215
    %v1640 = vpack.c.b16 %v1232, %v1224
    %v1641 = vpack.c.b16 %v1233, %v1225
    %v1642 = vpack.c.b16 %v1234, %v1226
    %v1643 = vpack.c.b16 %v1235, %v1227
    %v1644 = vpack.c.b16 %v1236, %v1228
    %v1645 = vpack.c.b16 %v1237, %v1229
    %v1646 = vpack.c.b16 %v1238, %v1230
    %v1647 = vpack.c.b16 %v1239, %v1231
    %v1648 = vpack.c.b16 %v1248, %v1240
    %v1649 = vpack.c.b16 %v1249, %v1241
    %v1650 = vpack.c.b16 %v1250, %v1242
    %v1651 = vpack.c.b16 %v1251, %v1243
    %v1652 = vpack.c.b16 %v1252, %v1244
    %v1653 = vpack.c.b16 %v1253, %v1245
    %v1654 = vpack.c.b16 %v1254, %v1246
    %v1655 = vpack.c.b16 %v1255, %v1247
    %v1656 = vpack.c.b16 %v1264, %v1256
    %v1657 = vpack.c.b16 %v1265, %v1257
    %v1658 = vpack.c.b16 %v1266, %v1258
    %v1659 = vpack.c.b16 %v1267, %v1259
    %v1660 = vpack.c.b16 %v1268, %v1260
    %v1661 = vpack.c.b16 %v1269, %v1261
    %v1662 = vpack.c.b16 %v1270, %v1262
    %v1663 = vpack.c.b16 %v1271, %v1263
    %v1664 = vpack.c.b16 %v1280, %v1272
    %v1665 = vpack.c.b16 %v1281, %v1273
    %v1666 = vpack.c.b16 %v1282, %v1274
    %v1667 = vpack.c.b16 %v1283, %v1275
    %v1668 = vpack.c.b16 %v1284, %v1276
    %v1669 = vpack.c.b16 %v1285, %v1277
    %v1670 = vpack.c.b16 %v1286, %v1278
    %v1671 = vpack.c.b16 %v1287, %v1279
    %v1672 = vpack.c.b16 %v1296, %v1288
    %v1673 = vpack.c.b16 %v1297, %v1289
    %v1674 = vpack.c.b16 %v1298, %v1290
    %v1675 = vpack.c.b16 %v1299, %v1291
    %v1676 = vpack.c.b16 %v1300, %v1292
    %v1677 = vpack.c.b16 %v1301, %v1293
    %v1678 = vpack.c.b16 %v1302, %v1294
    %v1679 = vpack.c.b16 %v1303, %v1295
    %v1680 = vpack.c.b16 %v1312, %v1304
    %v1681 = vpack.c.b16 %v1313, %v1305
    %v1682 = vpack.c.b16 %v1314, %v1306
    %v1683 = vpack.c.b16 %v1315, %v1307
    %v1684 = vpack.c.b16 %v1316, %v1308
    %v1685 = vpack.c.b16 %v1317, %v1309
    %v1686 = vpack.c.b16 %v1318, %v1310
    %v1687 = vpack.c.b16 %v1319, %v1311
    %v1688 = vpack.c.b16 %v1328, %v1320
    %v1689 = vpack.c.b16 %v1329, %v1321
    %v1690 = vpack.c.b16 %v1330, %v1322
    %v1691 = vpack.c.b16 %v1331, %v1323
    %v1692 = vpack.c.b16 %v1332, %v1324
    %v1693 = vpack.c.b16 %v1333, %v1325
    %v1694 = vpack.c.b16 %v1334, %v1326
    %v1695 = vpack.c.b16 %v1335, %v1327
    %v1696 = vpack.c.b16 %v1344, %v1336
    %v1697 = vpack.c.b16 %v1345, %v1337
    %v1698 = vpack.c.b16 %v1346, %v1338
    %v1699 = vpack.c.b16 %v1347, %v1339
    %v1700 = vpack.c.b16 %v1348, %v1340
    %v1701 = vpack.c.b16 %v1349, %v1341
    %v1702 = vpack.c.b16 %v1350, %v1342
    %v1703 = vpack.c.b16 %v1351, %v1343
    %v1704 = vpack.c.b16 %v1360, %v1352
    %v1705 = vpack.c.b16 %v1361, %v1353
    %v1706 = vpack.c.b16 %v1362, %v1354
    %v1707 = vpack.c.b16 %v1363, %v1355
    %v1708 = vpack.c.b16 %v1364, %v1356
    %v1709 = vpack.c.b16 %v1365, %v1357
    %v1710 = vpack.c.b16 %v1366, %v1358
    %v1711 = vpack.c.b16 %v1367, %v1359
    %v1712 = vpack.c.b16 %v1376, %v1368
    %v1713 = vpack.c.b16 %v1377, %v1369
    %v1714 = vpack.c.b16 %v1378, %v1370
    %v1715 = vpack.c.b16 %v1379, %v1371
    %v1716 = vpack.c.b16 %v1380, %v1372
    %v1717 = vpack.c.b16 %v1381, %v1373
    %v1718 = vpack.c.b16 %v1382, %v1374
    %v1719 = vpack.c.b16 %v1383, %v1375
    %v1720 = vpack.c.b16 %v1392, %v1384
    %v1721 = vpack.c.b16 %v1393, %v1385
    %v1722 = vpack.c.b16 %v1394, %v1386
    %v1723 = vpack.c.b16 %v1395, %v1387
    %v1724 = vpack.c.b16 %v1396, %v1388
    %v1725 = vpack.c.b16 %v1397, %v1389
    %v1726 = vpack.c.b16 %v1398, %v1390
    %v1727 = vpack.c.b16 %v1399, %v1391
    %v1728 = vpack.c.b16 %v1408, %v1400
    %v1729 = vpack.c.b16 %v1409, %v1401
    %v1730 = vpack.c.b16 %v1410, %v1402
    %v1731 = vpack.c.b16 %v1411, %v1403
    %v1732 = vpack.c.b16 %v1412, %v1404
    %v1733 = vpack.c.b16 %v1413, %v1405
    %v1734 = vpack.c.b16 %v1414, %v1406
    %v1735 = vpack.c.b16 %v1415, %v1407
    %v1736 = vpack.c.b16 %v1424, %v1416
    %v1737 = vpack.c.b16 %v1425, %v1417
    %v1738 = vpack.c.b16 %v1426, %v1418
    %v1739 = vpack.c.b16 %v1427, %v1419
    %v1740 = vpack.c.b16 %v1428, %v1420
    %v1741 = vpack.c.b16 %v1429, %v1421
    %v1742 = vpack.c.b16 %v1430, %v1422
    %v1743 = vpack.c.b16 %v1431, %v1423
    %v1744 = vpack.c.b16 %v1440, %v1432
    %v1745 = vpack.c.b16 %v1441, %v1433
    %v1746 = vpack.c.b16 %v1442, %v1434
    %v1747 = vpack.c.b16 %v1443, %v1435
    %v1748 = vpack.c.b16 %v1444, %v1436
    %v1749 = vpack.c.b16 %v1445, %v1437
    %v1750 = vpack.c.b16 %v1446, %v1438
    %v1751 = vpack.c.b16 %v1447, %v1439
    %v1752 = vpack.c.b16 %v1456, %v1448
    %v1753 = vpack.c.b16 %v1457, %v1449
    %v1754 = vpack.c.b16 %v1458, %v1450
    %v1755 = vpack.c.b16 %v1459, %v1451
    %v1756 = vpack.c.b16 %v1460, %v1452
    %v1757 = vpack.c.b16 %v1461, %v1453
    %v1758 = vpack.c.b16 %v1462, %v1454
    %v1759 = vpack.c.b16 %v1463, %v1455
    %v1760 = vpack.c.b16 %v1472, %v1464
    %v1761 = vpack.c.b16 %v1473, %v1465
    %v1762 = vpack.c.b16 %v1474, %v1466
    %v1763 = vpack.c.b16 %v1475, %v1467
    %v1764 = vpack.c.b16 %v1476, %v1468
    %v1765 = vpack.c.b16 %v1477, %v1469
    %v1766 = vpack.c.b16 %v1478, %v1470
    %v1767 = vpack.c.b16 %v1479, %v1471
    %v1768 = vpack.c.b16 %v1488, %v1480
    %v1769 = vpack.c.b16 %v1489, %v1481
    %v1770 = vpack.c.b16 %v1490, %v1482
    %v1771 = vpack.c.b16 %v1491, %v1483
    %v1772 = vpack.c.b16 %v1492, %v1484
    %v1773 = vpack.c.b16 %v1493, %v1485
    %v1774 = vpack.c.b16 %v1494, %v1486
    %v1775 = vpack.c.b16 %v1495, %v1487
    %v1776 = vpack.c.b16 %v1504, %v1496
    %v1777 = vpack.c.b16 %v1505, %v1497
    %v1778 = vpack.c.b16 %v1506, %v1498
    %v1779 = vpack.c.b16 %v1507, %v1499
    %v1780 = vpack.c.b16 %v1508, %v1500
    %v1781 = vpack.c.b16 %v1509, %v1501
    %v1782 = vpack.c.b16 %v1510, %v1502
    %v1783 = vpack.c.b16 %v1511, %v1503
    %v1784 = vpack.c.b16 %v1520, %v1512
    %v1785 = vpack.c.b16 %v1521, %v1513
    %v1786 = vpack.c.b16 %v1522, %v1514
    %v1787 = vpack.c.b16 %v1523, %v1515
    %v1788 = vpack.c.b16 %v1524, %v1516
    %v1789 = vpack.c.b16 %v1525, %v1517
    %v1790 = vpack.c.b16 %v1526, %v1518
    %v1791 = vpack.c.b16 %v1527, %v1519
    %v1792 = vpack.c.b16 %v1536, %v1528
    %v1793 = vpack.c.b16 %v1537, %v1529
    %v1794 = vpack.c.b16 %v1538, %v1530
    %v1795 = vpack.c.b16 %v1539, %v1531
    %v1796 = vpack.c.b16 %v1540, %v1532
    %v1797 = vpack.c.b16 %v1541, %v1533
    %v1798 = vpack.c.b16 %v1542, %v1534
    %v1799 = vpack.c.b16 %v1543, %v1535
    %2056 = vmatprep.subr.bf16.mxu0 %v1601
    %2057 = vmatpush1.bf16.msra.mxu0 %v1600
    %2058 = vmatprep.subr.bf16.mxu0 %v1593
    %2059 = vmatpush1.bf16.msra.mxu0 %v1592
    %2060 = vmatprep.subr.bf16.mxu0 %v1585
    %2061 = vmatpush1.bf16.msra.mxu0 %v1584
    %2062 = vmatprep.subr.bf16.mxu0 %v1577
    %2063 = vmatpush1.bf16.msra.mxu0 %v1576
    %2064 = vmatprep.subr.bf16.mxu0 %v1569
    %2065 = vmatpush1.bf16.msra.mxu0 %v1568
    %2066 = vmatprep.subr.bf16.mxu0 %v1561
    %2067 = vmatpush1.bf16.msra.mxu0 %v1560
    %2068 = vmatprep.subr.bf16.mxu0 %v1553
    %2069 = vmatpush1.bf16.msra.mxu0 %v1552
    %2070 = vmatprep.subr.bf16.mxu0 %v1545
    %2071 = vmatpush1.bf16.msra.mxu0 %v1544
    %2072 = vmatprep.subr.bf16.mxu0 %v1665
    %2073 = vmatpush2.bf16.msra.mxu0 %v1664
    %2074 = vmatprep.subr.bf16.mxu0 %v1657
    %2075 = vmatpush2.bf16.msra.mxu0 %v1656
    %2076 = vmatprep.subr.bf16.mxu0 %v1649
    %2077 = vmatpush2.bf16.msra.mxu0 %v1648
    %2078 = vmatprep.subr.bf16.mxu0 %v1641
    %2079 = vmatpush2.bf16.msra.mxu0 %v1640
    %2080 = vmatprep.subr.bf16.mxu0 %v1633
    %2081 = vmatpush2.bf16.msra.mxu0 %v1632
    %2082 = vmatprep.subr.bf16.mxu0 %v1625
    %2083 = vmatpush2.bf16.msra.mxu0 %v1624
    %2084 = vmatprep.subr.bf16.mxu0 %v1617
    %2085 = vmatpush2.bf16.msra.mxu0 %v1616
    %2086 = vmatprep.subr.bf16.mxu0 %v1609
    %2087 = vmatpush2.bf16.msra.mxu0 %v1608
    %2088 = vmatprep.mubr.bf16.mxu0 %v475
    %2089 = vmatmul.mubr.bf16.gmra.mxu0 %v474
    %v2090 = vpop.f32.mrf.mxu0
    %v2091 = vadd.f32 %v739, %v2090
    %v2092 = vpop.f32.mrf.mxu0
    %v2093 = vadd.f32 %v743, %v2092
    %v2094 = vpop.f32.mrf.mxu0
    %v2095 = vpop.f32.mrf.mxu0
    %2096 = vdwg.mxu0
    %2097 = vmatprep.subr.bf16.mxu0 %v1729
    %2098 = vmatpush1.bf16.msra.mxu0 %v1728
    %2099 = vmatprep.subr.bf16.mxu0 %v1721
    %2100 = vmatpush1.bf16.msra.mxu0 %v1720
    %2101 = vmatprep.subr.bf16.mxu0 %v1713
    %2102 = vmatpush1.bf16.msra.mxu0 %v1712
    %2103 = vmatprep.subr.bf16.mxu0 %v1705
    %2104 = vmatpush1.bf16.msra.mxu0 %v1704
    %2105 = vmatprep.subr.bf16.mxu0 %v1697
    %2106 = vmatpush1.bf16.msra.mxu0 %v1696
    %2107 = vmatprep.subr.bf16.mxu0 %v1689
    %2108 = vmatpush1.bf16.msra.mxu0 %v1688
    %2109 = vmatprep.subr.bf16.mxu0 %v1681
    %2110 = vmatpush1.bf16.msra.mxu0 %v1680
    %2111 = vmatprep.subr.bf16.mxu0 %v1673
    %2112 = vmatpush1.bf16.msra.mxu0 %v1672
    %2113 = vmatprep.subr.bf16.mxu0 %v1793
    %2114 = vmatpush2.bf16.msra.mxu0 %v1792
    %2115 = vmatprep.subr.bf16.mxu0 %v1785
    %2116 = vmatpush2.bf16.msra.mxu0 %v1784
    %2117 = vmatprep.subr.bf16.mxu0 %v1777
    %2118 = vmatpush2.bf16.msra.mxu0 %v1776
    %2119 = vmatprep.subr.bf16.mxu0 %v1769
    %2120 = vmatpush2.bf16.msra.mxu0 %v1768
    %2121 = vmatprep.subr.bf16.mxu0 %v1761
    %2122 = vmatpush2.bf16.msra.mxu0 %v1760
    %2123 = vmatprep.subr.bf16.mxu0 %v1753
    %2124 = vmatpush2.bf16.msra.mxu0 %v1752
    %2125 = vmatprep.subr.bf16.mxu0 %v1745
    %2126 = vmatpush2.bf16.msra.mxu0 %v1744
    %2127 = vmatprep.subr.bf16.mxu0 %v1737
    %2128 = vmatpush2.bf16.msra.mxu0 %v1736
    %2129 = vmatprep.mubr.bf16.mxu0 %v477
    %2130 = vmatmul.mubr.bf16.gmra.mxu0 %v476
    %v2131 = vpop.f32.mrf.mxu0
    %v2132 = vadd.f32 %v2091, %v2131
    %v2133 = vpop.f32.mrf.mxu0
    %v2134 = vadd.f32 %v2093, %v2133
    %v2135 = vpop.f32.mrf.mxu0
    %v2136 = vpop.f32.mrf.mxu0
    %2137 = vdwg.mxu0
    %2138 = vmatprep.subr.bf16.mxu0 %v1603
    %2139 = vmatpush1.bf16.msra.mxu0 %v1602
    %2140 = vmatprep.subr.bf16.mxu0 %v1595
    %2141 = vmatpush1.bf16.msra.mxu0 %v1594
    %2142 = vmatprep.subr.bf16.mxu0 %v1587
    %2143 = vmatpush1.bf16.msra.mxu0 %v1586
    %2144 = vmatprep.subr.bf16.mxu0 %v1579
    %2145 = vmatpush1.bf16.msra.mxu0 %v1578
    %2146 = vmatprep.subr.bf16.mxu0 %v1571
    %2147 = vmatpush1.bf16.msra.mxu0 %v1570
    %2148 = vmatprep.subr.bf16.mxu0 %v1563
    %2149 = vmatpush1.bf16.msra.mxu0 %v1562
    %2150 = vmatprep.subr.bf16.mxu0 %v1555
    %2151 = vmatpush1.bf16.msra.mxu0 %v1554
    %2152 = vmatprep.subr.bf16.mxu0 %v1547
    %2153 = vmatpush1.bf16.msra.mxu0 %v1546
    %2154 = vmatprep.subr.bf16.mxu0 %v1667
    %2155 = vmatpush2.bf16.msra.mxu0 %v1666
    %2156 = vmatprep.subr.bf16.mxu0 %v1659
    %2157 = vmatpush2.bf16.msra.mxu0 %v1658
    %2158 = vmatprep.subr.bf16.mxu0 %v1651
    %2159 = vmatpush2.bf16.msra.mxu0 %v1650
    %2160 = vmatprep.subr.bf16.mxu0 %v1643
    %2161 = vmatpush2.bf16.msra.mxu0 %v1642
    %2162 = vmatprep.subr.bf16.mxu0 %v1635
    %2163 = vmatpush2.bf16.msra.mxu0 %v1634
    %2164 = vmatprep.subr.bf16.mxu0 %v1627
    %2165 = vmatpush2.bf16.msra.mxu0 %v1626
    %2166 = vmatprep.subr.bf16.mxu0 %v1619
    %2167 = vmatpush2.bf16.msra.mxu0 %v1618
    %2168 = vmatprep.subr.bf16.mxu0 %v1611
    %2169 = vmatpush2.bf16.msra.mxu0 %v1610
    %2170 = vmatprep.mubr.bf16.mxu0 %v475
    %2171 = vmatmul.mubr.bf16.gmra.mxu0 %v474
    %v2172 = vpop.f32.mrf.mxu0
    %v2173 = vadd.f32 %v747, %v2172
    %v2174 = vpop.f32.mrf.mxu0
    %v2175 = vadd.f32 %v751, %v2174
    %v2176 = vpop.f32.mrf.mxu0
    %v2177 = vpop.f32.mrf.mxu0
    %2178 = vdwg.mxu0
    %2179 = vmatprep.subr.bf16.mxu0 %v1731
    %2180 = vmatpush1.bf16.msra.mxu0 %v1730
    %2181 = vmatprep.subr.bf16.mxu0 %v1723
    %2182 = vmatpush1.bf16.msra.mxu0 %v1722
    %2183 = vmatprep.subr.bf16.mxu0 %v1715
    %2184 = vmatpush1.bf16.msra.mxu0 %v1714
    %2185 = vmatprep.subr.bf16.mxu0 %v1707
    %2186 = vmatpush1.bf16.msra.mxu0 %v1706
    %2187 = vmatprep.subr.bf16.mxu0 %v1699
    %2188 = vmatpush1.bf16.msra.mxu0 %v1698
    %2189 = vmatprep.subr.bf16.mxu0 %v1691
    %2190 = vmatpush1.bf16.msra.mxu0 %v1690
    %2191 = vmatprep.subr.bf16.mxu0 %v1683
    %2192 = vmatpush1.bf16.msra.mxu0 %v1682
    %2193 = vmatprep.subr.bf16.mxu0 %v1675
    %2194 = vmatpush1.bf16.msra.mxu0 %v1674
    %2195 = vmatprep.subr.bf16.mxu0 %v1795
    %2196 = vmatpush2.bf16.msra.mxu0 %v1794
    %2197 = vmatprep.subr.bf16.mxu0 %v1787
    %2198 = vmatpush2.bf16.msra.mxu0 %v1786
    %2199 = vmatprep.subr.bf16.mxu0 %v1779
    %2200 = vmatpush2.bf16.msra.mxu0 %v1778
    %2201 = vmatprep.subr.bf16.mxu0 %v1771
    %2202 = vmatpush2.bf16.msra.mxu0 %v1770
    %2203 = vmatprep.subr.bf16.mxu0 %v1763
    %2204 = vmatpush2.bf16.msra.mxu0 %v1762
    %2205 = vmatprep.subr.bf16.mxu0 %v1755
    %2206 = vmatpush2.bf16.msra.mxu0 %v1754
    %2207 = vmatprep.subr.bf16.mxu0 %v1747
    %2208 = vmatpush2.bf16.msra.mxu0 %v1746
    %2209 = vmatprep.subr.bf16.mxu0 %v1739
    %2210 = vmatpush2.bf16.msra.mxu0 %v1738
    %2211 = vmatprep.mubr.bf16.mxu0 %v477
    %2212 = vmatmul.mubr.bf16.gmra.mxu0 %v476
    %v2213 = vpop.f32.mrf.mxu0
    %v2214 = vadd.f32 %v2173, %v2213
    %v2215 = vpop.f32.mrf.mxu0
    %v2216 = vadd.f32 %v2175, %v2215
    %v2217 = vpop.f32.mrf.mxu0
    %v2218 = vpop.f32.mrf.mxu0
    %2219 = vdwg.mxu0
    %2220 = vmatprep.subr.bf16.mxu0 %v1605
    %2221 = vmatpush1.bf16.msra.mxu0 %v1604
    %2222 = vmatprep.subr.bf16.mxu0 %v1597
    %2223 = vmatpush1.bf16.msra.mxu0 %v1596
    %2224 = vmatprep.subr.bf16.mxu0 %v1589
    %2225 = vmatpush1.bf16.msra.mxu0 %v1588
    %2226 = vmatprep.subr.bf16.mxu0 %v1581
    %2227 = vmatpush1.bf16.msra.mxu0 %v1580
    %2228 = vmatprep.subr.bf16.mxu0 %v1573
    %2229 = vmatpush1.bf16.msra.mxu0 %v1572
    %2230 = vmatprep.subr.bf16.mxu0 %v1565
    %2231 = vmatpush1.bf16.msra.mxu0 %v1564
    %2232 = vmatprep.subr.bf16.mxu0 %v1557
    %2233 = vmatpush1.bf16.msra.mxu0 %v1556
    %2234 = vmatprep.subr.bf16.mxu0 %v1549
    %2235 = vmatpush1.bf16.msra.mxu0 %v1548
    %2236 = vmatprep.subr.bf16.mxu0 %v1669
    %2237 = vmatpush2.bf16.msra.mxu0 %v1668
    %2238 = vmatprep.subr.bf16.mxu0 %v1661
    %2239 = vmatpush2.bf16.msra.mxu0 %v1660
    %2240 = vmatprep.subr.bf16.mxu0 %v1653
    %2241 = vmatpush2.bf16.msra.mxu0 %v1652
    %2242 = vmatprep.subr.bf16.mxu0 %v1645
    %2243 = vmatpush2.bf16.msra.mxu0 %v1644
    %2244 = vmatprep.subr.bf16.mxu0 %v1637
    %2245 = vmatpush2.bf16.msra.mxu0 %v1636
    %2246 = vmatprep.subr.bf16.mxu0 %v1629
    %2247 = vmatpush2.bf16.msra.mxu0 %v1628
    %2248 = vmatprep.subr.bf16.mxu0 %v1621
    %2249 = vmatpush2.bf16.msra.mxu0 %v1620
    %2250 = vmatprep.subr.bf16.mxu0 %v1613
    %2251 = vmatpush2.bf16.msra.mxu0 %v1612
    %2252 = vmatprep.mubr.bf16.mxu0 %v475
    %2253 = vmatmul.mubr.bf16.gmra.mxu0 %v474
    %v2254 = vpop.f32.mrf.mxu0
    %v2255 = vadd.f32 %v755, %v2254
    %v2256 = vpop.f32.mrf.mxu0
    %v2257 = vadd.f32 %v759, %v2256
    %v2258 = vpop.f32.mrf.mxu0
    %v2259 = vpop.f32.mrf.mxu0
    %2260 = vdwg.mxu0
    %2261 = vmatprep.subr.bf16.mxu0 %v1733
    %2262 = vmatpush1.bf16.msra.mxu0 %v1732
    %2263 = vmatprep.subr.bf16.mxu0 %v1725
    %2264 = vmatpush1.bf16.msra.mxu0 %v1724
    %2265 = vmatprep.subr.bf16.mxu0 %v1717
    %2266 = vmatpush1.bf16.msra.mxu0 %v1716
    %2267 = vmatprep.subr.bf16.mxu0 %v1709
    %2268 = vmatpush1.bf16.msra.mxu0 %v1708
    %2269 = vmatprep.subr.bf16.mxu0 %v1701
    %2270 = vmatpush1.bf16.msra.mxu0 %v1700
    %2271 = vmatprep.subr.bf16.mxu0 %v1693
    %2272 = vmatpush1.bf16.msra.mxu0 %v1692
    %2273 = vmatprep.subr.bf16.mxu0 %v1685
    %2274 = vmatpush1.bf16.msra.mxu0 %v1684
    %2275 = vmatprep.subr.bf16.mxu0 %v1677
    %2276 = vmatpush1.bf16.msra.mxu0 %v1676
    %2277 = vmatprep.subr.bf16.mxu0 %v1797
    %2278 = vmatpush2.bf16.msra.mxu0 %v1796
    %2279 = vmatprep.subr.bf16.mxu0 %v1789
    %2280 = vmatpush2.bf16.msra.mxu0 %v1788
    %2281 = vmatprep.subr.bf16.mxu0 %v1781
    %2282 = vmatpush2.bf16.msra.mxu0 %v1780
    %2283 = vmatprep.subr.bf16.mxu0 %v1773
    %2284 = vmatpush2.bf16.msra.mxu0 %v1772
    %2285 = vmatprep.subr.bf16.mxu0 %v1765
    %2286 = vmatpush2.bf16.msra.mxu0 %v1764
    %2287 = vmatprep.subr.bf16.mxu0 %v1757
    %2288 = vmatpush2.bf16.msra.mxu0 %v1756
    %2289 = vmatprep.subr.bf16.mxu0 %v1749
    %2290 = vmatpush2.bf16.msra.mxu0 %v1748
    %2291 = vmatprep.subr.bf16.mxu0 %v1741
    %2292 = vmatpush2.bf16.msra.mxu0 %v1740
    %2293 = vmatprep.mubr.bf16.mxu0 %v477
    %2294 = vmatmul.mubr.bf16.gmra.mxu0 %v476
    %v2295 = vpop.f32.mrf.mxu0
    %v2296 = vadd.f32 %v2255, %v2295
    %v2297 = vpop.f32.mrf.mxu0
    %v2298 = vadd.f32 %v2257, %v2297
    %v2299 = vpop.f32.mrf.mxu0
    %v2300 = vpop.f32.mrf.mxu0
    %2301 = vdwg.mxu0
    %2302 = vmatprep.subr.bf16.mxu0 %v1607
    %2303 = vmatpush1.bf16.msra.mxu0 %v1606
    %2304 = vmatprep.subr.bf16.mxu0 %v1599
    %2305 = vmatpush1.bf16.msra.mxu0 %v1598
    %2306 = vmatprep.subr.bf16.mxu0 %v1591
    %2307 = vmatpush1.bf16.msra.mxu0 %v1590
    %2308 = vmatprep.subr.bf16.mxu0 %v1583
    %2309 = vmatpush1.bf16.msra.mxu0 %v1582
    %2310 = vmatprep.subr.bf16.mxu0 %v1575
    %2311 = vmatpush1.bf16.msra.mxu0 %v1574
    %2312 = vmatprep.subr.bf16.mxu0 %v1567
    %2313 = vmatpush1.bf16.msra.mxu0 %v1566
    %2314 = vmatprep.subr.bf16.mxu0 %v1559
    %2315 = vmatpush1.bf16.msra.mxu0 %v1558
    %2316 = vmatprep.subr.bf16.mxu0 %v1551
    %2317 = vmatpush1.bf16.msra.mxu0 %v1550
    %2318 = vmatprep.subr.bf16.mxu0 %v1671
    %2319 = vmatpush2.bf16.msra.mxu0 %v1670
    %2320 = vmatprep.subr.bf16.mxu0 %v1663
    %2321 = vmatpush2.bf16.msra.mxu0 %v1662
    %2322 = vmatprep.subr.bf16.mxu0 %v1655
    %2323 = vmatpush2.bf16.msra.mxu0 %v1654
    %2324 = vmatprep.subr.bf16.mxu0 %v1647
    %2325 = vmatpush2.bf16.msra.mxu0 %v1646
    %2326 = vmatprep.subr.bf16.mxu0 %v1639
    %2327 = vmatpush2.bf16.msra.mxu0 %v1638
    %2328 = vmatprep.subr.bf16.mxu0 %v1631
    %2329 = vmatpush2.bf16.msra.mxu0 %v1630
    %2330 = vmatprep.subr.bf16.mxu0 %v1623
    %2331 = vmatpush2.bf16.msra.mxu0 %v1622
    %2332 = vmatprep.subr.bf16.mxu0 %v1615
    %2333 = vmatpush2.bf16.msra.mxu0 %v1614
    %2334 = vmatprep.mubr.bf16.mxu0 %v475
    %2335 = vmatmul.mubr.bf16.gmra.mxu0 %v474
    %v2336 = vpop.f32.mrf.mxu0
    %v2337 = vadd.f32 %v763, %v2336
    %v2338 = vpop.f32.mrf.mxu0
    %v2339 = vadd.f32 %v767, %v2338
    %v2340 = vpop.f32.mrf.mxu0
    %v2341 = vpop.f32.mrf.mxu0
    %2342 = vdwg.mxu0
    %2343 = vmatprep.subr.bf16.mxu0 %v1735
    %2344 = vmatpush1.bf16.msra.mxu0 %v1734
    %2345 = vmatprep.subr.bf16.mxu0 %v1727
    %2346 = vmatpush1.bf16.msra.mxu0 %v1726
    %2347 = vmatprep.subr.bf16.mxu0 %v1719
    %2348 = vmatpush1.bf16.msra.mxu0 %v1718
    %2349 = vmatprep.subr.bf16.mxu0 %v1711
    %2350 = vmatpush1.bf16.msra.mxu0 %v1710
    %2351 = vmatprep.subr.bf16.mxu0 %v1703
    %2352 = vmatpush1.bf16.msra.mxu0 %v1702
    %2353 = vmatprep.subr.bf16.mxu0 %v1695
    %2354 = vmatpush1.bf16.msra.mxu0 %v1694
    %2355 = vmatprep.subr.bf16.mxu0 %v1687
    %2356 = vmatpush1.bf16.msra.mxu0 %v1686
    %2357 = vmatprep.subr.bf16.mxu0 %v1679
    %2358 = vmatpush1.bf16.msra.mxu0 %v1678
    %2359 = vmatprep.subr.bf16.mxu0 %v1799
    %2360 = vmatpush2.bf16.msra.mxu0 %v1798
    %2361 = vmatprep.subr.bf16.mxu0 %v1791
    %2362 = vmatpush2.bf16.msra.mxu0 %v1790
    %2363 = vmatprep.subr.bf16.mxu0 %v1783
    %2364 = vmatpush2.bf16.msra.mxu0 %v1782
    %2365 = vmatprep.subr.bf16.mxu0 %v1775
    %2366 = vmatpush2.bf16.msra.mxu0 %v1774
    %2367 = vmatprep.subr.bf16.mxu0 %v1767
    %2368 = vmatpush2.bf16.msra.mxu0 %v1766
    %2369 = vmatprep.subr.bf16.mxu0 %v1759
    %2370 = vmatpush2.bf16.msra.mxu0 %v1758
    %2371 = vmatprep.subr.bf16.mxu0 %v1751
    %2372 = vmatpush2.bf16.msra.mxu0 %v1750
    %2373 = vmatprep.subr.bf16.mxu0 %v1743
    %2374 = vmatpush2.bf16.msra.mxu0 %v1742
    %2375 = vmatprep.mubr.bf16.mxu0 %v477
    %2376 = vmatmul.mubr.bf16.gmra.mxu0 %v476
    %v2377 = vpop.f32.mrf.mxu0
    %v2378 = vadd.f32 %v2337, %v2377
    %v2379 = vpop.f32.mrf.mxu0
    %v2380 = vadd.f32 %v2339, %v2379
    %v2381 = vpop.f32.mrf.mxu0
    %v2382 = vpop.f32.mrf.mxu0
    %2383 = vdwg.mxu0
    %v2384 = vmax.f32 %v2132, 0.0
    %v2385 = vmax.f32 %v2134, 0.0
    %v2386 = vmax.f32 %v2214, 0.0
    %v2387 = vmax.f32 %v2216, 0.0
    %v2388 = vmax.f32 %v2296, 0.0
    %v2389 = vmax.f32 %v2298, 0.0
    %v2390 = vmax.f32 %v2378, 0.0
    %v2391 = vmax.f32 %v2380, 0.0
    %v2392 = vpack.c.bf16 %v2384, %v2384
    %v2393 = vpack.c.bf16 %v2385, %v2385
    %v2394 = vpack.c.bf16 %v2386, %v2386
    %v2395 = vpack.c.bf16 %v2387, %v2387
    %v2396 = vpack.c.bf16 %v2388, %v2388
    %v2397 = vpack.c.bf16 %v2389, %v2389
    %v2398 = vpack.c.bf16 %v2390, %v2390
    %v2399 = vpack.c.bf16 %v2391, %v2391
    %v2400 = vld [vmem:[#allocation11] sm:$0xff]
    %v2401 = vld [vmem:[#allocation11 + $0x8] sm:$0xff]
    %v2402 = vld [vmem:[#allocation11 + $0x10] sm:$0xff]
    %v2403 = vld [vmem:[#allocation11 + $0x18] sm:$0xf]
    %v2404 = vld [vmem:[#allocation11 + $0x1c] sm:$0xff]
    %v2405 = vld [vmem:[#allocation11 + $0x24] sm:$0xff]
    %v2406 = vld [vmem:[#allocation11 + $0x2c] sm:$0xff]
    %v2407 = vld [vmem:[#allocation11 + $0x34] sm:$0xf]
    %v2408 = vld [vmem:[#allocation11 + $0x38] sm:$0xff]
    %v2409 = vld [vmem:[#allocation11 + $0x40] sm:$0xff]
    %v2410 = vld [vmem:[#allocation11 + $0x48] sm:$0xff]
    %v2411 = vld [vmem:[#allocation11 + $0x50] sm:$0xf]
    %v2412 = vld [vmem:[#allocation11 + $0x54] sm:$0xff]
    %v2413 = vld [vmem:[#allocation11 + $0x5c] sm:$0xff]
    %v2414 = vld [vmem:[#allocation11 + $0x64] sm:$0xff]
    %v2415 = vld [vmem:[#allocation11 + $0x6c] sm:$0xf]
    %v2416 = vld [vmem:[#allocation11 + $0x70] sm:$0xff]
    %v2417 = vld [vmem:[#allocation11 + $0x78] sm:$0xff]
    %v2418 = vld [vmem:[#allocation11 + $0x80] sm:$0xff]
    %v2419 = vld [vmem:[#allocation11 + $0x88] sm:$0xf]
    %v2420 = vld [vmem:[#allocation11 + $0x8c] sm:$0xff]
    %v2421 = vld [vmem:[#allocation11 + $0x94] sm:$0xff]
    %v2422 = vld [vmem:[#allocation11 + $0x9c] sm:$0xff]
    %v2423 = vld [vmem:[#allocation11 + $0xa4] sm:$0xf]
    %v2424 = vld [vmem:[#allocation11 + $0xa8] sm:$0xff]
    %v2425 = vld [vmem:[#allocation11 + $0xb0] sm:$0xff]
    %v2426 = vld [vmem:[#allocation11 + $0xb8] sm:$0xff]
    %v2427 = vld [vmem:[#allocation11 + $0xc0] sm:$0xf]
    %v2428 = vld [vmem:[#allocation11 + $0xc4] sm:$0xff]
    %v2429 = vld [vmem:[#allocation11 + $0xcc] sm:$0xff]
    %v2430 = vld [vmem:[#allocation11 + $0xd4] sm:$0xff]
    %v2431 = vld [vmem:[#allocation11 + $0xdc] sm:$0xf]
    %v2432 = vld [vmem:[#allocation11 + $0xe0] sm:$0xff]
    %v2433 = vld [vmem:[#allocation11 + $0xe8] sm:$0xff]
    %v2434 = vld [vmem:[#allocation11 + $0xf0] sm:$0xff]
    %v2435 = vld [vmem:[#allocation11 + $0xf8] sm:$0xf]
    %v2436 = vld [vmem:[#allocation11 + $0xfc] sm:$0xff]
    %v2437 = vld [vmem:[#allocation11 + $0x104] sm:$0xff]
    %v2438 = vld [vmem:[#allocation11 + $0x10c] sm:$0xff]
    %v2439 = vld [vmem:[#allocation11 + $0x114] sm:$0xf]
    %v2440 = vld [vmem:[#allocation11 + $0x118] sm:$0xff]
    %v2441 = vld [vmem:[#allocation11 + $0x120] sm:$0xff]
    %v2442 = vld [vmem:[#allocation11 + $0x128] sm:$0xff]
    %v2443 = vld [vmem:[#allocation11 + $0x130] sm:$0xf]
    %v2444 = vld [vmem:[#allocation11 + $0x134] sm:$0xff]
    %v2445 = vld [vmem:[#allocation11 + $0x13c] sm:$0xff]
    %v2446 = vld [vmem:[#allocation11 + $0x144] sm:$0xff]
    %v2447 = vld [vmem:[#allocation11 + $0x14c] sm:$0xf]
    %v2448 = vld [vmem:[#allocation11 + $0x150] sm:$0xff]
    %v2449 = vld [vmem:[#allocation11 + $0x158] sm:$0xff]
    %v2450 = vld [vmem:[#allocation11 + $0x160] sm:$0xff]
    %v2451 = vld [vmem:[#allocation11 + $0x168] sm:$0xf]
    %v2452 = vld [vmem:[#allocation11 + $0x16c] sm:$0xff]
    %v2453 = vld [vmem:[#allocation11 + $0x174] sm:$0xff]
    %v2454 = vld [vmem:[#allocation11 + $0x17c] sm:$0xff]
    %v2455 = vld [vmem:[#allocation11 + $0x184] sm:$0xf]
    %v2456 = vld [vmem:[#allocation11 + $0x188] sm:$0xff]
    %v2457 = vld [vmem:[#allocation11 + $0x190] sm:$0xff]
    %v2458 = vld [vmem:[#allocation11 + $0x198] sm:$0xff]
    %v2459 = vld [vmem:[#allocation11 + $0x1a0] sm:$0xf]
    %v2460 = vld [vmem:[#allocation11 + $0x1a4] sm:$0xff]
    %v2461 = vld [vmem:[#allocation11 + $0x1ac] sm:$0xff]
    %v2462 = vld [vmem:[#allocation11 + $0x1b4] sm:$0xff]
    %v2463 = vld [vmem:[#allocation11 + $0x1bc] sm:$0xf]
    %v2464 = vld [vmem:[#allocation11 + $0x1c0] sm:$0xff]
    %v2465 = vld [vmem:[#allocation11 + $0x1c8] sm:$0xff]
    %v2466 = vld [vmem:[#allocation11 + $0x1d0] sm:$0xff]
    %v2467 = vld [vmem:[#allocation11 + $0x1d8] sm:$0xf]
    %v2468 = vld [vmem:[#allocation11 + $0x1dc] sm:$0xff]
    %v2469 = vld [vmem:[#allocation11 + $0x1e4] sm:$0xff]
    %v2470 = vld [vmem:[#allocation11 + $0x1ec] sm:$0xff]
    %v2471 = vld [vmem:[#allocation11 + $0x1f4] sm:$0xf]
    %v2472 = vld [vmem:[#allocation11 + $0x1f8] sm:$0xff]
    %v2473 = vld [vmem:[#allocation11 + $0x200] sm:$0xff]
    %v2474 = vld [vmem:[#allocation11 + $0x208] sm:$0xff]
    %v2475 = vld [vmem:[#allocation11 + $0x210] sm:$0xf]
    %v2476 = vld [vmem:[#allocation11 + $0x214] sm:$0xff]
    %v2477 = vld [vmem:[#allocation11 + $0x21c] sm:$0xff]
    %v2478 = vld [vmem:[#allocation11 + $0x224] sm:$0xff]
    %v2479 = vld [vmem:[#allocation11 + $0x22c] sm:$0xf]
    %v2480 = vld [vmem:[#allocation11 + $0x230] sm:$0xff]
    %v2481 = vld [vmem:[#allocation11 + $0x238] sm:$0xff]
    %v2482 = vld [vmem:[#allocation11 + $0x240] sm:$0xff]
    %v2483 = vld [vmem:[#allocation11 + $0x248] sm:$0xf]
    %v2484 = vld [vmem:[#allocation11 + $0x24c] sm:$0xff]
    %v2485 = vld [vmem:[#allocation11 + $0x254] sm:$0xff]
    %v2486 = vld [vmem:[#allocation11 + $0x25c] sm:$0xff]
    %v2487 = vld [vmem:[#allocation11 + $0x264] sm:$0xf]
    %v2488 = vld [vmem:[#allocation11 + $0x268] sm:$0xff]
    %v2489 = vld [vmem:[#allocation11 + $0x270] sm:$0xff]
    %v2490 = vld [vmem:[#allocation11 + $0x278] sm:$0xff]
    %v2491 = vld [vmem:[#allocation11 + $0x280] sm:$0xf]
    %v2492 = vld [vmem:[#allocation11 + $0x284] sm:$0xff]
    %v2493 = vld [vmem:[#allocation11 + $0x28c] sm:$0xff]
    %v2494 = vld [vmem:[#allocation11 + $0x294] sm:$0xff]
    %v2495 = vld [vmem:[#allocation11 + $0x29c] sm:$0xf]
    %v2496 = vld [vmem:[#allocation11 + $0x2a0] sm:$0xff]
    %v2497 = vld [vmem:[#allocation11 + $0x2a8] sm:$0xff]
    %v2498 = vld [vmem:[#allocation11 + $0x2b0] sm:$0xff]
    %v2499 = vld [vmem:[#allocation11 + $0x2b8] sm:$0xf]
    %v2500 = vld [vmem:[#allocation11 + $0x2bc] sm:$0xff]
    %v2501 = vld [vmem:[#allocation11 + $0x2c4] sm:$0xff]
    %v2502 = vld [vmem:[#allocation11 + $0x2cc] sm:$0xff]
    %v2503 = vld [vmem:[#allocation11 + $0x2d4] sm:$0xf]
    %v2504 = vld [vmem:[#allocation11 + $0x2d8] sm:$0xff]
    %v2505 = vld [vmem:[#allocation11 + $0x2e0] sm:$0xff]
    %v2506 = vld [vmem:[#allocation11 + $0x2e8] sm:$0xff]
    %v2507 = vld [vmem:[#allocation11 + $0x2f0] sm:$0xf]
    %v2508 = vld [vmem:[#allocation11 + $0x2f4] sm:$0xff]
    %v2509 = vld [vmem:[#allocation11 + $0x2fc] sm:$0xff]
    %v2510 = vld [vmem:[#allocation11 + $0x304] sm:$0xff]
    %v2511 = vld [vmem:[#allocation11 + $0x30c] sm:$0xf]
    %v2512 = vld [vmem:[#allocation11 + $0x310] sm:$0xff]
    %v2513 = vld [vmem:[#allocation11 + $0x318] sm:$0xff]
    %v2514 = vld [vmem:[#allocation11 + $0x320] sm:$0xff]
    %v2515 = vld [vmem:[#allocation11 + $0x328] sm:$0xf]
    %v2516 = vld [vmem:[#allocation11 + $0x32c] sm:$0xff]
    %v2517 = vld [vmem:[#allocation11 + $0x334] sm:$0xff]
    %v2518 = vld [vmem:[#allocation11 + $0x33c] sm:$0xff]
    %v2519 = vld [vmem:[#allocation11 + $0x344] sm:$0xf]
    %v2520 = vld [vmem:[#allocation11 + $0x348] sm:$0xff]
    %v2521 = vld [vmem:[#allocation11 + $0x350] sm:$0xff]
    %v2522 = vld [vmem:[#allocation11 + $0x358] sm:$0xff]
    %v2523 = vld [vmem:[#allocation11 + $0x360] sm:$0xf]
    %v2524 = vld [vmem:[#allocation11 + $0x364] sm:$0xff]
    %v2525 = vld [vmem:[#allocation11 + $0x36c] sm:$0xff]
    %v2526 = vld [vmem:[#allocation11 + $0x374] sm:$0xff]
    %v2527 = vld [vmem:[#allocation11 + $0x37c] sm:$0xf]
    %v2528 = vld [vmem:[#allocation11 + $0x380] sm:$0xff]
    %v2529 = vld [vmem:[#allocation11 + $0x388] sm:$0xff]
    %v2530 = vld [vmem:[#allocation11 + $0x390] sm:$0xff]
    %v2531 = vld [vmem:[#allocation11 + $0x398] sm:$0xf]
    %v2532 = vld [vmem:[#allocation11 + $0x39c] sm:$0xff]
    %v2533 = vld [vmem:[#allocation11 + $0x3a4] sm:$0xff]
    %v2534 = vld [vmem:[#allocation11 + $0x3ac] sm:$0xff]
    %v2535 = vld [vmem:[#allocation11 + $0x3b4] sm:$0xf]
    %v2536 = vld [vmem:[#allocation11 + $0x3b8] sm:$0xff]
    %v2537 = vld [vmem:[#allocation11 + $0x3c0] sm:$0xff]
    %v2538 = vld [vmem:[#allocation11 + $0x3c8] sm:$0xff]
    %v2539 = vld [vmem:[#allocation11 + $0x3d0] sm:$0xf]
    %v2540 = vld [vmem:[#allocation11 + $0x3d4] sm:$0xff]
    %v2541 = vld [vmem:[#allocation11 + $0x3dc] sm:$0xff]
    %v2542 = vld [vmem:[#allocation11 + $0x3e4] sm:$0xff]
    %v2543 = vld [vmem:[#allocation11 + $0x3ec] sm:$0xf]
    %v2544 = vld [vmem:[#allocation11 + $0x3f0] sm:$0xff]
    %v2545 = vld [vmem:[#allocation11 + $0x3f8] sm:$0xff]
    %v2546 = vld [vmem:[#allocation11 + $0x400] sm:$0xff]
    %v2547 = vld [vmem:[#allocation11 + $0x408] sm:$0xf]
    %v2548 = vld [vmem:[#allocation11 + $0x40c] sm:$0xff]
    %v2549 = vld [vmem:[#allocation11 + $0x414] sm:$0xff]
    %v2550 = vld [vmem:[#allocation11 + $0x41c] sm:$0xff]
    %v2551 = vld [vmem:[#allocation11 + $0x424] sm:$0xf]
    %v2552 = vld [vmem:[#allocation11 + $0x428] sm:$0xff]
    %v2553 = vld [vmem:[#allocation11 + $0x430] sm:$0xff]
    %v2554 = vld [vmem:[#allocation11 + $0x438] sm:$0xff]
    %v2555 = vld [vmem:[#allocation11 + $0x440] sm:$0xf]
    %v2556 = vld [vmem:[#allocation11 + $0x444] sm:$0xff]
    %v2557 = vld [vmem:[#allocation11 + $0x44c] sm:$0xff]
    %v2558 = vld [vmem:[#allocation11 + $0x454] sm:$0xff]
    %v2559 = vld [vmem:[#allocation11 + $0x45c] sm:$0xf]
    %v2560 = vld [vmem:[#allocation11 + $0x460] sm:$0xff]
    %v2561 = vld [vmem:[#allocation11 + $0x468] sm:$0xff]
    %v2562 = vld [vmem:[#allocation11 + $0x470] sm:$0xff]
    %v2563 = vld [vmem:[#allocation11 + $0x478] sm:$0xf]
    %v2564 = vld [vmem:[#allocation11 + $0x47c] sm:$0xff]
    %v2565 = vld [vmem:[#allocation11 + $0x484] sm:$0xff]
    %v2566 = vld [vmem:[#allocation11 + $0x48c] sm:$0xff]
    %v2567 = vld [vmem:[#allocation11 + $0x494] sm:$0xf]
    %v2568 = vld [vmem:[#allocation11 + $0x498] sm:$0xff]
    %v2569 = vld [vmem:[#allocation11 + $0x4a0] sm:$0xff]
    %v2570 = vld [vmem:[#allocation11 + $0x4a8] sm:$0xff]
    %v2571 = vld [vmem:[#allocation11 + $0x4b0] sm:$0xf]
    %v2572 = vld [vmem:[#allocation11 + $0x4b4] sm:$0xff]
    %v2573 = vld [vmem:[#allocation11 + $0x4bc] sm:$0xff]
    %v2574 = vld [vmem:[#allocation11 + $0x4c4] sm:$0xff]
    %v2575 = vld [vmem:[#allocation11 + $0x4cc] sm:$0xf]
    %v2576 = vld [vmem:[#allocation11 + $0x4d0] sm:$0xff]
    %v2577 = vld [vmem:[#allocation11 + $0x4d8] sm:$0xff]
    %v2578 = vld [vmem:[#allocation11 + $0x4e0] sm:$0xff]
    %v2579 = vld [vmem:[#allocation11 + $0x4e8] sm:$0xf]
    %v2580 = vld [vmem:[#allocation11 + $0x4ec] sm:$0xff]
    %v2581 = vld [vmem:[#allocation11 + $0x4f4] sm:$0xff]
    %v2582 = vld [vmem:[#allocation11 + $0x4fc] sm:$0xff]
    %v2583 = vld [vmem:[#allocation11 + $0x504] sm:$0xf]
    %v2584 = vld [vmem:[#allocation11 + $0x508] sm:$0xff]
    %v2585 = vld [vmem:[#allocation11 + $0x510] sm:$0xff]
    %v2586 = vld [vmem:[#allocation11 + $0x518] sm:$0xff]
    %v2587 = vld [vmem:[#allocation11 + $0x520] sm:$0xf]
    %v2588 = vld [vmem:[#allocation11 + $0x524] sm:$0xff]
    %v2589 = vld [vmem:[#allocation11 + $0x52c] sm:$0xff]
    %v2590 = vld [vmem:[#allocation11 + $0x534] sm:$0xff]
    %v2591 = vld [vmem:[#allocation11 + $0x53c] sm:$0xf]
    %v2592 = vld [vmem:[#allocation11 + $0x540] sm:$0xff]
    %v2593 = vld [vmem:[#allocation11 + $0x548] sm:$0xff]
    %v2594 = vld [vmem:[#allocation11 + $0x550] sm:$0xff]
    %v2595 = vld [vmem:[#allocation11 + $0x558] sm:$0xf]
    %v2596 = vld [vmem:[#allocation11 + $0x55c] sm:$0xff]
    %v2597 = vld [vmem:[#allocation11 + $0x564] sm:$0xff]
    %v2598 = vld [vmem:[#allocation11 + $0x56c] sm:$0xff]
    %v2599 = vld [vmem:[#allocation11 + $0x574] sm:$0xf]
    %v2600 = vld [vmem:[#allocation11 + $0x578] sm:$0xff]
    %v2601 = vld [vmem:[#allocation11 + $0x580] sm:$0xff]
    %v2602 = vld [vmem:[#allocation11 + $0x588] sm:$0xff]
    %v2603 = vld [vmem:[#allocation11 + $0x590] sm:$0xf]
    %v2604 = vld [vmem:[#allocation11 + $0x594] sm:$0xff]
    %v2605 = vld [vmem:[#allocation11 + $0x59c] sm:$0xff]
    %v2606 = vld [vmem:[#allocation11 + $0x5a4] sm:$0xff]
    %v2607 = vld [vmem:[#allocation11 + $0x5ac] sm:$0xf]
    %v2608 = vld [vmem:[#allocation11 + $0x5b0] sm:$0xff]
    %v2609 = vld [vmem:[#allocation11 + $0x5b8] sm:$0xff]
    %v2610 = vld [vmem:[#allocation11 + $0x5c0] sm:$0xff]
    %v2611 = vld [vmem:[#allocation11 + $0x5c8] sm:$0xf]
    %v2612 = vld [vmem:[#allocation11 + $0x5cc] sm:$0xff]
    %v2613 = vld [vmem:[#allocation11 + $0x5d4] sm:$0xff]
    %v2614 = vld [vmem:[#allocation11 + $0x5dc] sm:$0xff]
    %v2615 = vld [vmem:[#allocation11 + $0x5e4] sm:$0xf]
    %v2616 = vld [vmem:[#allocation11 + $0x5e8] sm:$0xff]
    %v2617 = vld [vmem:[#allocation11 + $0x5f0] sm:$0xff]
    %v2618 = vld [vmem:[#allocation11 + $0x5f8] sm:$0xff]
    %v2619 = vld [vmem:[#allocation11 + $0x600] sm:$0xf]
    %v2620 = vld [vmem:[#allocation11 + $0x604] sm:$0xff]
    %v2621 = vld [vmem:[#allocation11 + $0x60c] sm:$0xff]
    %v2622 = vld [vmem:[#allocation11 + $0x614] sm:$0xff]
    %v2623 = vld [vmem:[#allocation11 + $0x61c] sm:$0xf]
    %v2624 = vld [vmem:[#allocation11 + $0x620] sm:$0xff]
    %v2625 = vld [vmem:[#allocation11 + $0x628] sm:$0xff]
    %v2626 = vld [vmem:[#allocation11 + $0x630] sm:$0xff]
    %v2627 = vld [vmem:[#allocation11 + $0x638] sm:$0xf]
    %v2628 = vld [vmem:[#allocation11 + $0x63c] sm:$0xff]
    %v2629 = vld [vmem:[#allocation11 + $0x644] sm:$0xff]
    %v2630 = vld [vmem:[#allocation11 + $0x64c] sm:$0xff]
    %v2631 = vld [vmem:[#allocation11 + $0x654] sm:$0xf]
    %v2632 = vld [vmem:[#allocation11 + $0x658] sm:$0xff]
    %v2633 = vld [vmem:[#allocation11 + $0x660] sm:$0xff]
    %v2634 = vld [vmem:[#allocation11 + $0x668] sm:$0xff]
    %v2635 = vld [vmem:[#allocation11 + $0x670] sm:$0xf]
    %v2636 = vld [vmem:[#allocation11 + $0x674] sm:$0xff]
    %v2637 = vld [vmem:[#allocation11 + $0x67c] sm:$0xff]
    %v2638 = vld [vmem:[#allocation11 + $0x684] sm:$0xff]
    %v2639 = vld [vmem:[#allocation11 + $0x68c] sm:$0xf]
    %v2640 = vld [vmem:[#allocation11 + $0x690] sm:$0xff]
    %v2641 = vld [vmem:[#allocation11 + $0x698] sm:$0xff]
    %v2642 = vld [vmem:[#allocation11 + $0x6a0] sm:$0xff]
    %v2643 = vld [vmem:[#allocation11 + $0x6a8] sm:$0xf]
    %v2644 = vld [vmem:[#allocation11 + $0x6ac] sm:$0xff]
    %v2645 = vld [vmem:[#allocation11 + $0x6b4] sm:$0xff]
    %v2646 = vld [vmem:[#allocation11 + $0x6bc] sm:$0xff]
    %v2647 = vld [vmem:[#allocation11 + $0x6c4] sm:$0xf]
    %v2648 = vld [vmem:[#allocation11 + $0x6c8] sm:$0xff]
    %v2649 = vld [vmem:[#allocation11 + $0x6d0] sm:$0xff]
    %v2650 = vld [vmem:[#allocation11 + $0x6d8] sm:$0xff]
    %v2651 = vld [vmem:[#allocation11 + $0x6e0] sm:$0xf]
    %v2652 = vld [vmem:[#allocation11 + $0x6e4] sm:$0xff]
    %v2653 = vld [vmem:[#allocation11 + $0x6ec] sm:$0xff]
    %v2654 = vld [vmem:[#allocation11 + $0x6f4] sm:$0xff]
    %v2655 = vld [vmem:[#allocation11 + $0x6fc] sm:$0xf]
    %v2656 = vld [vmem:[#allocation11 + $0x700] sm:$0xff]
    %v2657 = vld [vmem:[#allocation11 + $0x708] sm:$0xff]
    %v2658 = vld [vmem:[#allocation11 + $0x710] sm:$0xff]
    %v2659 = vld [vmem:[#allocation11 + $0x718] sm:$0xf]
    %v2660 = vld [vmem:[#allocation11 + $0x71c] sm:$0xff]
    %v2661 = vld [vmem:[#allocation11 + $0x724] sm:$0xff]
    %v2662 = vld [vmem:[#allocation11 + $0x72c] sm:$0xff]
    %v2663 = vld [vmem:[#allocation11 + $0x734] sm:$0xf]
    %v2664 = vld [vmem:[#allocation11 + $0x738] sm:$0xff]
    %v2665 = vld [vmem:[#allocation11 + $0x740] sm:$0xff]
    %v2666 = vld [vmem:[#allocation11 + $0x748] sm:$0xff]
    %v2667 = vld [vmem:[#allocation11 + $0x750] sm:$0xf]
    %v2668 = vld [vmem:[#allocation11 + $0x754] sm:$0xff]
    %v2669 = vld [vmem:[#allocation11 + $0x75c] sm:$0xff]
    %v2670 = vld [vmem:[#allocation11 + $0x764] sm:$0xff]
    %v2671 = vld [vmem:[#allocation11 + $0x76c] sm:$0xf]
    %v2672 = vld [vmem:[#allocation11 + $0x770] sm:$0xff]
    %v2673 = vld [vmem:[#allocation11 + $0x778] sm:$0xff]
    %v2674 = vld [vmem:[#allocation11 + $0x780] sm:$0xff]
    %v2675 = vld [vmem:[#allocation11 + $0x788] sm:$0xf]
    %v2676 = vld [vmem:[#allocation11 + $0x78c] sm:$0xff]
    %v2677 = vld [vmem:[#allocation11 + $0x794] sm:$0xff]
    %v2678 = vld [vmem:[#allocation11 + $0x79c] sm:$0xff]
    %v2679 = vld [vmem:[#allocation11 + $0x7a4] sm:$0xf]
    %v2680 = vld [vmem:[#allocation11 + $0x7a8] sm:$0xff]
    %v2681 = vld [vmem:[#allocation11 + $0x7b0] sm:$0xff]
    %v2682 = vld [vmem:[#allocation11 + $0x7b8] sm:$0xff]
    %v2683 = vld [vmem:[#allocation11 + $0x7c0] sm:$0xf]
    %v2684 = vld [vmem:[#allocation11 + $0x7c4] sm:$0xff]
    %v2685 = vld [vmem:[#allocation11 + $0x7cc] sm:$0xff]
    %v2686 = vld [vmem:[#allocation11 + $0x7d4] sm:$0xff]
    %v2687 = vld [vmem:[#allocation11 + $0x7dc] sm:$0xf]
    %v2688 = vld [vmem:[#allocation11 + $0x7e0] sm:$0xff]
    %v2689 = vld [vmem:[#allocation11 + $0x7e8] sm:$0xff]
    %v2690 = vld [vmem:[#allocation11 + $0x7f0] sm:$0xff]
    %v2691 = vld [vmem:[#allocation11 + $0x7f8] sm:$0xf]
    %v2692 = vld [vmem:[#allocation11 + $0x7fc] sm:$0xff]
    %v2693 = vld [vmem:[#allocation11 + $0x804] sm:$0xff]
    %v2694 = vld [vmem:[#allocation11 + $0x80c] sm:$0xff]
    %v2695 = vld [vmem:[#allocation11 + $0x814] sm:$0xf]
    %v2696 = vld [vmem:[#allocation11 + $0x818] sm:$0xff]
    %v2697 = vld [vmem:[#allocation11 + $0x820] sm:$0xff]
    %v2698 = vld [vmem:[#allocation11 + $0x828] sm:$0xff]
    %v2699 = vld [vmem:[#allocation11 + $0x830] sm:$0xf]
    %v2700 = vld [vmem:[#allocation11 + $0x834] sm:$0xff]
    %v2701 = vld [vmem:[#allocation11 + $0x83c] sm:$0xff]
    %v2702 = vld [vmem:[#allocation11 + $0x844] sm:$0xff]
    %v2703 = vld [vmem:[#allocation11 + $0x84c] sm:$0xf]
    %v2704 = vld [vmem:[#allocation11 + $0x850] sm:$0xff]
    %v2705 = vld [vmem:[#allocation11 + $0x858] sm:$0xff]
    %v2706 = vld [vmem:[#allocation11 + $0x860] sm:$0xff]
    %v2707 = vld [vmem:[#allocation11 + $0x868] sm:$0xf]
    %v2708 = vld [vmem:[#allocation11 + $0x86c] sm:$0xff]
    %v2709 = vld [vmem:[#allocation11 + $0x874] sm:$0xff]
    %v2710 = vld [vmem:[#allocation11 + $0x87c] sm:$0xff]
    %v2711 = vld [vmem:[#allocation11 + $0x884] sm:$0xf]
    %v2712 = vld [vmem:[#allocation11 + $0x888] sm:$0xff]
    %v2713 = vld [vmem:[#allocation11 + $0x890] sm:$0xff]
    %v2714 = vld [vmem:[#allocation11 + $0x898] sm:$0xff]
    %v2715 = vld [vmem:[#allocation11 + $0x8a0] sm:$0xf]
    %v2716 = vld [vmem:[#allocation11 + $0x8a4] sm:$0xff]
    %v2717 = vld [vmem:[#allocation11 + $0x8ac] sm:$0xff]
    %v2718 = vld [vmem:[#allocation11 + $0x8b4] sm:$0xff]
    %v2719 = vld [vmem:[#allocation11 + $0x8bc] sm:$0xf]
    %v2720 = vld [vmem:[#allocation11 + $0x8c0] sm:$0xff]
    %v2721 = vld [vmem:[#allocation11 + $0x8c8] sm:$0xff]
    %v2722 = vld [vmem:[#allocation11 + $0x8d0] sm:$0xff]
    %v2723 = vld [vmem:[#allocation11 + $0x8d8] sm:$0xf]
    %v2724 = vld [vmem:[#allocation11 + $0x8dc] sm:$0xff]
    %v2725 = vld [vmem:[#allocation11 + $0x8e4] sm:$0xff]
    %v2726 = vld [vmem:[#allocation11 + $0x8ec] sm:$0xff]
    %v2727 = vld [vmem:[#allocation11 + $0x8f4] sm:$0xf]
    %v2728 = vld [vmem:[#allocation11 + $0x8f8] sm:$0xff]
    %v2729 = vld [vmem:[#allocation11 + $0x900] sm:$0xff]
    %v2730 = vld [vmem:[#allocation11 + $0x908] sm:$0xff]
    %v2731 = vld [vmem:[#allocation11 + $0x910] sm:$0xf]
    %v2732 = vld [vmem:[#allocation11 + $0x914] sm:$0xff]
    %v2733 = vld [vmem:[#allocation11 + $0x91c] sm:$0xff]
    %v2734 = vld [vmem:[#allocation11 + $0x924] sm:$0xff]
    %v2735 = vld [vmem:[#allocation11 + $0x92c] sm:$0xf]
    %v2736 = vld [vmem:[#allocation11 + $0x930] sm:$0xff]
    %v2737 = vld [vmem:[#allocation11 + $0x938] sm:$0xff]
    %v2738 = vld [vmem:[#allocation11 + $0x940] sm:$0xff]
    %v2739 = vld [vmem:[#allocation11 + $0x948] sm:$0xf]
    %v2740 = vld [vmem:[#allocation11 + $0x94c] sm:$0xff]
    %v2741 = vld [vmem:[#allocation11 + $0x954] sm:$0xff]
    %v2742 = vld [vmem:[#allocation11 + $0x95c] sm:$0xff]
    %v2743 = vld [vmem:[#allocation11 + $0x964] sm:$0xf]
    %v2744 = vld [vmem:[#allocation11 + $0x968] sm:$0xff]
    %v2745 = vld [vmem:[#allocation11 + $0x970] sm:$0xff]
    %v2746 = vld [vmem:[#allocation11 + $0x978] sm:$0xff]
    %v2747 = vld [vmem:[#allocation11 + $0x980] sm:$0xf]
    %v2748 = vld [vmem:[#allocation11 + $0x984] sm:$0xff]
    %v2749 = vld [vmem:[#allocation11 + $0x98c] sm:$0xff]
    %v2750 = vld [vmem:[#allocation11 + $0x994] sm:$0xff]
    %v2751 = vld [vmem:[#allocation11 + $0x99c] sm:$0xf]
    %v2752 = vld [vmem:[#allocation11 + $0x9a0] sm:$0xff]
    %v2753 = vld [vmem:[#allocation11 + $0x9a8] sm:$0xff]
    %v2754 = vld [vmem:[#allocation11 + $0x9b0] sm:$0xff]
    %v2755 = vld [vmem:[#allocation11 + $0x9b8] sm:$0xf]
    %v2756 = vld [vmem:[#allocation11 + $0x9bc] sm:$0xff]
    %v2757 = vld [vmem:[#allocation11 + $0x9c4] sm:$0xff]
    %v2758 = vld [vmem:[#allocation11 + $0x9cc] sm:$0xff]
    %v2759 = vld [vmem:[#allocation11 + $0x9d4] sm:$0xf]
    %v2760 = vld [vmem:[#allocation11 + $0x9d8] sm:$0xff]
    %v2761 = vld [vmem:[#allocation11 + $0x9e0] sm:$0xff]
    %v2762 = vld [vmem:[#allocation11 + $0x9e8] sm:$0xff]
    %v2763 = vld [vmem:[#allocation11 + $0x9f0] sm:$0xf]
    %v2764 = vld [vmem:[#allocation11 + $0x9f4] sm:$0xff]
    %v2765 = vld [vmem:[#allocation11 + $0x9fc] sm:$0xff]
    %v2766 = vld [vmem:[#allocation11 + $0xa04] sm:$0xff]
    %v2767 = vld [vmem:[#allocation11 + $0xa0c] sm:$0xf]
    %v2768 = vld [vmem:[#allocation11 + $0xa10] sm:$0xff]
    %v2769 = vld [vmem:[#allocation11 + $0xa18] sm:$0xff]
    %v2770 = vld [vmem:[#allocation11 + $0xa20] sm:$0xff]
    %v2771 = vld [vmem:[#allocation11 + $0xa28] sm:$0xf]
    %v2772 = vld [vmem:[#allocation11 + $0xa2c] sm:$0xff]
    %v2773 = vld [vmem:[#allocation11 + $0xa34] sm:$0xff]
    %v2774 = vld [vmem:[#allocation11 + $0xa3c] sm:$0xff]
    %v2775 = vld [vmem:[#allocation11 + $0xa44] sm:$0xf]
    %v2776 = vld [vmem:[#allocation11 + $0xa48] sm:$0xff]
    %v2777 = vld [vmem:[#allocation11 + $0xa50] sm:$0xff]
    %v2778 = vld [vmem:[#allocation11 + $0xa58] sm:$0xff]
    %v2779 = vld [vmem:[#allocation11 + $0xa60] sm:$0xf]
    %v2780 = vld [vmem:[#allocation11 + $0xa64] sm:$0xff]
    %v2781 = vld [vmem:[#allocation11 + $0xa6c] sm:$0xff]
    %v2782 = vld [vmem:[#allocation11 + $0xa74] sm:$0xff]
    %v2783 = vld [vmem:[#allocation11 + $0xa7c] sm:$0xf]
    %v2784 = vld [vmem:[#allocation11 + $0xa80] sm:$0xff]
    %v2785 = vld [vmem:[#allocation11 + $0xa88] sm:$0xff]
    %v2786 = vld [vmem:[#allocation11 + $0xa90] sm:$0xff]
    %v2787 = vld [vmem:[#allocation11 + $0xa98] sm:$0xf]
    %v2788 = vld [vmem:[#allocation11 + $0xa9c] sm:$0xff]
    %v2789 = vld [vmem:[#allocation11 + $0xaa4] sm:$0xff]
    %v2790 = vld [vmem:[#allocation11 + $0xaac] sm:$0xff]
    %v2791 = vld [vmem:[#allocation11 + $0xab4] sm:$0xf]
    %v2792 = vld [vmem:[#allocation11 + $0xab8] sm:$0xff]
    %v2793 = vld [vmem:[#allocation11 + $0xac0] sm:$0xff]
    %v2794 = vld [vmem:[#allocation11 + $0xac8] sm:$0xff]
    %v2795 = vld [vmem:[#allocation11 + $0xad0] sm:$0xf]
    %v2796 = vld [vmem:[#allocation11 + $0xad4] sm:$0xff]
    %v2797 = vld [vmem:[#allocation11 + $0xadc] sm:$0xff]
    %v2798 = vld [vmem:[#allocation11 + $0xae4] sm:$0xff]
    %v2799 = vld [vmem:[#allocation11 + $0xaec] sm:$0xf]
    %v2800 = vld [vmem:[#allocation11 + $0xaf0] sm:$0xff]
    %v2801 = vld [vmem:[#allocation11 + $0xaf8] sm:$0xff]
    %v2802 = vld [vmem:[#allocation11 + $0xb00] sm:$0xff]
    %v2803 = vld [vmem:[#allocation11 + $0xb08] sm:$0xf]
    %v2804 = vld [vmem:[#allocation11 + $0xb0c] sm:$0xff]
    %v2805 = vld [vmem:[#allocation11 + $0xb14] sm:$0xff]
    %v2806 = vld [vmem:[#allocation11 + $0xb1c] sm:$0xff]
    %v2807 = vld [vmem:[#allocation11 + $0xb24] sm:$0xf]
    %v2808 = vld [vmem:[#allocation11 + $0xb28] sm:$0xff]
    %v2809 = vld [vmem:[#allocation11 + $0xb30] sm:$0xff]
    %v2810 = vld [vmem:[#allocation11 + $0xb38] sm:$0xff]
    %v2811 = vld [vmem:[#allocation11 + $0xb40] sm:$0xf]
    %v2812 = vld [vmem:[#allocation11 + $0xb44] sm:$0xff]
    %v2813 = vld [vmem:[#allocation11 + $0xb4c] sm:$0xff]
    %v2814 = vld [vmem:[#allocation11 + $0xb54] sm:$0xff]
    %v2815 = vld [vmem:[#allocation11 + $0xb5c] sm:$0xf]
    %v2816 = vld [vmem:[#allocation11 + $0xb60] sm:$0xff]
    %v2817 = vld [vmem:[#allocation11 + $0xb68] sm:$0xff]
    %v2818 = vld [vmem:[#allocation11 + $0xb70] sm:$0xff]
    %v2819 = vld [vmem:[#allocation11 + $0xb78] sm:$0xf]
    %v2820 = vld [vmem:[#allocation11 + $0xb7c] sm:$0xff]
    %v2821 = vld [vmem:[#allocation11 + $0xb84] sm:$0xff]
    %v2822 = vld [vmem:[#allocation11 + $0xb8c] sm:$0xff]
    %v2823 = vld [vmem:[#allocation11 + $0xb94] sm:$0xf]
    %v2824 = vld [vmem:[#allocation11 + $0xb98] sm:$0xff]
    %v2825 = vld [vmem:[#allocation11 + $0xba0] sm:$0xff]
    %v2826 = vld [vmem:[#allocation11 + $0xba8] sm:$0xff]
    %v2827 = vld [vmem:[#allocation11 + $0xbb0] sm:$0xf]
    %v2828 = vld [vmem:[#allocation11 + $0xbb4] sm:$0xff]
    %v2829 = vld [vmem:[#allocation11 + $0xbbc] sm:$0xff]
    %v2830 = vld [vmem:[#allocation11 + $0xbc4] sm:$0xff]
    %v2831 = vld [vmem:[#allocation11 + $0xbcc] sm:$0xf]
    %v2832 = vld [vmem:[#allocation11 + $0xbd0] sm:$0xff]
    %v2833 = vld [vmem:[#allocation11 + $0xbd8] sm:$0xff]
    %v2834 = vld [vmem:[#allocation11 + $0xbe0] sm:$0xff]
    %v2835 = vld [vmem:[#allocation11 + $0xbe8] sm:$0xf]
    %v2836 = vld [vmem:[#allocation11 + $0xbec] sm:$0xff]
    %v2837 = vld [vmem:[#allocation11 + $0xbf4] sm:$0xff]
    %v2838 = vld [vmem:[#allocation11 + $0xbfc] sm:$0xff]
    %v2839 = vld [vmem:[#allocation11 + $0xc04] sm:$0xf]
    %v2840 = vld [vmem:[#allocation11 + $0xc08] sm:$0xff]
    %v2841 = vld [vmem:[#allocation11 + $0xc10] sm:$0xff]
    %v2842 = vld [vmem:[#allocation11 + $0xc18] sm:$0xff]
    %v2843 = vld [vmem:[#allocation11 + $0xc20] sm:$0xf]
    %v2844 = vld [vmem:[#allocation11 + $0xc24] sm:$0xff]
    %v2845 = vld [vmem:[#allocation11 + $0xc2c] sm:$0xff]
    %v2846 = vld [vmem:[#allocation11 + $0xc34] sm:$0xff]
    %v2847 = vld [vmem:[#allocation11 + $0xc3c] sm:$0xf]
    %v2848 = vld [vmem:[#allocation11 + $0xc40] sm:$0xff]
    %v2849 = vld [vmem:[#allocation11 + $0xc48] sm:$0xff]
    %v2850 = vld [vmem:[#allocation11 + $0xc50] sm:$0xff]
    %v2851 = vld [vmem:[#allocation11 + $0xc58] sm:$0xf]
    %v2852 = vld [vmem:[#allocation11 + $0xc5c] sm:$0xff]
    %v2853 = vld [vmem:[#allocation11 + $0xc64] sm:$0xff]
    %v2854 = vld [vmem:[#allocation11 + $0xc6c] sm:$0xff]
    %v2855 = vld [vmem:[#allocation11 + $0xc74] sm:$0xf]
    %v2856 = vld [vmem:[#allocation11 + $0xc78] sm:$0xff]
    %v2857 = vld [vmem:[#allocation11 + $0xc80] sm:$0xff]
    %v2858 = vld [vmem:[#allocation11 + $0xc88] sm:$0xff]
    %v2859 = vld [vmem:[#allocation11 + $0xc90] sm:$0xf]
    %v2860 = vld [vmem:[#allocation11 + $0xc94] sm:$0xff]
    %v2861 = vld [vmem:[#allocation11 + $0xc9c] sm:$0xff]
    %v2862 = vld [vmem:[#allocation11 + $0xca4] sm:$0xff]
    %v2863 = vld [vmem:[#allocation11 + $0xcac] sm:$0xf]
    %v2864 = vld [vmem:[#allocation11 + $0xcb0] sm:$0xff]
    %v2865 = vld [vmem:[#allocation11 + $0xcb8] sm:$0xff]
    %v2866 = vld [vmem:[#allocation11 + $0xcc0] sm:$0xff]
    %v2867 = vld [vmem:[#allocation11 + $0xcc8] sm:$0xf]
    %v2868 = vld [vmem:[#allocation11 + $0xccc] sm:$0xff]
    %v2869 = vld [vmem:[#allocation11 + $0xcd4] sm:$0xff]
    %v2870 = vld [vmem:[#allocation11 + $0xcdc] sm:$0xff]
    %v2871 = vld [vmem:[#allocation11 + $0xce4] sm:$0xf]
    %v2872 = vld [vmem:[#allocation11 + $0xce8] sm:$0xff]
    %v2873 = vld [vmem:[#allocation11 + $0xcf0] sm:$0xff]
    %v2874 = vld [vmem:[#allocation11 + $0xcf8] sm:$0xff]
    %v2875 = vld [vmem:[#allocation11 + $0xd00] sm:$0xf]
    %v2876 = vld [vmem:[#allocation11 + $0xd04] sm:$0xff]
    %v2877 = vld [vmem:[#allocation11 + $0xd0c] sm:$0xff]
    %v2878 = vld [vmem:[#allocation11 + $0xd14] sm:$0xff]
    %v2879 = vld [vmem:[#allocation11 + $0xd1c] sm:$0xf]
    %v2880 = vld [vmem:[#allocation11 + $0xd20] sm:$0xff]
    %v2881 = vld [vmem:[#allocation11 + $0xd28] sm:$0xff]
    %v2882 = vld [vmem:[#allocation11 + $0xd30] sm:$0xff]
    %v2883 = vld [vmem:[#allocation11 + $0xd38] sm:$0xf]
    %v2884 = vld [vmem:[#allocation11 + $0xd3c] sm:$0xff]
    %v2885 = vld [vmem:[#allocation11 + $0xd44] sm:$0xff]
    %v2886 = vld [vmem:[#allocation11 + $0xd4c] sm:$0xff]
    %v2887 = vld [vmem:[#allocation11 + $0xd54] sm:$0xf]
    %v2888 = vld [vmem:[#allocation11 + $0xd58] sm:$0xff]
    %v2889 = vld [vmem:[#allocation11 + $0xd60] sm:$0xff]
    %v2890 = vld [vmem:[#allocation11 + $0xd68] sm:$0xff]
    %v2891 = vld [vmem:[#allocation11 + $0xd70] sm:$0xf]
    %v2892 = vld [vmem:[#allocation11 + $0xd74] sm:$0xff]
    %v2893 = vld [vmem:[#allocation11 + $0xd7c] sm:$0xff]
    %v2894 = vld [vmem:[#allocation11 + $0xd84] sm:$0xff]
    %v2895 = vld [vmem:[#allocation11 + $0xd8c] sm:$0xf]
    %v2896 = vld [vmem:[#allocation11 + $0xd90] sm:$0xff]
    %v2897 = vld [vmem:[#allocation11 + $0xd98] sm:$0xff]
    %v2898 = vld [vmem:[#allocation11 + $0xda0] sm:$0xff]
    %v2899 = vld [vmem:[#allocation11 + $0xda8] sm:$0xf]
    %v2900 = vld [vmem:[#allocation11 + $0xdac] sm:$0xff]
    %v2901 = vld [vmem:[#allocation11 + $0xdb4] sm:$0xff]
    %v2902 = vld [vmem:[#allocation11 + $0xdbc] sm:$0xff]
    %v2903 = vld [vmem:[#allocation11 + $0xdc4] sm:$0xf]
    %v2904 = vld [vmem:[#allocation11 + $0xdc8] sm:$0xff]
    %v2905 = vld [vmem:[#allocation11 + $0xdd0] sm:$0xff]
    %v2906 = vld [vmem:[#allocation11 + $0xdd8] sm:$0xff]
    %v2907 = vld [vmem:[#allocation11 + $0xde0] sm:$0xf]
    %v2908 = vld [vmem:[#allocation11 + $0xde4] sm:$0xff]
    %v2909 = vld [vmem:[#allocation11 + $0xdec] sm:$0xff]
    %v2910 = vld [vmem:[#allocation11 + $0xdf4] sm:$0xff]
    %v2911 = vld [vmem:[#allocation11 + $0xdfc] sm:$0xf]
    %v2912 = vld [vmem:[#allocation13] sm:$0xff]
    %v2914 = vlaneseq
    %v2915 = vshrl.u32 %v2914, 7
    %v2916 = vsub.s32 0, %v2915
    %v2917 = vrot.slane %v2912, %v2916
    %v2918 = vlaneseq
    %v2919 = vshrl.u32 %v2918, 7
    %v2920 = vsub.s32 1, %v2919
    %v2921 = vrot.slane %v2912, %v2920
    %v2922 = vlaneseq
    %v2923 = vshrl.u32 %v2922, 7
    %v2924 = vsub.s32 2, %v2923
    %v2925 = vrot.slane %v2912, %v2924
    %v2926 = vlaneseq
    %v2927 = vshrl.u32 %v2926, 7
    %v2928 = vsub.s32 3, %v2927
    %v2929 = vrot.slane %v2912, %v2928
    %v2930 = vlaneseq
    %v2931 = vshrl.u32 %v2930, 7
    %v2932 = vsub.s32 4, %v2931
    %v2933 = vrot.slane %v2912, %v2932
    %v2934 = vlaneseq
    %v2935 = vshrl.u32 %v2934, 7
    %v2936 = vsub.s32 5, %v2935
    %v2937 = vrot.slane %v2912, %v2936
    %v2938 = vlaneseq
    %v2939 = vshrl.u32 %v2938, 7
    %v2940 = vsub.s32 6, %v2939
    %v2941 = vrot.slane %v2912, %v2940
    %v3461 = vunpack.c.l.b16 %v2400
    %v3462 = vunpack.c.h.b16 %v2400
    %v3463 = vunpack.c.l.b16 %v2401
    %v3464 = vunpack.c.h.b16 %v2401
    %v3465 = vunpack.c.l.b16 %v2402
    %v3466 = vunpack.c.h.b16 %v2402
    %v3467 = vunpack.c.l.b16 %v2403
    %v3468 = vunpack.c.l.b16 %v2404
    %v3469 = vunpack.c.h.b16 %v2404
    %v3470 = vunpack.c.l.b16 %v2405
    %v3471 = vunpack.c.h.b16 %v2405
    %v3472 = vunpack.c.l.b16 %v2406
    %v3473 = vunpack.c.h.b16 %v2406
    %v3474 = vunpack.c.l.b16 %v2407
    %v3475 = vunpack.c.l.b16 %v2408
    %v3476 = vunpack.c.h.b16 %v2408
    %v3477 = vunpack.c.l.b16 %v2409
    %v3478 = vunpack.c.h.b16 %v2409
    %v3479 = vunpack.c.l.b16 %v2410
    %v3480 = vunpack.c.h.b16 %v2410
    %v3481 = vunpack.c.l.b16 %v2411
    %v3482 = vunpack.c.l.b16 %v2412
    %v3483 = vunpack.c.h.b16 %v2412
    %v3484 = vunpack.c.l.b16 %v2413
    %v3485 = vunpack.c.h.b16 %v2413
    %v3486 = vunpack.c.l.b16 %v2414
    %v3487 = vunpack.c.h.b16 %v2414
    %v3488 = vunpack.c.l.b16 %v2415
    %v3489 = vunpack.c.l.b16 %v2416
    %v3490 = vunpack.c.h.b16 %v2416
    %v3491 = vunpack.c.l.b16 %v2417
    %v3492 = vunpack.c.h.b16 %v2417
    %v3493 = vunpack.c.l.b16 %v2418
    %v3494 = vunpack.c.h.b16 %v2418
    %v3495 = vunpack.c.l.b16 %v2419
    %v3496 = vunpack.c.l.b16 %v2420
    %v3497 = vunpack.c.h.b16 %v2420
    %v3498 = vunpack.c.l.b16 %v2421
    %v3499 = vunpack.c.h.b16 %v2421
    %v3500 = vunpack.c.l.b16 %v2422
    %v3501 = vunpack.c.h.b16 %v2422
    %v3502 = vunpack.c.l.b16 %v2423
    %v3503 = vunpack.c.l.b16 %v2424
    %v3504 = vunpack.c.h.b16 %v2424
    %v3505 = vunpack.c.l.b16 %v2425
    %v3506 = vunpack.c.h.b16 %v2425
    %v3507 = vunpack.c.l.b16 %v2426
    %v3508 = vunpack.c.h.b16 %v2426
    %v3509 = vunpack.c.l.b16 %v2427
    %v3510 = vunpack.c.l.b16 %v2428
    %v3511 = vunpack.c.h.b16 %v2428
    %v3512 = vunpack.c.l.b16 %v2429
    %v3513 = vunpack.c.h.b16 %v2429
    %v3514 = vunpack.c.l.b16 %v2430
    %v3515 = vunpack.c.h.b16 %v2430
    %v3516 = vunpack.c.l.b16 %v2431
    %v3517 = vunpack.c.l.b16 %v2432
    %v3518 = vunpack.c.h.b16 %v2432
    %v3519 = vunpack.c.l.b16 %v2433
    %v3520 = vunpack.c.h.b16 %v2433
    %v3521 = vunpack.c.l.b16 %v2434
    %v3522 = vunpack.c.h.b16 %v2434
    %v3523 = vunpack.c.l.b16 %v2435
    %v3524 = vunpack.c.l.b16 %v2436
    %v3525 = vunpack.c.h.b16 %v2436
    %v3526 = vunpack.c.l.b16 %v2437
    %v3527 = vunpack.c.h.b16 %v2437
    %v3528 = vunpack.c.l.b16 %v2438
    %v3529 = vunpack.c.h.b16 %v2438
    %v3530 = vunpack.c.l.b16 %v2439
    %v3531 = vunpack.c.l.b16 %v2440
    %v3532 = vunpack.c.h.b16 %v2440
    %v3533 = vunpack.c.l.b16 %v2441
    %v3534 = vunpack.c.h.b16 %v2441
    %v3535 = vunpack.c.l.b16 %v2442
    %v3536 = vunpack.c.h.b16 %v2442
    %v3537 = vunpack.c.l.b16 %v2443
    %v3538 = vunpack.c.l.b16 %v2444
    %v3539 = vunpack.c.h.b16 %v2444
    %v3540 = vunpack.c.l.b16 %v2445
    %v3541 = vunpack.c.h.b16 %v2445
    %v3542 = vunpack.c.l.b16 %v2446
    %v3543 = vunpack.c.h.b16 %v2446
    %v3544 = vunpack.c.l.b16 %v2447
    %v3545 = vunpack.c.l.b16 %v2448
    %v3546 = vunpack.c.h.b16 %v2448
    %v3547 = vunpack.c.l.b16 %v2449
    %v3548 = vunpack.c.h.b16 %v2449
    %v3549 = vunpack.c.l.b16 %v2450
    %v3550 = vunpack.c.h.b16 %v2450
    %v3551 = vunpack.c.l.b16 %v2451
    %v3552 = vunpack.c.l.b16 %v2452
    %v3553 = vunpack.c.h.b16 %v2452
    %v3554 = vunpack.c.l.b16 %v2453
    %v3555 = vunpack.c.h.b16 %v2453
    %v3556 = vunpack.c.l.b16 %v2454
    %v3557 = vunpack.c.h.b16 %v2454
    %v3558 = vunpack.c.l.b16 %v2455
    %v3559 = vunpack.c.l.b16 %v2456
    %v3560 = vunpack.c.h.b16 %v2456
    %v3561 = vunpack.c.l.b16 %v2457
    %v3562 = vunpack.c.h.b16 %v2457
    %v3563 = vunpack.c.l.b16 %v2458
    %v3564 = vunpack.c.h.b16 %v2458
    %v3565 = vunpack.c.l.b16 %v2459
    %v3566 = vunpack.c.l.b16 %v2460
    %v3567 = vunpack.c.h.b16 %v2460
    %v3568 = vunpack.c.l.b16 %v2461
    %v3569 = vunpack.c.h.b16 %v2461
    %v3570 = vunpack.c.l.b16 %v2462
    %v3571 = vunpack.c.h.b16 %v2462
    %v3572 = vunpack.c.l.b16 %v2463
    %v3573 = vunpack.c.l.b16 %v2464
    %v3574 = vunpack.c.h.b16 %v2464
    %v3575 = vunpack.c.l.b16 %v2465
    %v3576 = vunpack.c.h.b16 %v2465
    %v3577 = vunpack.c.l.b16 %v2466
    %v3578 = vunpack.c.h.b16 %v2466
    %v3579 = vunpack.c.l.b16 %v2467
    %v3580 = vunpack.c.l.b16 %v2468
    %v3581 = vunpack.c.h.b16 %v2468
    %v3582 = vunpack.c.l.b16 %v2469
    %v3583 = vunpack.c.h.b16 %v2469
    %v3584 = vunpack.c.l.b16 %v2470
    %v3585 = vunpack.c.h.b16 %v2470
    %v3586 = vunpack.c.l.b16 %v2471
    %v3587 = vunpack.c.l.b16 %v2472
    %v3588 = vunpack.c.h.b16 %v2472
    %v3589 = vunpack.c.l.b16 %v2473
    %v3590 = vunpack.c.h.b16 %v2473
    %v3591 = vunpack.c.l.b16 %v2474
    %v3592 = vunpack.c.h.b16 %v2474
    %v3593 = vunpack.c.l.b16 %v2475
    %v3594 = vunpack.c.l.b16 %v2476
    %v3595 = vunpack.c.h.b16 %v2476
    %v3596 = vunpack.c.l.b16 %v2477
    %v3597 = vunpack.c.h.b16 %v2477
    %v3598 = vunpack.c.l.b16 %v2478
    %v3599 = vunpack.c.h.b16 %v2478
    %v3600 = vunpack.c.l.b16 %v2479
    %v3601 = vunpack.c.l.b16 %v2480
    %v3602 = vunpack.c.h.b16 %v2480
    %v3603 = vunpack.c.l.b16 %v2481
    %v3604 = vunpack.c.h.b16 %v2481
    %v3605 = vunpack.c.l.b16 %v2482
    %v3606 = vunpack.c.h.b16 %v2482
    %v3607 = vunpack.c.l.b16 %v2483
    %v3608 = vunpack.c.l.b16 %v2484
    %v3609 = vunpack.c.h.b16 %v2484
    %v3610 = vunpack.c.l.b16 %v2485
    %v3611 = vunpack.c.h.b16 %v2485
    %v3612 = vunpack.c.l.b16 %v2486
    %v3613 = vunpack.c.h.b16 %v2486
    %v3614 = vunpack.c.l.b16 %v2487
    %v3615 = vunpack.c.l.b16 %v2488
    %v3616 = vunpack.c.h.b16 %v2488
    %v3617 = vunpack.c.l.b16 %v2489
    %v3618 = vunpack.c.h.b16 %v2489
    %v3619 = vunpack.c.l.b16 %v2490
    %v3620 = vunpack.c.h.b16 %v2490
    %v3621 = vunpack.c.l.b16 %v2491
    %v3622 = vunpack.c.l.b16 %v2492
    %v3623 = vunpack.c.h.b16 %v2492
    %v3624 = vunpack.c.l.b16 %v2493
    %v3625 = vunpack.c.h.b16 %v2493
    %v3626 = vunpack.c.l.b16 %v2494
    %v3627 = vunpack.c.h.b16 %v2494
    %v3628 = vunpack.c.l.b16 %v2495
    %v3629 = vunpack.c.l.b16 %v2496
    %v3630 = vunpack.c.h.b16 %v2496
    %v3631 = vunpack.c.l.b16 %v2497
    %v3632 = vunpack.c.h.b16 %v2497
    %v3633 = vunpack.c.l.b16 %v2498
    %v3634 = vunpack.c.h.b16 %v2498
    %v3635 = vunpack.c.l.b16 %v2499
    %v3636 = vunpack.c.l.b16 %v2500
    %v3637 = vunpack.c.h.b16 %v2500
    %v3638 = vunpack.c.l.b16 %v2501
    %v3639 = vunpack.c.h.b16 %v2501
    %v3640 = vunpack.c.l.b16 %v2502
    %v3641 = vunpack.c.h.b16 %v2502
    %v3642 = vunpack.c.l.b16 %v2503
    %v3643 = vunpack.c.l.b16 %v2504
    %v3644 = vunpack.c.h.b16 %v2504
    %v3645 = vunpack.c.l.b16 %v2505
    %v3646 = vunpack.c.h.b16 %v2505
    %v3647 = vunpack.c.l.b16 %v2506
    %v3648 = vunpack.c.h.b16 %v2506
    %v3649 = vunpack.c.l.b16 %v2507
    %v3650 = vunpack.c.l.b16 %v2508
    %v3651 = vunpack.c.h.b16 %v2508
    %v3652 = vunpack.c.l.b16 %v2509
    %v3653 = vunpack.c.h.b16 %v2509
    %v3654 = vunpack.c.l.b16 %v2510
    %v3655 = vunpack.c.h.b16 %v2510
    %v3656 = vunpack.c.l.b16 %v2511
    %v3657 = vunpack.c.l.b16 %v2512
    %v3658 = vunpack.c.h.b16 %v2512
    %v3659 = vunpack.c.l.b16 %v2513
    %v3660 = vunpack.c.h.b16 %v2513
    %v3661 = vunpack.c.l.b16 %v2514
    %v3662 = vunpack.c.h.b16 %v2514
    %v3663 = vunpack.c.l.b16 %v2515
    %v3664 = vunpack.c.l.b16 %v2516
    %v3665 = vunpack.c.h.b16 %v2516
    %v3666 = vunpack.c.l.b16 %v2517
    %v3667 = vunpack.c.h.b16 %v2517
    %v3668 = vunpack.c.l.b16 %v2518
    %v3669 = vunpack.c.h.b16 %v2518
    %v3670 = vunpack.c.l.b16 %v2519
    %v3671 = vunpack.c.l.b16 %v2520
    %v3672 = vunpack.c.h.b16 %v2520
    %v3673 = vunpack.c.l.b16 %v2521
    %v3674 = vunpack.c.h.b16 %v2521
    %v3675 = vunpack.c.l.b16 %v2522
    %v3676 = vunpack.c.h.b16 %v2522
    %v3677 = vunpack.c.l.b16 %v2523
    %v3678 = vunpack.c.l.b16 %v2524
    %v3679 = vunpack.c.h.b16 %v2524
    %v3680 = vunpack.c.l.b16 %v2525
    %v3681 = vunpack.c.h.b16 %v2525
    %v3682 = vunpack.c.l.b16 %v2526
    %v3683 = vunpack.c.h.b16 %v2526
    %v3684 = vunpack.c.l.b16 %v2527
    %v3685 = vunpack.c.l.b16 %v2528
    %v3686 = vunpack.c.h.b16 %v2528
    %v3687 = vunpack.c.l.b16 %v2529
    %v3688 = vunpack.c.h.b16 %v2529
    %v3689 = vunpack.c.l.b16 %v2530
    %v3690 = vunpack.c.h.b16 %v2530
    %v3691 = vunpack.c.l.b16 %v2531
    %v3692 = vunpack.c.l.b16 %v2532
    %v3693 = vunpack.c.h.b16 %v2532
    %v3694 = vunpack.c.l.b16 %v2533
    %v3695 = vunpack.c.h.b16 %v2533
    %v3696 = vunpack.c.l.b16 %v2534
    %v3697 = vunpack.c.h.b16 %v2534
    %v3698 = vunpack.c.l.b16 %v2535
    %v3699 = vunpack.c.l.b16 %v2536
    %v3700 = vunpack.c.h.b16 %v2536
    %v3701 = vunpack.c.l.b16 %v2537
    %v3702 = vunpack.c.h.b16 %v2537
    %v3703 = vunpack.c.l.b16 %v2538
    %v3704 = vunpack.c.h.b16 %v2538
    %v3705 = vunpack.c.l.b16 %v2539
    %v3706 = vunpack.c.l.b16 %v2540
    %v3707 = vunpack.c.h.b16 %v2540
    %v3708 = vunpack.c.l.b16 %v2541
    %v3709 = vunpack.c.h.b16 %v2541
    %v3710 = vunpack.c.l.b16 %v2542
    %v3711 = vunpack.c.h.b16 %v2542
    %v3712 = vunpack.c.l.b16 %v2543
    %v3713 = vunpack.c.l.b16 %v2544
    %v3714 = vunpack.c.h.b16 %v2544
    %v3715 = vunpack.c.l.b16 %v2545
    %v3716 = vunpack.c.h.b16 %v2545
    %v3717 = vunpack.c.l.b16 %v2546
    %v3718 = vunpack.c.h.b16 %v2546
    %v3719 = vunpack.c.l.b16 %v2547
    %v3720 = vunpack.c.l.b16 %v2548
    %v3721 = vunpack.c.h.b16 %v2548
    %v3722 = vunpack.c.l.b16 %v2549
    %v3723 = vunpack.c.h.b16 %v2549
    %v3724 = vunpack.c.l.b16 %v2550
    %v3725 = vunpack.c.h.b16 %v2550
    %v3726 = vunpack.c.l.b16 %v2551
    %v3727 = vunpack.c.l.b16 %v2552
    %v3728 = vunpack.c.h.b16 %v2552
    %v3729 = vunpack.c.l.b16 %v2553
    %v3730 = vunpack.c.h.b16 %v2553
    %v3731 = vunpack.c.l.b16 %v2554
    %v3732 = vunpack.c.h.b16 %v2554
    %v3733 = vunpack.c.l.b16 %v2555
    %v3734 = vunpack.c.l.b16 %v2556
    %v3735 = vunpack.c.h.b16 %v2556
    %v3736 = vunpack.c.l.b16 %v2557
    %v3737 = vunpack.c.h.b16 %v2557
    %v3738 = vunpack.c.l.b16 %v2558
    %v3739 = vunpack.c.h.b16 %v2558
    %v3740 = vunpack.c.l.b16 %v2559
    %v3741 = vunpack.c.l.b16 %v2560
    %v3742 = vunpack.c.h.b16 %v2560
    %v3743 = vunpack.c.l.b16 %v2561
    %v3744 = vunpack.c.h.b16 %v2561
    %v3745 = vunpack.c.l.b16 %v2562
    %v3746 = vunpack.c.h.b16 %v2562
    %v3747 = vunpack.c.l.b16 %v2563
    %v3748 = vunpack.c.l.b16 %v2564
    %v3749 = vunpack.c.h.b16 %v2564
    %v3750 = vunpack.c.l.b16 %v2565
    %v3751 = vunpack.c.h.b16 %v2565
    %v3752 = vunpack.c.l.b16 %v2566
    %v3753 = vunpack.c.h.b16 %v2566
    %v3754 = vunpack.c.l.b16 %v2567
    %v3755 = vunpack.c.l.b16 %v2568
    %v3756 = vunpack.c.h.b16 %v2568
    %v3757 = vunpack.c.l.b16 %v2569
    %v3758 = vunpack.c.h.b16 %v2569
    %v3759 = vunpack.c.l.b16 %v2570
    %v3760 = vunpack.c.h.b16 %v2570
    %v3761 = vunpack.c.l.b16 %v2571
    %v3762 = vunpack.c.l.b16 %v2572
    %v3763 = vunpack.c.h.b16 %v2572
    %v3764 = vunpack.c.l.b16 %v2573
    %v3765 = vunpack.c.h.b16 %v2573
    %v3766 = vunpack.c.l.b16 %v2574
    %v3767 = vunpack.c.h.b16 %v2574
    %v3768 = vunpack.c.l.b16 %v2575
    %v3769 = vunpack.c.l.b16 %v2576
    %v3770 = vunpack.c.h.b16 %v2576
    %v3771 = vunpack.c.l.b16 %v2577
    %v3772 = vunpack.c.h.b16 %v2577
    %v3773 = vunpack.c.l.b16 %v2578
    %v3774 = vunpack.c.h.b16 %v2578
    %v3775 = vunpack.c.l.b16 %v2579
    %v3776 = vunpack.c.l.b16 %v2580
    %v3777 = vunpack.c.h.b16 %v2580
    %v3778 = vunpack.c.l.b16 %v2581
    %v3779 = vunpack.c.h.b16 %v2581
    %v3780 = vunpack.c.l.b16 %v2582
    %v3781 = vunpack.c.h.b16 %v2582
    %v3782 = vunpack.c.l.b16 %v2583
    %v3783 = vunpack.c.l.b16 %v2584
    %v3784 = vunpack.c.h.b16 %v2584
    %v3785 = vunpack.c.l.b16 %v2585
    %v3786 = vunpack.c.h.b16 %v2585
    %v3787 = vunpack.c.l.b16 %v2586
    %v3788 = vunpack.c.h.b16 %v2586
    %v3789 = vunpack.c.l.b16 %v2587
    %v3790 = vunpack.c.l.b16 %v2588
    %v3791 = vunpack.c.h.b16 %v2588
    %v3792 = vunpack.c.l.b16 %v2589
    %v3793 = vunpack.c.h.b16 %v2589
    %v3794 = vunpack.c.l.b16 %v2590
    %v3795 = vunpack.c.h.b16 %v2590
    %v3796 = vunpack.c.l.b16 %v2591
    %v3797 = vunpack.c.l.b16 %v2592
    %v3798 = vunpack.c.h.b16 %v2592
    %v3799 = vunpack.c.l.b16 %v2593
    %v3800 = vunpack.c.h.b16 %v2593
    %v3801 = vunpack.c.l.b16 %v2594
    %v3802 = vunpack.c.h.b16 %v2594
    %v3803 = vunpack.c.l.b16 %v2595
    %v3804 = vunpack.c.l.b16 %v2596
    %v3805 = vunpack.c.h.b16 %v2596
    %v3806 = vunpack.c.l.b16 %v2597
    %v3807 = vunpack.c.h.b16 %v2597
    %v3808 = vunpack.c.l.b16 %v2598
    %v3809 = vunpack.c.h.b16 %v2598
    %v3810 = vunpack.c.l.b16 %v2599
    %v3811 = vunpack.c.l.b16 %v2600
    %v3812 = vunpack.c.h.b16 %v2600
    %v3813 = vunpack.c.l.b16 %v2601
    %v3814 = vunpack.c.h.b16 %v2601
    %v3815 = vunpack.c.l.b16 %v2602
    %v3816 = vunpack.c.h.b16 %v2602
    %v3817 = vunpack.c.l.b16 %v2603
    %v3818 = vunpack.c.l.b16 %v2604
    %v3819 = vunpack.c.h.b16 %v2604
    %v3820 = vunpack.c.l.b16 %v2605
    %v3821 = vunpack.c.h.b16 %v2605
    %v3822 = vunpack.c.l.b16 %v2606
    %v3823 = vunpack.c.h.b16 %v2606
    %v3824 = vunpack.c.l.b16 %v2607
    %v3825 = vunpack.c.l.b16 %v2608
    %v3826 = vunpack.c.h.b16 %v2608
    %v3827 = vunpack.c.l.b16 %v2609
    %v3828 = vunpack.c.h.b16 %v2609
    %v3829 = vunpack.c.l.b16 %v2610
    %v3830 = vunpack.c.h.b16 %v2610
    %v3831 = vunpack.c.l.b16 %v2611
    %v3832 = vunpack.c.l.b16 %v2612
    %v3833 = vunpack.c.h.b16 %v2612
    %v3834 = vunpack.c.l.b16 %v2613
    %v3835 = vunpack.c.h.b16 %v2613
    %v3836 = vunpack.c.l.b16 %v2614
    %v3837 = vunpack.c.h.b16 %v2614
    %v3838 = vunpack.c.l.b16 %v2615
    %v3839 = vunpack.c.l.b16 %v2616
    %v3840 = vunpack.c.h.b16 %v2616
    %v3841 = vunpack.c.l.b16 %v2617
    %v3842 = vunpack.c.h.b16 %v2617
    %v3843 = vunpack.c.l.b16 %v2618
    %v3844 = vunpack.c.h.b16 %v2618
    %v3845 = vunpack.c.l.b16 %v2619
    %v3846 = vunpack.c.l.b16 %v2620
    %v3847 = vunpack.c.h.b16 %v2620
    %v3848 = vunpack.c.l.b16 %v2621
    %v3849 = vunpack.c.h.b16 %v2621
    %v3850 = vunpack.c.l.b16 %v2622
    %v3851 = vunpack.c.h.b16 %v2622
    %v3852 = vunpack.c.l.b16 %v2623
    %v3853 = vunpack.c.l.b16 %v2624
    %v3854 = vunpack.c.h.b16 %v2624
    %v3855 = vunpack.c.l.b16 %v2625
    %v3856 = vunpack.c.h.b16 %v2625
    %v3857 = vunpack.c.l.b16 %v2626
    %v3858 = vunpack.c.h.b16 %v2626
    %v3859 = vunpack.c.l.b16 %v2627
    %v3860 = vunpack.c.l.b16 %v2628
    %v3861 = vunpack.c.h.b16 %v2628
    %v3862 = vunpack.c.l.b16 %v2629
    %v3863 = vunpack.c.h.b16 %v2629
    %v3864 = vunpack.c.l.b16 %v2630
    %v3865 = vunpack.c.h.b16 %v2630
    %v3866 = vunpack.c.l.b16 %v2631
    %v3867 = vunpack.c.l.b16 %v2632
    %v3868 = vunpack.c.h.b16 %v2632
    %v3869 = vunpack.c.l.b16 %v2633
    %v3870 = vunpack.c.h.b16 %v2633
    %v3871 = vunpack.c.l.b16 %v2634
    %v3872 = vunpack.c.h.b16 %v2634
    %v3873 = vunpack.c.l.b16 %v2635
    %v3874 = vunpack.c.l.b16 %v2636
    %v3875 = vunpack.c.h.b16 %v2636
    %v3876 = vunpack.c.l.b16 %v2637
    %v3877 = vunpack.c.h.b16 %v2637
    %v3878 = vunpack.c.l.b16 %v2638
    %v3879 = vunpack.c.h.b16 %v2638
    %v3880 = vunpack.c.l.b16 %v2639
    %v3881 = vunpack.c.l.b16 %v2640
    %v3882 = vunpack.c.h.b16 %v2640
    %v3883 = vunpack.c.l.b16 %v2641
    %v3884 = vunpack.c.h.b16 %v2641
    %v3885 = vunpack.c.l.b16 %v2642
    %v3886 = vunpack.c.h.b16 %v2642
    %v3887 = vunpack.c.l.b16 %v2643
    %v3888 = vunpack.c.l.b16 %v2644
    %v3889 = vunpack.c.h.b16 %v2644
    %v3890 = vunpack.c.l.b16 %v2645
    %v3891 = vunpack.c.h.b16 %v2645
    %v3892 = vunpack.c.l.b16 %v2646
    %v3893 = vunpack.c.h.b16 %v2646
    %v3894 = vunpack.c.l.b16 %v2647
    %v3895 = vunpack.c.l.b16 %v2648
    %v3896 = vunpack.c.h.b16 %v2648
    %v3897 = vunpack.c.l.b16 %v2649
    %v3898 = vunpack.c.h.b16 %v2649
    %v3899 = vunpack.c.l.b16 %v2650
    %v3900 = vunpack.c.h.b16 %v2650
    %v3901 = vunpack.c.l.b16 %v2651
    %v3902 = vunpack.c.l.b16 %v2652
    %v3903 = vunpack.c.h.b16 %v2652
    %v3904 = vunpack.c.l.b16 %v2653
    %v3905 = vunpack.c.h.b16 %v2653
    %v3906 = vunpack.c.l.b16 %v2654
    %v3907 = vunpack.c.h.b16 %v2654
    %v3908 = vunpack.c.l.b16 %v2655
    %v3909 = vunpack.c.l.b16 %v2656
    %v3910 = vunpack.c.h.b16 %v2656
    %v3911 = vunpack.c.l.b16 %v2657
    %v3912 = vunpack.c.h.b16 %v2657
    %v3913 = vunpack.c.l.b16 %v2658
    %v3914 = vunpack.c.h.b16 %v2658
    %v3915 = vunpack.c.l.b16 %v2659
    %v3916 = vunpack.c.l.b16 %v2660
    %v3917 = vunpack.c.h.b16 %v2660
    %v3918 = vunpack.c.l.b16 %v2661
    %v3919 = vunpack.c.h.b16 %v2661
    %v3920 = vunpack.c.l.b16 %v2662
    %v3921 = vunpack.c.h.b16 %v2662
    %v3922 = vunpack.c.l.b16 %v2663
    %v3923 = vunpack.c.l.b16 %v2664
    %v3924 = vunpack.c.h.b16 %v2664
    %v3925 = vunpack.c.l.b16 %v2665
    %v3926 = vunpack.c.h.b16 %v2665
    %v3927 = vunpack.c.l.b16 %v2666
    %v3928 = vunpack.c.h.b16 %v2666
    %v3929 = vunpack.c.l.b16 %v2667
    %v3930 = vunpack.c.l.b16 %v2668
    %v3931 = vunpack.c.h.b16 %v2668
    %v3932 = vunpack.c.l.b16 %v2669
    %v3933 = vunpack.c.h.b16 %v2669
    %v3934 = vunpack.c.l.b16 %v2670
    %v3935 = vunpack.c.h.b16 %v2670
    %v3936 = vunpack.c.l.b16 %v2671
    %v3937 = vunpack.c.l.b16 %v2672
    %v3938 = vunpack.c.h.b16 %v2672
    %v3939 = vunpack.c.l.b16 %v2673
    %v3940 = vunpack.c.h.b16 %v2673
    %v3941 = vunpack.c.l.b16 %v2674
    %v3942 = vunpack.c.h.b16 %v2674
    %v3943 = vunpack.c.l.b16 %v2675
    %v3944 = vunpack.c.l.b16 %v2676
    %v3945 = vunpack.c.h.b16 %v2676
    %v3946 = vunpack.c.l.b16 %v2677
    %v3947 = vunpack.c.h.b16 %v2677
    %v3948 = vunpack.c.l.b16 %v2678
    %v3949 = vunpack.c.h.b16 %v2678
    %v3950 = vunpack.c.l.b16 %v2679
    %v3951 = vunpack.c.l.b16 %v2680
    %v3952 = vunpack.c.h.b16 %v2680
    %v3953 = vunpack.c.l.b16 %v2681
    %v3954 = vunpack.c.h.b16 %v2681
    %v3955 = vunpack.c.l.b16 %v2682
    %v3956 = vunpack.c.h.b16 %v2682
    %v3957 = vunpack.c.l.b16 %v2683
    %v3958 = vunpack.c.l.b16 %v2684
    %v3959 = vunpack.c.h.b16 %v2684
    %v3960 = vunpack.c.l.b16 %v2685
    %v3961 = vunpack.c.h.b16 %v2685
    %v3962 = vunpack.c.l.b16 %v2686
    %v3963 = vunpack.c.h.b16 %v2686
    %v3964 = vunpack.c.l.b16 %v2687
    %v3965 = vunpack.c.l.b16 %v2688
    %v3966 = vunpack.c.h.b16 %v2688
    %v3967 = vunpack.c.l.b16 %v2689
    %v3968 = vunpack.c.h.b16 %v2689
    %v3969 = vunpack.c.l.b16 %v2690
    %v3970 = vunpack.c.h.b16 %v2690
    %v3971 = vunpack.c.l.b16 %v2691
    %v3972 = vunpack.c.l.b16 %v2692
    %v3973 = vunpack.c.h.b16 %v2692
    %v3974 = vunpack.c.l.b16 %v2693
    %v3975 = vunpack.c.h.b16 %v2693
    %v3976 = vunpack.c.l.b16 %v2694
    %v3977 = vunpack.c.h.b16 %v2694
    %v3978 = vunpack.c.l.b16 %v2695
    %v3979 = vunpack.c.l.b16 %v2696
    %v3980 = vunpack.c.h.b16 %v2696
    %v3981 = vunpack.c.l.b16 %v2697
    %v3982 = vunpack.c.h.b16 %v2697
    %v3983 = vunpack.c.l.b16 %v2698
    %v3984 = vunpack.c.h.b16 %v2698
    %v3985 = vunpack.c.l.b16 %v2699
    %v3986 = vunpack.c.l.b16 %v2700
    %v3987 = vunpack.c.h.b16 %v2700
    %v3988 = vunpack.c.l.b16 %v2701
    %v3989 = vunpack.c.h.b16 %v2701
    %v3990 = vunpack.c.l.b16 %v2702
    %v3991 = vunpack.c.h.b16 %v2702
    %v3992 = vunpack.c.l.b16 %v2703
    %v3993 = vunpack.c.l.b16 %v2704
    %v3994 = vunpack.c.h.b16 %v2704
    %v3995 = vunpack.c.l.b16 %v2705
    %v3996 = vunpack.c.h.b16 %v2705
    %v3997 = vunpack.c.l.b16 %v2706
    %v3998 = vunpack.c.h.b16 %v2706
    %v3999 = vunpack.c.l.b16 %v2707
    %v4000 = vunpack.c.l.b16 %v2708
    %v4001 = vunpack.c.h.b16 %v2708
    %v4002 = vunpack.c.l.b16 %v2709
    %v4003 = vunpack.c.h.b16 %v2709
    %v4004 = vunpack.c.l.b16 %v2710
    %v4005 = vunpack.c.h.b16 %v2710
    %v4006 = vunpack.c.l.b16 %v2711
    %v4007 = vunpack.c.l.b16 %v2712
    %v4008 = vunpack.c.h.b16 %v2712
    %v4009 = vunpack.c.l.b16 %v2713
    %v4010 = vunpack.c.h.b16 %v2713
    %v4011 = vunpack.c.l.b16 %v2714
    %v4012 = vunpack.c.h.b16 %v2714
    %v4013 = vunpack.c.l.b16 %v2715
    %v4014 = vunpack.c.l.b16 %v2716
    %v4015 = vunpack.c.h.b16 %v2716
    %v4016 = vunpack.c.l.b16 %v2717
    %v4017 = vunpack.c.h.b16 %v2717
    %v4018 = vunpack.c.l.b16 %v2718
    %v4019 = vunpack.c.h.b16 %v2718
    %v4020 = vunpack.c.l.b16 %v2719
    %v4021 = vunpack.c.l.b16 %v2720
    %v4022 = vunpack.c.h.b16 %v2720
    %v4023 = vunpack.c.l.b16 %v2721
    %v4024 = vunpack.c.h.b16 %v2721
    %v4025 = vunpack.c.l.b16 %v2722
    %v4026 = vunpack.c.h.b16 %v2722
    %v4027 = vunpack.c.l.b16 %v2723
    %v4028 = vunpack.c.l.b16 %v2724
    %v4029 = vunpack.c.h.b16 %v2724
    %v4030 = vunpack.c.l.b16 %v2725
    %v4031 = vunpack.c.h.b16 %v2725
    %v4032 = vunpack.c.l.b16 %v2726
    %v4033 = vunpack.c.h.b16 %v2726
    %v4034 = vunpack.c.l.b16 %v2727
    %v4035 = vunpack.c.l.b16 %v2728
    %v4036 = vunpack.c.h.b16 %v2728
    %v4037 = vunpack.c.l.b16 %v2729
    %v4038 = vunpack.c.h.b16 %v2729
    %v4039 = vunpack.c.l.b16 %v2730
    %v4040 = vunpack.c.h.b16 %v2730
    %v4041 = vunpack.c.l.b16 %v2731
    %v4042 = vunpack.c.l.b16 %v2732
    %v4043 = vunpack.c.h.b16 %v2732
    %v4044 = vunpack.c.l.b16 %v2733
    %v4045 = vunpack.c.h.b16 %v2733
    %v4046 = vunpack.c.l.b16 %v2734
    %v4047 = vunpack.c.h.b16 %v2734
    %v4048 = vunpack.c.l.b16 %v2735
    %v4049 = vunpack.c.l.b16 %v2736
    %v4050 = vunpack.c.h.b16 %v2736
    %v4051 = vunpack.c.l.b16 %v2737
    %v4052 = vunpack.c.h.b16 %v2737
    %v4053 = vunpack.c.l.b16 %v2738
    %v4054 = vunpack.c.h.b16 %v2738
    %v4055 = vunpack.c.l.b16 %v2739
    %v4056 = vunpack.c.l.b16 %v2740
    %v4057 = vunpack.c.h.b16 %v2740
    %v4058 = vunpack.c.l.b16 %v2741
    %v4059 = vunpack.c.h.b16 %v2741
    %v4060 = vunpack.c.l.b16 %v2742
    %v4061 = vunpack.c.h.b16 %v2742
    %v4062 = vunpack.c.l.b16 %v2743
    %v4063 = vunpack.c.l.b16 %v2744
    %v4064 = vunpack.c.h.b16 %v2744
    %v4065 = vunpack.c.l.b16 %v2745
    %v4066 = vunpack.c.h.b16 %v2745
    %v4067 = vunpack.c.l.b16 %v2746
    %v4068 = vunpack.c.h.b16 %v2746
    %v4069 = vunpack.c.l.b16 %v2747
    %v4070 = vunpack.c.l.b16 %v2748
    %v4071 = vunpack.c.h.b16 %v2748
    %v4072 = vunpack.c.l.b16 %v2749
    %v4073 = vunpack.c.h.b16 %v2749
    %v4074 = vunpack.c.l.b16 %v2750
    %v4075 = vunpack.c.h.b16 %v2750
    %v4076 = vunpack.c.l.b16 %v2751
    %v4077 = vunpack.c.l.b16 %v2752
    %v4078 = vunpack.c.h.b16 %v2752
    %v4079 = vunpack.c.l.b16 %v2753
    %v4080 = vunpack.c.h.b16 %v2753
    %v4081 = vunpack.c.l.b16 %v2754
    %v4082 = vunpack.c.h.b16 %v2754
    %v4083 = vunpack.c.l.b16 %v2755
    %v4084 = vunpack.c.l.b16 %v2756
    %v4085 = vunpack.c.h.b16 %v2756
    %v4086 = vunpack.c.l.b16 %v2757
    %v4087 = vunpack.c.h.b16 %v2757
    %v4088 = vunpack.c.l.b16 %v2758
    %v4089 = vunpack.c.h.b16 %v2758
    %v4090 = vunpack.c.l.b16 %v2759
    %v4091 = vunpack.c.l.b16 %v2760
    %v4092 = vunpack.c.h.b16 %v2760
    %v4093 = vunpack.c.l.b16 %v2761
    %v4094 = vunpack.c.h.b16 %v2761
    %v4095 = vunpack.c.l.b16 %v2762
    %v4096 = vunpack.c.h.b16 %v2762
    %v4097 = vunpack.c.l.b16 %v2763
    %v4098 = vunpack.c.l.b16 %v2764
    %v4099 = vunpack.c.h.b16 %v2764
    %v4100 = vunpack.c.l.b16 %v2765
    %v4101 = vunpack.c.h.b16 %v2765
    %v4102 = vunpack.c.l.b16 %v2766
    %v4103 = vunpack.c.h.b16 %v2766
    %v4104 = vunpack.c.l.b16 %v2767
    %v4105 = vunpack.c.l.b16 %v2768
    %v4106 = vunpack.c.h.b16 %v2768
    %v4107 = vunpack.c.l.b16 %v2769
    %v4108 = vunpack.c.h.b16 %v2769
    %v4109 = vunpack.c.l.b16 %v2770
    %v4110 = vunpack.c.h.b16 %v2770
    %v4111 = vunpack.c.l.b16 %v2771
    %v4112 = vunpack.c.l.b16 %v2772
    %v4113 = vunpack.c.h.b16 %v2772
    %v4114 = vunpack.c.l.b16 %v2773
    %v4115 = vunpack.c.h.b16 %v2773
    %v4116 = vunpack.c.l.b16 %v2774
    %v4117 = vunpack.c.h.b16 %v2774
    %v4118 = vunpack.c.l.b16 %v2775
    %v4119 = vunpack.c.l.b16 %v2776
    %v4120 = vunpack.c.h.b16 %v2776
    %v4121 = vunpack.c.l.b16 %v2777
    %v4122 = vunpack.c.h.b16 %v2777
    %v4123 = vunpack.c.l.b16 %v2778
    %v4124 = vunpack.c.h.b16 %v2778
    %v4125 = vunpack.c.l.b16 %v2779
    %v4126 = vunpack.c.l.b16 %v2780
    %v4127 = vunpack.c.h.b16 %v2780
    %v4128 = vunpack.c.l.b16 %v2781
    %v4129 = vunpack.c.h.b16 %v2781
    %v4130 = vunpack.c.l.b16 %v2782
    %v4131 = vunpack.c.h.b16 %v2782
    %v4132 = vunpack.c.l.b16 %v2783
    %v4133 = vunpack.c.l.b16 %v2784
    %v4134 = vunpack.c.h.b16 %v2784
    %v4135 = vunpack.c.l.b16 %v2785
    %v4136 = vunpack.c.h.b16 %v2785
    %v4137 = vunpack.c.l.b16 %v2786
    %v4138 = vunpack.c.h.b16 %v2786
    %v4139 = vunpack.c.l.b16 %v2787
    %v4140 = vunpack.c.l.b16 %v2788
    %v4141 = vunpack.c.h.b16 %v2788
    %v4142 = vunpack.c.l.b16 %v2789
    %v4143 = vunpack.c.h.b16 %v2789
    %v4144 = vunpack.c.l.b16 %v2790
    %v4145 = vunpack.c.h.b16 %v2790
    %v4146 = vunpack.c.l.b16 %v2791
    %v4147 = vunpack.c.l.b16 %v2792
    %v4148 = vunpack.c.h.b16 %v2792
    %v4149 = vunpack.c.l.b16 %v2793
    %v4150 = vunpack.c.h.b16 %v2793
    %v4151 = vunpack.c.l.b16 %v2794
    %v4152 = vunpack.c.h.b16 %v2794
    %v4153 = vunpack.c.l.b16 %v2795
    %v4154 = vunpack.c.l.b16 %v2796
    %v4155 = vunpack.c.h.b16 %v2796
    %v4156 = vunpack.c.l.b16 %v2797
    %v4157 = vunpack.c.h.b16 %v2797
    %v4158 = vunpack.c.l.b16 %v2798
    %v4159 = vunpack.c.h.b16 %v2798
    %v4160 = vunpack.c.l.b16 %v2799
    %v4161 = vunpack.c.l.b16 %v2800
    %v4162 = vunpack.c.h.b16 %v2800
    %v4163 = vunpack.c.l.b16 %v2801
    %v4164 = vunpack.c.h.b16 %v2801
    %v4165 = vunpack.c.l.b16 %v2802
    %v4166 = vunpack.c.h.b16 %v2802
    %v4167 = vunpack.c.l.b16 %v2803
    %v4168 = vunpack.c.l.b16 %v2804
    %v4169 = vunpack.c.h.b16 %v2804
    %v4170 = vunpack.c.l.b16 %v2805
    %v4171 = vunpack.c.h.b16 %v2805
    %v4172 = vunpack.c.l.b16 %v2806
    %v4173 = vunpack.c.h.b16 %v2806
    %v4174 = vunpack.c.l.b16 %v2807
    %v4175 = vunpack.c.l.b16 %v2808
    %v4176 = vunpack.c.h.b16 %v2808
    %v4177 = vunpack.c.l.b16 %v2809
    %v4178 = vunpack.c.h.b16 %v2809
    %v4179 = vunpack.c.l.b16 %v2810
    %v4180 = vunpack.c.h.b16 %v2810
    %v4181 = vunpack.c.l.b16 %v2811
    %v4182 = vunpack.c.l.b16 %v2812
    %v4183 = vunpack.c.h.b16 %v2812
    %v4184 = vunpack.c.l.b16 %v2813
    %v4185 = vunpack.c.h.b16 %v2813
    %v4186 = vunpack.c.l.b16 %v2814
    %v4187 = vunpack.c.h.b16 %v2814
    %v4188 = vunpack.c.l.b16 %v2815
    %v4189 = vunpack.c.l.b16 %v2816
    %v4190 = vunpack.c.h.b16 %v2816
    %v4191 = vunpack.c.l.b16 %v2817
    %v4192 = vunpack.c.h.b16 %v2817
    %v4193 = vunpack.c.l.b16 %v2818
    %v4194 = vunpack.c.h.b16 %v2818
    %v4195 = vunpack.c.l.b16 %v2819
    %v4196 = vunpack.c.l.b16 %v2820
    %v4197 = vunpack.c.h.b16 %v2820
    %v4198 = vunpack.c.l.b16 %v2821
    %v4199 = vunpack.c.h.b16 %v2821
    %v4200 = vunpack.c.l.b16 %v2822
    %v4201 = vunpack.c.h.b16 %v2822
    %v4202 = vunpack.c.l.b16 %v2823
    %v4203 = vunpack.c.l.b16 %v2824
    %v4204 = vunpack.c.h.b16 %v2824
    %v4205 = vunpack.c.l.b16 %v2825
    %v4206 = vunpack.c.h.b16 %v2825
    %v4207 = vunpack.c.l.b16 %v2826
    %v4208 = vunpack.c.h.b16 %v2826
    %v4209 = vunpack.c.l.b16 %v2827
    %v4210 = vunpack.c.l.b16 %v2828
    %v4211 = vunpack.c.h.b16 %v2828
    %v4212 = vunpack.c.l.b16 %v2829
    %v4213 = vunpack.c.h.b16 %v2829
    %v4214 = vunpack.c.l.b16 %v2830
    %v4215 = vunpack.c.h.b16 %v2830
    %v4216 = vunpack.c.l.b16 %v2831
    %v4217 = vunpack.c.l.b16 %v2832
    %v4218 = vunpack.c.h.b16 %v2832
    %v4219 = vunpack.c.l.b16 %v2833
    %v4220 = vunpack.c.h.b16 %v2833
    %v4221 = vunpack.c.l.b16 %v2834
    %v4222 = vunpack.c.h.b16 %v2834
    %v4223 = vunpack.c.l.b16 %v2835
    %v4224 = vunpack.c.l.b16 %v2836
    %v4225 = vunpack.c.h.b16 %v2836
    %v4226 = vunpack.c.l.b16 %v2837
    %v4227 = vunpack.c.h.b16 %v2837
    %v4228 = vunpack.c.l.b16 %v2838
    %v4229 = vunpack.c.h.b16 %v2838
    %v4230 = vunpack.c.l.b16 %v2839
    %v4231 = vunpack.c.l.b16 %v2840
    %v4232 = vunpack.c.h.b16 %v2840
    %v4233 = vunpack.c.l.b16 %v2841
    %v4234 = vunpack.c.h.b16 %v2841
    %v4235 = vunpack.c.l.b16 %v2842
    %v4236 = vunpack.c.h.b16 %v2842
    %v4237 = vunpack.c.l.b16 %v2843
    %v4238 = vunpack.c.l.b16 %v2844
    %v4239 = vunpack.c.h.b16 %v2844
    %v4240 = vunpack.c.l.b16 %v2845
    %v4241 = vunpack.c.h.b16 %v2845
    %v4242 = vunpack.c.l.b16 %v2846
    %v4243 = vunpack.c.h.b16 %v2846
    %v4244 = vunpack.c.l.b16 %v2847
    %v4245 = vunpack.c.l.b16 %v2848
    %v4246 = vunpack.c.h.b16 %v2848
    %v4247 = vunpack.c.l.b16 %v2849
    %v4248 = vunpack.c.h.b16 %v2849
    %v4249 = vunpack.c.l.b16 %v2850
    %v4250 = vunpack.c.h.b16 %v2850
    %v4251 = vunpack.c.l.b16 %v2851
    %v4252 = vunpack.c.l.b16 %v2852
    %v4253 = vunpack.c.h.b16 %v2852
    %v4254 = vunpack.c.l.b16 %v2853
    %v4255 = vunpack.c.h.b16 %v2853
    %v4256 = vunpack.c.l.b16 %v2854
    %v4257 = vunpack.c.h.b16 %v2854
    %v4258 = vunpack.c.l.b16 %v2855
    %v4259 = vunpack.c.l.b16 %v2856
    %v4260 = vunpack.c.h.b16 %v2856
    %v4261 = vunpack.c.l.b16 %v2857
    %v4262 = vunpack.c.h.b16 %v2857
    %v4263 = vunpack.c.l.b16 %v2858
    %v4264 = vunpack.c.h.b16 %v2858
    %v4265 = vunpack.c.l.b16 %v2859
    %v4266 = vunpack.c.l.b16 %v2860
    %v4267 = vunpack.c.h.b16 %v2860
    %v4268 = vunpack.c.l.b16 %v2861
    %v4269 = vunpack.c.h.b16 %v2861
    %v4270 = vunpack.c.l.b16 %v2862
    %v4271 = vunpack.c.h.b16 %v2862
    %v4272 = vunpack.c.l.b16 %v2863
    %v4273 = vunpack.c.l.b16 %v2864
    %v4274 = vunpack.c.h.b16 %v2864
    %v4275 = vunpack.c.l.b16 %v2865
    %v4276 = vunpack.c.h.b16 %v2865
    %v4277 = vunpack.c.l.b16 %v2866
    %v4278 = vunpack.c.h.b16 %v2866
    %v4279 = vunpack.c.l.b16 %v2867
    %v4280 = vunpack.c.l.b16 %v2868
    %v4281 = vunpack.c.h.b16 %v2868
    %v4282 = vunpack.c.l.b16 %v2869
    %v4283 = vunpack.c.h.b16 %v2869
    %v4284 = vunpack.c.l.b16 %v2870
    %v4285 = vunpack.c.h.b16 %v2870
    %v4286 = vunpack.c.l.b16 %v2871
    %v4287 = vunpack.c.l.b16 %v2872
    %v4288 = vunpack.c.h.b16 %v2872
    %v4289 = vunpack.c.l.b16 %v2873
    %v4290 = vunpack.c.h.b16 %v2873
    %v4291 = vunpack.c.l.b16 %v2874
    %v4292 = vunpack.c.h.b16 %v2874
    %v4293 = vunpack.c.l.b16 %v2875
    %v4294 = vunpack.c.l.b16 %v2876
    %v4295 = vunpack.c.h.b16 %v2876
    %v4296 = vunpack.c.l.b16 %v2877
    %v4297 = vunpack.c.h.b16 %v2877
    %v4298 = vunpack.c.l.b16 %v2878
    %v4299 = vunpack.c.h.b16 %v2878
    %v4300 = vunpack.c.l.b16 %v2879
    %v4301 = vunpack.c.l.b16 %v2880
    %v4302 = vunpack.c.h.b16 %v2880
    %v4303 = vunpack.c.l.b16 %v2881
    %v4304 = vunpack.c.h.b16 %v2881
    %v4305 = vunpack.c.l.b16 %v2882
    %v4306 = vunpack.c.h.b16 %v2882
    %v4307 = vunpack.c.l.b16 %v2883
    %v4308 = vunpack.c.l.b16 %v2884
    %v4309 = vunpack.c.h.b16 %v2884
    %v4310 = vunpack.c.l.b16 %v2885
    %v4311 = vunpack.c.h.b16 %v2885
    %v4312 = vunpack.c.l.b16 %v2886
    %v4313 = vunpack.c.h.b16 %v2886
    %v4314 = vunpack.c.l.b16 %v2887
    %v4315 = vunpack.c.l.b16 %v2888
    %v4316 = vunpack.c.h.b16 %v2888
    %v4317 = vunpack.c.l.b16 %v2889
    %v4318 = vunpack.c.h.b16 %v2889
    %v4319 = vunpack.c.l.b16 %v2890
    %v4320 = vunpack.c.h.b16 %v2890
    %v4321 = vunpack.c.l.b16 %v2891
    %v4322 = vunpack.c.l.b16 %v2892
    %v4323 = vunpack.c.h.b16 %v2892
    %v4324 = vunpack.c.l.b16 %v2893
    %v4325 = vunpack.c.h.b16 %v2893
    %v4326 = vunpack.c.l.b16 %v2894
    %v4327 = vunpack.c.h.b16 %v2894
    %v4328 = vunpack.c.l.b16 %v2895
    %v4329 = vunpack.c.l.b16 %v2896
    %v4330 = vunpack.c.h.b16 %v2896
    %v4331 = vunpack.c.l.b16 %v2897
    %v4332 = vunpack.c.h.b16 %v2897
    %v4333 = vunpack.c.l.b16 %v2898
    %v4334 = vunpack.c.h.b16 %v2898
    %v4335 = vunpack.c.l.b16 %v2899
    %v4336 = vunpack.c.l.b16 %v2900
    %v4337 = vunpack.c.h.b16 %v2900
    %v4338 = vunpack.c.l.b16 %v2901
    %v4339 = vunpack.c.h.b16 %v2901
    %v4340 = vunpack.c.l.b16 %v2902
    %v4341 = vunpack.c.h.b16 %v2902
    %v4342 = vunpack.c.l.b16 %v2903
    %v4343 = vunpack.c.l.b16 %v2904
    %v4344 = vunpack.c.h.b16 %v2904
    %v4345 = vunpack.c.l.b16 %v2905
    %v4346 = vunpack.c.h.b16 %v2905
    %v4347 = vunpack.c.l.b16 %v2906
    %v4348 = vunpack.c.h.b16 %v2906
    %v4349 = vunpack.c.l.b16 %v2907
    %v4350 = vunpack.c.l.b16 %v2908
    %v4351 = vunpack.c.h.b16 %v2908
    %v4352 = vunpack.c.l.b16 %v2909
    %v4353 = vunpack.c.h.b16 %v2909
    %v4354 = vunpack.c.l.b16 %v2910
    %v4355 = vunpack.c.h.b16 %v2910
    %v4356 = vunpack.c.l.b16 %v2911
    %v4357 = vpack.c.b16 %v3468, %v3461
    %v4358 = vpack.c.b16 %v3469, %v3462
    %v4359 = vpack.c.b16 %v3470, %v3463
    %v4360 = vpack.c.b16 %v3471, %v3464
    %v4361 = vpack.c.b16 %v3472, %v3465
    %v4362 = vpack.c.b16 %v3473, %v3466
    %v4363 = vpack.c.b16 %v3474, %v3467
    %v4364 = vpack.c.b16 %v3482, %v3475
    %v4365 = vpack.c.b16 %v3483, %v3476
    %v4366 = vpack.c.b16 %v3484, %v3477
    %v4367 = vpack.c.b16 %v3485, %v3478
    %v4368 = vpack.c.b16 %v3486, %v3479
    %v4369 = vpack.c.b16 %v3487, %v3480
    %v4370 = vpack.c.b16 %v3488, %v3481
    %v4371 = vpack.c.b16 %v3496, %v3489
    %v4372 = vpack.c.b16 %v3497, %v3490
    %v4373 = vpack.c.b16 %v3498, %v3491
    %v4374 = vpack.c.b16 %v3499, %v3492
    %v4375 = vpack.c.b16 %v3500, %v3493
    %v4376 = vpack.c.b16 %v3501, %v3494
    %v4377 = vpack.c.b16 %v3502, %v3495
    %v4378 = vpack.c.b16 %v3510, %v3503
    %v4379 = vpack.c.b16 %v3511, %v3504
    %v4380 = vpack.c.b16 %v3512, %v3505
    %v4381 = vpack.c.b16 %v3513, %v3506
    %v4382 = vpack.c.b16 %v3514, %v3507
    %v4383 = vpack.c.b16 %v3515, %v3508
    %v4384 = vpack.c.b16 %v3516, %v3509
    %v4385 = vpack.c.b16 %v3524, %v3517
    %v4386 = vpack.c.b16 %v3525, %v3518
    %v4387 = vpack.c.b16 %v3526, %v3519
    %v4388 = vpack.c.b16 %v3527, %v3520
    %v4389 = vpack.c.b16 %v3528, %v3521
    %v4390 = vpack.c.b16 %v3529, %v3522
    %v4391 = vpack.c.b16 %v3530, %v3523
    %v4392 = vpack.c.b16 %v3538, %v3531
    %v4393 = vpack.c.b16 %v3539, %v3532
    %v4394 = vpack.c.b16 %v3540, %v3533
    %v4395 = vpack.c.b16 %v3541, %v3534
    %v4396 = vpack.c.b16 %v3542, %v3535
    %v4397 = vpack.c.b16 %v3543, %v3536
    %v4398 = vpack.c.b16 %v3544, %v3537
    %v4399 = vpack.c.b16 %v3552, %v3545
    %v4400 = vpack.c.b16 %v3553, %v3546
    %v4401 = vpack.c.b16 %v3554, %v3547
    %v4402 = vpack.c.b16 %v3555, %v3548
    %v4403 = vpack.c.b16 %v3556, %v3549
    %v4404 = vpack.c.b16 %v3557, %v3550
    %v4405 = vpack.c.b16 %v3558, %v3551
    %v4406 = vpack.c.b16 %v3566, %v3559
    %v4407 = vpack.c.b16 %v3567, %v3560
    %v4408 = vpack.c.b16 %v3568, %v3561
    %v4409 = vpack.c.b16 %v3569, %v3562
    %v4410 = vpack.c.b16 %v3570, %v3563
    %v4411 = vpack.c.b16 %v3571, %v3564
    %v4412 = vpack.c.b16 %v3572, %v3565
    %v4413 = vpack.c.b16 %v3580, %v3573
    %v4414 = vpack.c.b16 %v3581, %v3574
    %v4415 = vpack.c.b16 %v3582, %v3575
    %v4416 = vpack.c.b16 %v3583, %v3576
    %v4417 = vpack.c.b16 %v3584, %v3577
    %v4418 = vpack.c.b16 %v3585, %v3578
    %v4419 = vpack.c.b16 %v3586, %v3579
    %v4420 = vpack.c.b16 %v3594, %v3587
    %v4421 = vpack.c.b16 %v3595, %v3588
    %v4422 = vpack.c.b16 %v3596, %v3589
    %v4423 = vpack.c.b16 %v3597, %v3590
    %v4424 = vpack.c.b16 %v3598, %v3591
    %v4425 = vpack.c.b16 %v3599, %v3592
    %v4426 = vpack.c.b16 %v3600, %v3593
    %v4427 = vpack.c.b16 %v3608, %v3601
    %v4428 = vpack.c.b16 %v3609, %v3602
    %v4429 = vpack.c.b16 %v3610, %v3603
    %v4430 = vpack.c.b16 %v3611, %v3604
    %v4431 = vpack.c.b16 %v3612, %v3605
    %v4432 = vpack.c.b16 %v3613, %v3606
    %v4433 = vpack.c.b16 %v3614, %v3607
    %v4434 = vpack.c.b16 %v3622, %v3615
    %v4435 = vpack.c.b16 %v3623, %v3616
    %v4436 = vpack.c.b16 %v3624, %v3617
    %v4437 = vpack.c.b16 %v3625, %v3618
    %v4438 = vpack.c.b16 %v3626, %v3619
    %v4439 = vpack.c.b16 %v3627, %v3620
    %v4440 = vpack.c.b16 %v3628, %v3621
    %v4441 = vpack.c.b16 %v3636, %v3629
    %v4442 = vpack.c.b16 %v3637, %v3630
    %v4443 = vpack.c.b16 %v3638, %v3631
    %v4444 = vpack.c.b16 %v3639, %v3632
    %v4445 = vpack.c.b16 %v3640, %v3633
    %v4446 = vpack.c.b16 %v3641, %v3634
    %v4447 = vpack.c.b16 %v3642, %v3635
    %v4448 = vpack.c.b16 %v3650, %v3643
    %v4449 = vpack.c.b16 %v3651, %v3644
    %v4450 = vpack.c.b16 %v3652, %v3645
    %v4451 = vpack.c.b16 %v3653, %v3646
    %v4452 = vpack.c.b16 %v3654, %v3647
    %v4453 = vpack.c.b16 %v3655, %v3648
    %v4454 = vpack.c.b16 %v3656, %v3649
    %v4455 = vpack.c.b16 %v3664, %v3657
    %v4456 = vpack.c.b16 %v3665, %v3658
    %v4457 = vpack.c.b16 %v3666, %v3659
    %v4458 = vpack.c.b16 %v3667, %v3660
    %v4459 = vpack.c.b16 %v3668, %v3661
    %v4460 = vpack.c.b16 %v3669, %v3662
    %v4461 = vpack.c.b16 %v3670, %v3663
    %v4462 = vpack.c.b16 %v3678, %v3671
    %v4463 = vpack.c.b16 %v3679, %v3672
    %v4464 = vpack.c.b16 %v3680, %v3673
    %v4465 = vpack.c.b16 %v3681, %v3674
    %v4466 = vpack.c.b16 %v3682, %v3675
    %v4467 = vpack.c.b16 %v3683, %v3676
    %v4468 = vpack.c.b16 %v3684, %v3677
    %v4469 = vpack.c.b16 %v3692, %v3685
    %v4470 = vpack.c.b16 %v3693, %v3686
    %v4471 = vpack.c.b16 %v3694, %v3687
    %v4472 = vpack.c.b16 %v3695, %v3688
    %v4473 = vpack.c.b16 %v3696, %v3689
    %v4474 = vpack.c.b16 %v3697, %v3690
    %v4475 = vpack.c.b16 %v3698, %v3691
    %v4476 = vpack.c.b16 %v3706, %v3699
    %v4477 = vpack.c.b16 %v3707, %v3700
    %v4478 = vpack.c.b16 %v3708, %v3701
    %v4479 = vpack.c.b16 %v3709, %v3702
    %v4480 = vpack.c.b16 %v3710, %v3703
    %v4481 = vpack.c.b16 %v3711, %v3704
    %v4482 = vpack.c.b16 %v3712, %v3705
    %v4483 = vpack.c.b16 %v3720, %v3713
    %v4484 = vpack.c.b16 %v3721, %v3714
    %v4485 = vpack.c.b16 %v3722, %v3715
    %v4486 = vpack.c.b16 %v3723, %v3716
    %v4487 = vpack.c.b16 %v3724, %v3717
    %v4488 = vpack.c.b16 %v3725, %v3718
    %v4489 = vpack.c.b16 %v3726, %v3719
    %v4490 = vpack.c.b16 %v3734, %v3727
    %v4491 = vpack.c.b16 %v3735, %v3728
    %v4492 = vpack.c.b16 %v3736, %v3729
    %v4493 = vpack.c.b16 %v3737, %v3730
    %v4494 = vpack.c.b16 %v3738, %v3731
    %v4495 = vpack.c.b16 %v3739, %v3732
    %v4496 = vpack.c.b16 %v3740, %v3733
    %v4497 = vpack.c.b16 %v3748, %v3741
    %v4498 = vpack.c.b16 %v3749, %v3742
    %v4499 = vpack.c.b16 %v3750, %v3743
    %v4500 = vpack.c.b16 %v3751, %v3744
    %v4501 = vpack.c.b16 %v3752, %v3745
    %v4502 = vpack.c.b16 %v3753, %v3746
    %v4503 = vpack.c.b16 %v3754, %v3747
    %v4504 = vpack.c.b16 %v3762, %v3755
    %v4505 = vpack.c.b16 %v3763, %v3756
    %v4506 = vpack.c.b16 %v3764, %v3757
    %v4507 = vpack.c.b16 %v3765, %v3758
    %v4508 = vpack.c.b16 %v3766, %v3759
    %v4509 = vpack.c.b16 %v3767, %v3760
    %v4510 = vpack.c.b16 %v3768, %v3761
    %v4511 = vpack.c.b16 %v3776, %v3769
    %v4512 = vpack.c.b16 %v3777, %v3770
    %v4513 = vpack.c.b16 %v3778, %v3771
    %v4514 = vpack.c.b16 %v3779, %v3772
    %v4515 = vpack.c.b16 %v3780, %v3773
    %v4516 = vpack.c.b16 %v3781, %v3774
    %v4517 = vpack.c.b16 %v3782, %v3775
    %v4518 = vpack.c.b16 %v3790, %v3783
    %v4519 = vpack.c.b16 %v3791, %v3784
    %v4520 = vpack.c.b16 %v3792, %v3785
    %v4521 = vpack.c.b16 %v3793, %v3786
    %v4522 = vpack.c.b16 %v3794, %v3787
    %v4523 = vpack.c.b16 %v3795, %v3788
    %v4524 = vpack.c.b16 %v3796, %v3789
    %v4525 = vpack.c.b16 %v3804, %v3797
    %v4526 = vpack.c.b16 %v3805, %v3798
    %v4527 = vpack.c.b16 %v3806, %v3799
    %v4528 = vpack.c.b16 %v3807, %v3800
    %v4529 = vpack.c.b16 %v3808, %v3801
    %v4530 = vpack.c.b16 %v3809, %v3802
    %v4531 = vpack.c.b16 %v3810, %v3803
    %v4532 = vpack.c.b16 %v3818, %v3811
    %v4533 = vpack.c.b16 %v3819, %v3812
    %v4534 = vpack.c.b16 %v3820, %v3813
    %v4535 = vpack.c.b16 %v3821, %v3814
    %v4536 = vpack.c.b16 %v3822, %v3815
    %v4537 = vpack.c.b16 %v3823, %v3816
    %v4538 = vpack.c.b16 %v3824, %v3817
    %v4539 = vpack.c.b16 %v3832, %v3825
    %v4540 = vpack.c.b16 %v3833, %v3826
    %v4541 = vpack.c.b16 %v3834, %v3827
    %v4542 = vpack.c.b16 %v3835, %v3828
    %v4543 = vpack.c.b16 %v3836, %v3829
    %v4544 = vpack.c.b16 %v3837, %v3830
    %v4545 = vpack.c.b16 %v3838, %v3831
    %v4546 = vpack.c.b16 %v3846, %v3839
    %v4547 = vpack.c.b16 %v3847, %v3840
    %v4548 = vpack.c.b16 %v3848, %v3841
    %v4549 = vpack.c.b16 %v3849, %v3842
    %v4550 = vpack.c.b16 %v3850, %v3843
    %v4551 = vpack.c.b16 %v3851, %v3844
    %v4552 = vpack.c.b16 %v3852, %v3845
    %v4553 = vpack.c.b16 %v3860, %v3853
    %v4554 = vpack.c.b16 %v3861, %v3854
    %v4555 = vpack.c.b16 %v3862, %v3855
    %v4556 = vpack.c.b16 %v3863, %v3856
    %v4557 = vpack.c.b16 %v3864, %v3857
    %v4558 = vpack.c.b16 %v3865, %v3858
    %v4559 = vpack.c.b16 %v3866, %v3859
    %v4560 = vpack.c.b16 %v3874, %v3867
    %v4561 = vpack.c.b16 %v3875, %v3868
    %v4562 = vpack.c.b16 %v3876, %v3869
    %v4563 = vpack.c.b16 %v3877, %v3870
    %v4564 = vpack.c.b16 %v3878, %v3871
    %v4565 = vpack.c.b16 %v3879, %v3872
    %v4566 = vpack.c.b16 %v3880, %v3873
    %v4567 = vpack.c.b16 %v3888, %v3881
    %v4568 = vpack.c.b16 %v3889, %v3882
    %v4569 = vpack.c.b16 %v3890, %v3883
    %v4570 = vpack.c.b16 %v3891, %v3884
    %v4571 = vpack.c.b16 %v3892, %v3885
    %v4572 = vpack.c.b16 %v3893, %v3886
    %v4573 = vpack.c.b16 %v3894, %v3887
    %v4574 = vpack.c.b16 %v3902, %v3895
    %v4575 = vpack.c.b16 %v3903, %v3896
    %v4576 = vpack.c.b16 %v3904, %v3897
    %v4577 = vpack.c.b16 %v3905, %v3898
    %v4578 = vpack.c.b16 %v3906, %v3899
    %v4579 = vpack.c.b16 %v3907, %v3900
    %v4580 = vpack.c.b16 %v3908, %v3901
    %v4581 = vpack.c.b16 %v3916, %v3909
    %v4582 = vpack.c.b16 %v3917, %v3910
    %v4583 = vpack.c.b16 %v3918, %v3911
    %v4584 = vpack.c.b16 %v3919, %v3912
    %v4585 = vpack.c.b16 %v3920, %v3913
    %v4586 = vpack.c.b16 %v3921, %v3914
    %v4587 = vpack.c.b16 %v3922, %v3915
    %v4588 = vpack.c.b16 %v3930, %v3923
    %v4589 = vpack.c.b16 %v3931, %v3924
    %v4590 = vpack.c.b16 %v3932, %v3925
    %v4591 = vpack.c.b16 %v3933, %v3926
    %v4592 = vpack.c.b16 %v3934, %v3927
    %v4593 = vpack.c.b16 %v3935, %v3928
    %v4594 = vpack.c.b16 %v3936, %v3929
    %v4595 = vpack.c.b16 %v3944, %v3937
    %v4596 = vpack.c.b16 %v3945, %v3938
    %v4597 = vpack.c.b16 %v3946, %v3939
    %v4598 = vpack.c.b16 %v3947, %v3940
    %v4599 = vpack.c.b16 %v3948, %v3941
    %v4600 = vpack.c.b16 %v3949, %v3942
    %v4601 = vpack.c.b16 %v3950, %v3943
    %v4602 = vpack.c.b16 %v3958, %v3951
    %v4603 = vpack.c.b16 %v3959, %v3952
    %v4604 = vpack.c.b16 %v3960, %v3953
    %v4605 = vpack.c.b16 %v3961, %v3954
    %v4606 = vpack.c.b16 %v3962, %v3955
    %v4607 = vpack.c.b16 %v3963, %v3956
    %v4608 = vpack.c.b16 %v3964, %v3957
    %v4609 = vpack.c.b16 %v3972, %v3965
    %v4610 = vpack.c.b16 %v3973, %v3966
    %v4611 = vpack.c.b16 %v3974, %v3967
    %v4612 = vpack.c.b16 %v3975, %v3968
    %v4613 = vpack.c.b16 %v3976, %v3969
    %v4614 = vpack.c.b16 %v3977, %v3970
    %v4615 = vpack.c.b16 %v3978, %v3971
    %v4616 = vpack.c.b16 %v3986, %v3979
    %v4617 = vpack.c.b16 %v3987, %v3980
    %v4618 = vpack.c.b16 %v3988, %v3981
    %v4619 = vpack.c.b16 %v3989, %v3982
    %v4620 = vpack.c.b16 %v3990, %v3983
    %v4621 = vpack.c.b16 %v3991, %v3984
    %v4622 = vpack.c.b16 %v3992, %v3985
    %v4623 = vpack.c.b16 %v4000, %v3993
    %v4624 = vpack.c.b16 %v4001, %v3994
    %v4625 = vpack.c.b16 %v4002, %v3995
    %v4626 = vpack.c.b16 %v4003, %v3996
    %v4627 = vpack.c.b16 %v4004, %v3997
    %v4628 = vpack.c.b16 %v4005, %v3998
    %v4629 = vpack.c.b16 %v4006, %v3999
    %v4630 = vpack.c.b16 %v4014, %v4007
    %v4631 = vpack.c.b16 %v4015, %v4008
    %v4632 = vpack.c.b16 %v4016, %v4009
    %v4633 = vpack.c.b16 %v4017, %v4010
    %v4634 = vpack.c.b16 %v4018, %v4011
    %v4635 = vpack.c.b16 %v4019, %v4012
    %v4636 = vpack.c.b16 %v4020, %v4013
    %v4637 = vpack.c.b16 %v4028, %v4021
    %v4638 = vpack.c.b16 %v4029, %v4022
    %v4639 = vpack.c.b16 %v4030, %v4023
    %v4640 = vpack.c.b16 %v4031, %v4024
    %v4641 = vpack.c.b16 %v4032, %v4025
    %v4642 = vpack.c.b16 %v4033, %v4026
    %v4643 = vpack.c.b16 %v4034, %v4027
    %v4644 = vpack.c.b16 %v4042, %v4035
    %v4645 = vpack.c.b16 %v4043, %v4036
    %v4646 = vpack.c.b16 %v4044, %v4037
    %v4647 = vpack.c.b16 %v4045, %v4038
    %v4648 = vpack.c.b16 %v4046, %v4039
    %v4649 = vpack.c.b16 %v4047, %v4040
    %v4650 = vpack.c.b16 %v4048, %v4041
    %v4651 = vpack.c.b16 %v4056, %v4049
    %v4652 = vpack.c.b16 %v4057, %v4050
    %v4653 = vpack.c.b16 %v4058, %v4051
    %v4654 = vpack.c.b16 %v4059, %v4052
    %v4655 = vpack.c.b16 %v4060, %v4053
    %v4656 = vpack.c.b16 %v4061, %v4054
    %v4657 = vpack.c.b16 %v4062, %v4055
    %v4658 = vpack.c.b16 %v4070, %v4063
    %v4659 = vpack.c.b16 %v4071, %v4064
    %v4660 = vpack.c.b16 %v4072, %v4065
    %v4661 = vpack.c.b16 %v4073, %v4066
    %v4662 = vpack.c.b16 %v4074, %v4067
    %v4663 = vpack.c.b16 %v4075, %v4068
    %v4664 = vpack.c.b16 %v4076, %v4069
    %v4665 = vpack.c.b16 %v4084, %v4077
    %v4666 = vpack.c.b16 %v4085, %v4078
    %v4667 = vpack.c.b16 %v4086, %v4079
    %v4668 = vpack.c.b16 %v4087, %v4080
    %v4669 = vpack.c.b16 %v4088, %v4081
    %v4670 = vpack.c.b16 %v4089, %v4082
    %v4671 = vpack.c.b16 %v4090, %v4083
    %v4672 = vpack.c.b16 %v4098, %v4091
    %v4673 = vpack.c.b16 %v4099, %v4092
    %v4674 = vpack.c.b16 %v4100, %v4093
    %v4675 = vpack.c.b16 %v4101, %v4094
    %v4676 = vpack.c.b16 %v4102, %v4095
    %v4677 = vpack.c.b16 %v4103, %v4096
    %v4678 = vpack.c.b16 %v4104, %v4097
    %v4679 = vpack.c.b16 %v4112, %v4105
    %v4680 = vpack.c.b16 %v4113, %v4106
    %v4681 = vpack.c.b16 %v4114, %v4107
    %v4682 = vpack.c.b16 %v4115, %v4108
    %v4683 = vpack.c.b16 %v4116, %v4109
    %v4684 = vpack.c.b16 %v4117, %v4110
    %v4685 = vpack.c.b16 %v4118, %v4111
    %v4686 = vpack.c.b16 %v4126, %v4119
    %v4687 = vpack.c.b16 %v4127, %v4120
    %v4688 = vpack.c.b16 %v4128, %v4121
    %v4689 = vpack.c.b16 %v4129, %v4122
    %v4690 = vpack.c.b16 %v4130, %v4123
    %v4691 = vpack.c.b16 %v4131, %v4124
    %v4692 = vpack.c.b16 %v4132, %v4125
    %v4693 = vpack.c.b16 %v4140, %v4133
    %v4694 = vpack.c.b16 %v4141, %v4134
    %v4695 = vpack.c.b16 %v4142, %v4135
    %v4696 = vpack.c.b16 %v4143, %v4136
    %v4697 = vpack.c.b16 %v4144, %v4137
    %v4698 = vpack.c.b16 %v4145, %v4138
    %v4699 = vpack.c.b16 %v4146, %v4139
    %v4700 = vpack.c.b16 %v4154, %v4147
    %v4701 = vpack.c.b16 %v4155, %v4148
    %v4702 = vpack.c.b16 %v4156, %v4149
    %v4703 = vpack.c.b16 %v4157, %v4150
    %v4704 = vpack.c.b16 %v4158, %v4151
    %v4705 = vpack.c.b16 %v4159, %v4152
    %v4706 = vpack.c.b16 %v4160, %v4153
    %v4707 = vpack.c.b16 %v4168, %v4161
    %v4708 = vpack.c.b16 %v4169, %v4162
    %v4709 = vpack.c.b16 %v4170, %v4163
    %v4710 = vpack.c.b16 %v4171, %v4164
    %v4711 = vpack.c.b16 %v4172, %v4165
    %v4712 = vpack.c.b16 %v4173, %v4166
    %v4713 = vpack.c.b16 %v4174, %v4167
    %v4714 = vpack.c.b16 %v4182, %v4175
    %v4715 = vpack.c.b16 %v4183, %v4176
    %v4716 = vpack.c.b16 %v4184, %v4177
    %v4717 = vpack.c.b16 %v4185, %v4178
    %v4718 = vpack.c.b16 %v4186, %v4179
    %v4719 = vpack.c.b16 %v4187, %v4180
    %v4720 = vpack.c.b16 %v4188, %v4181
    %v4721 = vpack.c.b16 %v4196, %v4189
    %v4722 = vpack.c.b16 %v4197, %v4190
    %v4723 = vpack.c.b16 %v4198, %v4191
    %v4724 = vpack.c.b16 %v4199, %v4192
    %v4725 = vpack.c.b16 %v4200, %v4193
    %v4726 = vpack.c.b16 %v4201, %v4194
    %v4727 = vpack.c.b16 %v4202, %v4195
    %v4728 = vpack.c.b16 %v4210, %v4203
    %v4729 = vpack.c.b16 %v4211, %v4204
    %v4730 = vpack.c.b16 %v4212, %v4205
    %v4731 = vpack.c.b16 %v4213, %v4206
    %v4732 = vpack.c.b16 %v4214, %v4207
    %v4733 = vpack.c.b16 %v4215, %v4208
    %v4734 = vpack.c.b16 %v4216, %v4209
    %v4735 = vpack.c.b16 %v4224, %v4217
    %v4736 = vpack.c.b16 %v4225, %v4218
    %v4737 = vpack.c.b16 %v4226, %v4219
    %v4738 = vpack.c.b16 %v4227, %v4220
    %v4739 = vpack.c.b16 %v4228, %v4221
    %v4740 = vpack.c.b16 %v4229, %v4222
    %v4741 = vpack.c.b16 %v4230, %v4223
    %v4742 = vpack.c.b16 %v4238, %v4231
    %v4743 = vpack.c.b16 %v4239, %v4232
    %v4744 = vpack.c.b16 %v4240, %v4233
    %v4745 = vpack.c.b16 %v4241, %v4234
    %v4746 = vpack.c.b16 %v4242, %v4235
    %v4747 = vpack.c.b16 %v4243, %v4236
    %v4748 = vpack.c.b16 %v4244, %v4237
    %v4749 = vpack.c.b16 %v4252, %v4245
    %v4750 = vpack.c.b16 %v4253, %v4246
    %v4751 = vpack.c.b16 %v4254, %v4247
    %v4752 = vpack.c.b16 %v4255, %v4248
    %v4753 = vpack.c.b16 %v4256, %v4249
    %v4754 = vpack.c.b16 %v4257, %v4250
    %v4755 = vpack.c.b16 %v4258, %v4251
    %v4756 = vpack.c.b16 %v4266, %v4259
    %v4757 = vpack.c.b16 %v4267, %v4260
    %v4758 = vpack.c.b16 %v4268, %v4261
    %v4759 = vpack.c.b16 %v4269, %v4262
    %v4760 = vpack.c.b16 %v4270, %v4263
    %v4761 = vpack.c.b16 %v4271, %v4264
    %v4762 = vpack.c.b16 %v4272, %v4265
    %v4763 = vpack.c.b16 %v4280, %v4273
    %v4764 = vpack.c.b16 %v4281, %v4274
    %v4765 = vpack.c.b16 %v4282, %v4275
    %v4766 = vpack.c.b16 %v4283, %v4276
    %v4767 = vpack.c.b16 %v4284, %v4277
    %v4768 = vpack.c.b16 %v4285, %v4278
    %v4769 = vpack.c.b16 %v4286, %v4279
    %v4770 = vpack.c.b16 %v4294, %v4287
    %v4771 = vpack.c.b16 %v4295, %v4288
    %v4772 = vpack.c.b16 %v4296, %v4289
    %v4773 = vpack.c.b16 %v4297, %v4290
    %v4774 = vpack.c.b16 %v4298, %v4291
    %v4775 = vpack.c.b16 %v4299, %v4292
    %v4776 = vpack.c.b16 %v4300, %v4293
    %v4777 = vpack.c.b16 %v4308, %v4301
    %v4778 = vpack.c.b16 %v4309, %v4302
    %v4779 = vpack.c.b16 %v4310, %v4303
    %v4780 = vpack.c.b16 %v4311, %v4304
    %v4781 = vpack.c.b16 %v4312, %v4305
    %v4782 = vpack.c.b16 %v4313, %v4306
    %v4783 = vpack.c.b16 %v4314, %v4307
    %v4784 = vpack.c.b16 %v4322, %v4315
    %v4785 = vpack.c.b16 %v4323, %v4316
    %v4786 = vpack.c.b16 %v4324, %v4317
    %v4787 = vpack.c.b16 %v4325, %v4318
    %v4788 = vpack.c.b16 %v4326, %v4319
    %v4789 = vpack.c.b16 %v4327, %v4320
    %v4790 = vpack.c.b16 %v4328, %v4321
    %v4791 = vpack.c.b16 %v4336, %v4329
    %v4792 = vpack.c.b16 %v4337, %v4330
    %v4793 = vpack.c.b16 %v4338, %v4331
    %v4794 = vpack.c.b16 %v4339, %v4332
    %v4795 = vpack.c.b16 %v4340, %v4333
    %v4796 = vpack.c.b16 %v4341, %v4334
    %v4797 = vpack.c.b16 %v4342, %v4335
    %v4798 = vpack.c.b16 %v4350, %v4343
    %v4799 = vpack.c.b16 %v4351, %v4344
    %v4800 = vpack.c.b16 %v4352, %v4345
    %v4801 = vpack.c.b16 %v4353, %v4346
    %v4802 = vpack.c.b16 %v4354, %v4347
    %v4803 = vpack.c.b16 %v4355, %v4348
    %v4804 = vpack.c.b16 %v4356, %v4349
    %5253 = vmatprep.subr.bf16.mxu0 %v4407
    %5254 = vmatpush1.bf16.msra.mxu0 %v4406
    %5255 = vmatprep.subr.bf16.mxu0 %v4400
    %5256 = vmatpush1.bf16.msra.mxu0 %v4399
    %5257 = vmatprep.subr.bf16.mxu0 %v4393
    %5258 = vmatpush1.bf16.msra.mxu0 %v4392
    %5259 = vmatprep.subr.bf16.mxu0 %v4386
    %5260 = vmatpush1.bf16.msra.mxu0 %v4385
    %5261 = vmatprep.subr.bf16.mxu0 %v4379
    %5262 = vmatpush1.bf16.msra.mxu0 %v4378
    %5263 = vmatprep.subr.bf16.mxu0 %v4372
    %5264 = vmatpush1.bf16.msra.mxu0 %v4371
    %5265 = vmatprep.subr.bf16.mxu0 %v4365
    %5266 = vmatpush1.bf16.msra.mxu0 %v4364
    %5267 = vmatprep.subr.bf16.mxu0 %v4358
    %5268 = vmatpush1.bf16.msra.mxu0 %v4357
    %5269 = vmatprep.subr.bf16.mxu0 %v4463
    %5270 = vmatpush2.bf16.msra.mxu0 %v4462
    %5271 = vmatprep.subr.bf16.mxu0 %v4456
    %5272 = vmatpush2.bf16.msra.mxu0 %v4455
    %5273 = vmatprep.subr.bf16.mxu0 %v4449
    %5274 = vmatpush2.bf16.msra.mxu0 %v4448
    %5275 = vmatprep.subr.bf16.mxu0 %v4442
    %5276 = vmatpush2.bf16.msra.mxu0 %v4441
    %5277 = vmatprep.subr.bf16.mxu0 %v4435
    %5278 = vmatpush2.bf16.msra.mxu0 %v4434
    %5279 = vmatprep.subr.bf16.mxu0 %v4428
    %5280 = vmatpush2.bf16.msra.mxu0 %v4427
    %5281 = vmatprep.subr.bf16.mxu0 %v4421
    %5282 = vmatpush2.bf16.msra.mxu0 %v4420
    %5283 = vmatprep.subr.bf16.mxu0 %v4414
    %5284 = vmatpush2.bf16.msra.mxu0 %v4413
    %5285 = vmatprep.mubr.bf16.mxu0 %v2393
    %5286 = vmatmul.mubr.bf16.gmra.mxu0 %v2392
    %v5287 = vpop.f32.mrf.mxu0
    %v5288 = vadd.f32 %v2917, %v5287
    %v5289 = vpop.f32.mrf.mxu0
    %v5290 = vadd.f32 %v2921, %v5289
    %v5291 = vpop.f32.mrf.mxu0
    %v5292 = vpop.f32.mrf.mxu0
    %5293 = vdwg.mxu0
    %5294 = vmatprep.subr.bf16.mxu0 %v4519
    %5295 = vmatpush1.bf16.msra.mxu0 %v4518
    %5296 = vmatprep.subr.bf16.mxu0 %v4512
    %5297 = vmatpush1.bf16.msra.mxu0 %v4511
    %5298 = vmatprep.subr.bf16.mxu0 %v4505
    %5299 = vmatpush1.bf16.msra.mxu0 %v4504
    %5300 = vmatprep.subr.bf16.mxu0 %v4498
    %5301 = vmatpush1.bf16.msra.mxu0 %v4497
    %5302 = vmatprep.subr.bf16.mxu0 %v4491
    %5303 = vmatpush1.bf16.msra.mxu0 %v4490
    %5304 = vmatprep.subr.bf16.mxu0 %v4484
    %5305 = vmatpush1.bf16.msra.mxu0 %v4483
    %5306 = vmatprep.subr.bf16.mxu0 %v4477
    %5307 = vmatpush1.bf16.msra.mxu0 %v4476
    %5308 = vmatprep.subr.bf16.mxu0 %v4470
    %5309 = vmatpush1.bf16.msra.mxu0 %v4469
    %5310 = vmatprep.subr.bf16.mxu0 %v4575
    %5311 = vmatpush2.bf16.msra.mxu0 %v4574
    %5312 = vmatprep.subr.bf16.mxu0 %v4568
    %5313 = vmatpush2.bf16.msra.mxu0 %v4567
    %5314 = vmatprep.subr.bf16.mxu0 %v4561
    %5315 = vmatpush2.bf16.msra.mxu0 %v4560
    %5316 = vmatprep.subr.bf16.mxu0 %v4554
    %5317 = vmatpush2.bf16.msra.mxu0 %v4553
    %5318 = vmatprep.subr.bf16.mxu0 %v4547
    %5319 = vmatpush2.bf16.msra.mxu0 %v4546
    %5320 = vmatprep.subr.bf16.mxu0 %v4540
    %5321 = vmatpush2.bf16.msra.mxu0 %v4539
    %5322 = vmatprep.subr.bf16.mxu0 %v4533
    %5323 = vmatpush2.bf16.msra.mxu0 %v4532
    %5324 = vmatprep.subr.bf16.mxu0 %v4526
    %5325 = vmatpush2.bf16.msra.mxu0 %v4525
    %5326 = vmatprep.mubr.bf16.mxu0 %v2395
    %5327 = vmatmul.mubr.bf16.gmra.mxu0 %v2394
    %v5328 = vpop.f32.mrf.mxu0
    %v5329 = vadd.f32 %v5288, %v5328
    %v5330 = vpop.f32.mrf.mxu0
    %v5331 = vadd.f32 %v5290, %v5330
    %v5332 = vpop.f32.mrf.mxu0
    %v5333 = vpop.f32.mrf.mxu0
    %5334 = vdwg.mxu0
    %5335 = vmatprep.subr.bf16.mxu0 %v4631
    %5336 = vmatpush1.bf16.msra.mxu0 %v4630
    %5337 = vmatprep.subr.bf16.mxu0 %v4624
    %5338 = vmatpush1.bf16.msra.mxu0 %v4623
    %5339 = vmatprep.subr.bf16.mxu0 %v4617
    %5340 = vmatpush1.bf16.msra.mxu0 %v4616
    %5341 = vmatprep.subr.bf16.mxu0 %v4610
    %5342 = vmatpush1.bf16.msra.mxu0 %v4609
    %5343 = vmatprep.subr.bf16.mxu0 %v4603
    %5344 = vmatpush1.bf16.msra.mxu0 %v4602
    %5345 = vmatprep.subr.bf16.mxu0 %v4596
    %5346 = vmatpush1.bf16.msra.mxu0 %v4595
    %5347 = vmatprep.subr.bf16.mxu0 %v4589
    %5348 = vmatpush1.bf16.msra.mxu0 %v4588
    %5349 = vmatprep.subr.bf16.mxu0 %v4582
    %5350 = vmatpush1.bf16.msra.mxu0 %v4581
    %5351 = vmatprep.subr.bf16.mxu0 %v4687
    %5352 = vmatpush2.bf16.msra.mxu0 %v4686
    %5353 = vmatprep.subr.bf16.mxu0 %v4680
    %5354 = vmatpush2.bf16.msra.mxu0 %v4679
    %5355 = vmatprep.subr.bf16.mxu0 %v4673
    %5356 = vmatpush2.bf16.msra.mxu0 %v4672
    %5357 = vmatprep.subr.bf16.mxu0 %v4666
    %5358 = vmatpush2.bf16.msra.mxu0 %v4665
    %5359 = vmatprep.subr.bf16.mxu0 %v4659
    %5360 = vmatpush2.bf16.msra.mxu0 %v4658
    %5361 = vmatprep.subr.bf16.mxu0 %v4652
    %5362 = vmatpush2.bf16.msra.mxu0 %v4651
    %5363 = vmatprep.subr.bf16.mxu0 %v4645
    %5364 = vmatpush2.bf16.msra.mxu0 %v4644
    %5365 = vmatprep.subr.bf16.mxu0 %v4638
    %5366 = vmatpush2.bf16.msra.mxu0 %v4637
    %5367 = vmatprep.mubr.bf16.mxu0 %v2397
    %5368 = vmatmul.mubr.bf16.gmra.mxu0 %v2396
    %v5369 = vpop.f32.mrf.mxu0
    %v5370 = vadd.f32 %v5329, %v5369
    %v5371 = vpop.f32.mrf.mxu0
    %v5372 = vadd.f32 %v5331, %v5371
    %v5373 = vpop.f32.mrf.mxu0
    %v5374 = vpop.f32.mrf.mxu0
    %5375 = vdwg.mxu0
    %5376 = vmatprep.subr.bf16.mxu0 %v4743
    %5377 = vmatpush1.bf16.msra.mxu0 %v4742
    %5378 = vmatprep.subr.bf16.mxu0 %v4736
    %5379 = vmatpush1.bf16.msra.mxu0 %v4735
    %5380 = vmatprep.subr.bf16.mxu0 %v4729
    %5381 = vmatpush1.bf16.msra.mxu0 %v4728
    %5382 = vmatprep.subr.bf16.mxu0 %v4722
    %5383 = vmatpush1.bf16.msra.mxu0 %v4721
    %5384 = vmatprep.subr.bf16.mxu0 %v4715
    %5385 = vmatpush1.bf16.msra.mxu0 %v4714
    %5386 = vmatprep.subr.bf16.mxu0 %v4708
    %5387 = vmatpush1.bf16.msra.mxu0 %v4707
    %5388 = vmatprep.subr.bf16.mxu0 %v4701
    %5389 = vmatpush1.bf16.msra.mxu0 %v4700
    %5390 = vmatprep.subr.bf16.mxu0 %v4694
    %5391 = vmatpush1.bf16.msra.mxu0 %v4693
    %5392 = vmatprep.subr.bf16.mxu0 %v4799
    %5393 = vmatpush2.bf16.msra.mxu0 %v4798
    %5394 = vmatprep.subr.bf16.mxu0 %v4792
    %5395 = vmatpush2.bf16.msra.mxu0 %v4791
    %5396 = vmatprep.subr.bf16.mxu0 %v4785
    %5397 = vmatpush2.bf16.msra.mxu0 %v4784
    %5398 = vmatprep.subr.bf16.mxu0 %v4778
    %5399 = vmatpush2.bf16.msra.mxu0 %v4777
    %5400 = vmatprep.subr.bf16.mxu0 %v4771
    %5401 = vmatpush2.bf16.msra.mxu0 %v4770
    %5402 = vmatprep.subr.bf16.mxu0 %v4764
    %5403 = vmatpush2.bf16.msra.mxu0 %v4763
    %5404 = vmatprep.subr.bf16.mxu0 %v4757
    %5405 = vmatpush2.bf16.msra.mxu0 %v4756
    %5406 = vmatprep.subr.bf16.mxu0 %v4750
    %5407 = vmatpush2.bf16.msra.mxu0 %v4749
    %5408 = vmatprep.mubr.bf16.mxu0 %v2399
    %5409 = vmatmul.mubr.bf16.gmra.mxu0 %v2398
    %v5410 = vpop.f32.mrf.mxu0
    %v5411 = vadd.f32 %v5370, %v5410
    %v5412 = vpop.f32.mrf.mxu0
    %v5413 = vadd.f32 %v5372, %v5412
    %v5414 = vpop.f32.mrf.mxu0
    %v5415 = vpop.f32.mrf.mxu0
    %5416 = vdwg.mxu0
    %5417 = vmatprep.subr.bf16.mxu0 %v4409
    %5418 = vmatpush1.bf16.msra.mxu0 %v4408
    %5419 = vmatprep.subr.bf16.mxu0 %v4402
    %5420 = vmatpush1.bf16.msra.mxu0 %v4401
    %5421 = vmatprep.subr.bf16.mxu0 %v4395
    %5422 = vmatpush1.bf16.msra.mxu0 %v4394
    %5423 = vmatprep.subr.bf16.mxu0 %v4388
    %5424 = vmatpush1.bf16.msra.mxu0 %v4387
    %5425 = vmatprep.subr.bf16.mxu0 %v4381
    %5426 = vmatpush1.bf16.msra.mxu0 %v4380
    %5427 = vmatprep.subr.bf16.mxu0 %v4374
    %5428 = vmatpush1.bf16.msra.mxu0 %v4373
    %5429 = vmatprep.subr.bf16.mxu0 %v4367
    %5430 = vmatpush1.bf16.msra.mxu0 %v4366
    %5431 = vmatprep.subr.bf16.mxu0 %v4360
    %5432 = vmatpush1.bf16.msra.mxu0 %v4359
    %5433 = vmatprep.subr.bf16.mxu0 %v4465
    %5434 = vmatpush2.bf16.msra.mxu0 %v4464
    %5435 = vmatprep.subr.bf16.mxu0 %v4458
    %5436 = vmatpush2.bf16.msra.mxu0 %v4457
    %5437 = vmatprep.subr.bf16.mxu0 %v4451
    %5438 = vmatpush2.bf16.msra.mxu0 %v4450
    %5439 = vmatprep.subr.bf16.mxu0 %v4444
    %5440 = vmatpush2.bf16.msra.mxu0 %v4443
    %5441 = vmatprep.subr.bf16.mxu0 %v4437
    %5442 = vmatpush2.bf16.msra.mxu0 %v4436
    %5443 = vmatprep.subr.bf16.mxu0 %v4430
    %5444 = vmatpush2.bf16.msra.mxu0 %v4429
    %5445 = vmatprep.subr.bf16.mxu0 %v4423
    %5446 = vmatpush2.bf16.msra.mxu0 %v4422
    %5447 = vmatprep.subr.bf16.mxu0 %v4416
    %5448 = vmatpush2.bf16.msra.mxu0 %v4415
    %5449 = vmatprep.mubr.bf16.mxu0 %v2393
    %5450 = vmatmul.mubr.bf16.gmra.mxu0 %v2392
    %v5451 = vpop.f32.mrf.mxu0
    %v5452 = vadd.f32 %v2925, %v5451
    %v5453 = vpop.f32.mrf.mxu0
    %v5454 = vadd.f32 %v2929, %v5453
    %v5455 = vpop.f32.mrf.mxu0
    %v5456 = vpop.f32.mrf.mxu0
    %5457 = vdwg.mxu0
    %5458 = vmatprep.subr.bf16.mxu0 %v4521
    %5459 = vmatpush1.bf16.msra.mxu0 %v4520
    %5460 = vmatprep.subr.bf16.mxu0 %v4514
    %5461 = vmatpush1.bf16.msra.mxu0 %v4513
    %5462 = vmatprep.subr.bf16.mxu0 %v4507
    %5463 = vmatpush1.bf16.msra.mxu0 %v4506
    %5464 = vmatprep.subr.bf16.mxu0 %v4500
    %5465 = vmatpush1.bf16.msra.mxu0 %v4499
    %5466 = vmatprep.subr.bf16.mxu0 %v4493
    %5467 = vmatpush1.bf16.msra.mxu0 %v4492
    %5468 = vmatprep.subr.bf16.mxu0 %v4486
    %5469 = vmatpush1.bf16.msra.mxu0 %v4485
    %5470 = vmatprep.subr.bf16.mxu0 %v4479
    %5471 = vmatpush1.bf16.msra.mxu0 %v4478
    %5472 = vmatprep.subr.bf16.mxu0 %v4472
    %5473 = vmatpush1.bf16.msra.mxu0 %v4471
    %5474 = vmatprep.subr.bf16.mxu0 %v4577
    %5475 = vmatpush2.bf16.msra.mxu0 %v4576
    %5476 = vmatprep.subr.bf16.mxu0 %v4570
    %5477 = vmatpush2.bf16.msra.mxu0 %v4569
    %5478 = vmatprep.subr.bf16.mxu0 %v4563
    %5479 = vmatpush2.bf16.msra.mxu0 %v4562
    %5480 = vmatprep.subr.bf16.mxu0 %v4556
    %5481 = vmatpush2.bf16.msra.mxu0 %v4555
    %5482 = vmatprep.subr.bf16.mxu0 %v4549
    %5483 = vmatpush2.bf16.msra.mxu0 %v4548
    %5484 = vmatprep.subr.bf16.mxu0 %v4542
    %5485 = vmatpush2.bf16.msra.mxu0 %v4541
    %5486 = vmatprep.subr.bf16.mxu0 %v4535
    %5487 = vmatpush2.bf16.msra.mxu0 %v4534
    %5488 = vmatprep.subr.bf16.mxu0 %v4528
    %5489 = vmatpush2.bf16.msra.mxu0 %v4527
    %5490 = vmatprep.mubr.bf16.mxu0 %v2395
    %5491 = vmatmul.mubr.bf16.gmra.mxu0 %v2394
    %v5492 = vpop.f32.mrf.mxu0
    %v5493 = vadd.f32 %v5452, %v5492
    %v5494 = vpop.f32.mrf.mxu0
    %v5495 = vadd.f32 %v5454, %v5494
    %v5496 = vpop.f32.mrf.mxu0
    %v5497 = vpop.f32.mrf.mxu0
    %5498 = vdwg.mxu0
    %5499 = vmatprep.subr.bf16.mxu0 %v4633
    %5500 = vmatpush1.bf16.msra.mxu0 %v4632
    %5501 = vmatprep.subr.bf16.mxu0 %v4626
    %5502 = vmatpush1.bf16.msra.mxu0 %v4625
    %5503 = vmatprep.subr.bf16.mxu0 %v4619
    %5504 = vmatpush1.bf16.msra.mxu0 %v4618
    %5505 = vmatprep.subr.bf16.mxu0 %v4612
    %5506 = vmatpush1.bf16.msra.mxu0 %v4611
    %5507 = vmatprep.subr.bf16.mxu0 %v4605
    %5508 = vmatpush1.bf16.msra.mxu0 %v4604
    %5509 = vmatprep.subr.bf16.mxu0 %v4598
    %5510 = vmatpush1.bf16.msra.mxu0 %v4597
    %5511 = vmatprep.subr.bf16.mxu0 %v4591
    %5512 = vmatpush1.bf16.msra.mxu0 %v4590
    %5513 = vmatprep.subr.bf16.mxu0 %v4584
    %5514 = vmatpush1.bf16.msra.mxu0 %v4583
    %5515 = vmatprep.subr.bf16.mxu0 %v4689
    %5516 = vmatpush2.bf16.msra.mxu0 %v4688
    %5517 = vmatprep.subr.bf16.mxu0 %v4682
    %5518 = vmatpush2.bf16.msra.mxu0 %v4681
    %5519 = vmatprep.subr.bf16.mxu0 %v4675
    %5520 = vmatpush2.bf16.msra.mxu0 %v4674
    %5521 = vmatprep.subr.bf16.mxu0 %v4668
    %5522 = vmatpush2.bf16.msra.mxu0 %v4667
    %5523 = vmatprep.subr.bf16.mxu0 %v4661
    %5524 = vmatpush2.bf16.msra.mxu0 %v4660
    %5525 = vmatprep.subr.bf16.mxu0 %v4654
    %5526 = vmatpush2.bf16.msra.mxu0 %v4653
    %5527 = vmatprep.subr.bf16.mxu0 %v4647
    %5528 = vmatpush2.bf16.msra.mxu0 %v4646
    %5529 = vmatprep.subr.bf16.mxu0 %v4640
    %5530 = vmatpush2.bf16.msra.mxu0 %v4639
    %5531 = vmatprep.mubr.bf16.mxu0 %v2397
    %5532 = vmatmul.mubr.bf16.gmra.mxu0 %v2396
    %v5533 = vpop.f32.mrf.mxu0
    %v5534 = vadd.f32 %v5493, %v5533
    %v5535 = vpop.f32.mrf.mxu0
    %v5536 = vadd.f32 %v5495, %v5535
    %v5537 = vpop.f32.mrf.mxu0
    %v5538 = vpop.f32.mrf.mxu0
    %5539 = vdwg.mxu0
    %5540 = vmatprep.subr.bf16.mxu0 %v4745
    %5541 = vmatpush1.bf16.msra.mxu0 %v4744
    %5542 = vmatprep.subr.bf16.mxu0 %v4738
    %5543 = vmatpush1.bf16.msra.mxu0 %v4737
    %5544 = vmatprep.subr.bf16.mxu0 %v4731
    %5545 = vmatpush1.bf16.msra.mxu0 %v4730
    %5546 = vmatprep.subr.bf16.mxu0 %v4724
    %5547 = vmatpush1.bf16.msra.mxu0 %v4723
    %5548 = vmatprep.subr.bf16.mxu0 %v4717
    %5549 = vmatpush1.bf16.msra.mxu0 %v4716
    %5550 = vmatprep.subr.bf16.mxu0 %v4710
    %5551 = vmatpush1.bf16.msra.mxu0 %v4709
    %5552 = vmatprep.subr.bf16.mxu0 %v4703
    %5553 = vmatpush1.bf16.msra.mxu0 %v4702
    %5554 = vmatprep.subr.bf16.mxu0 %v4696
    %5555 = vmatpush1.bf16.msra.mxu0 %v4695
    %5556 = vmatprep.subr.bf16.mxu0 %v4801
    %5557 = vmatpush2.bf16.msra.mxu0 %v4800
    %5558 = vmatprep.subr.bf16.mxu0 %v4794
    %5559 = vmatpush2.bf16.msra.mxu0 %v4793
    %5560 = vmatprep.subr.bf16.mxu0 %v4787
    %5561 = vmatpush2.bf16.msra.mxu0 %v4786
    %5562 = vmatprep.subr.bf16.mxu0 %v4780
    %5563 = vmatpush2.bf16.msra.mxu0 %v4779
    %5564 = vmatprep.subr.bf16.mxu0 %v4773
    %5565 = vmatpush2.bf16.msra.mxu0 %v4772
    %5566 = vmatprep.subr.bf16.mxu0 %v4766
    %5567 = vmatpush2.bf16.msra.mxu0 %v4765
    %5568 = vmatprep.subr.bf16.mxu0 %v4759
    %5569 = vmatpush2.bf16.msra.mxu0 %v4758
    %5570 = vmatprep.subr.bf16.mxu0 %v4752
    %5571 = vmatpush2.bf16.msra.mxu0 %v4751
    %5572 = vmatprep.mubr.bf16.mxu0 %v2399
    %5573 = vmatmul.mubr.bf16.gmra.mxu0 %v2398
    %v5574 = vpop.f32.mrf.mxu0
    %v5575 = vadd.f32 %v5534, %v5574
    %v5576 = vpop.f32.mrf.mxu0
    %v5577 = vadd.f32 %v5536, %v5576
    %v5578 = vpop.f32.mrf.mxu0
    %v5579 = vpop.f32.mrf.mxu0
    %5580 = vdwg.mxu0
    %5581 = vmatprep.subr.bf16.mxu0 %v4411
    %5582 = vmatpush1.bf16.msra.mxu0 %v4410
    %5583 = vmatprep.subr.bf16.mxu0 %v4404
    %5584 = vmatpush1.bf16.msra.mxu0 %v4403
    %5585 = vmatprep.subr.bf16.mxu0 %v4397
    %5586 = vmatpush1.bf16.msra.mxu0 %v4396
    %5587 = vmatprep.subr.bf16.mxu0 %v4390
    %5588 = vmatpush1.bf16.msra.mxu0 %v4389
    %5589 = vmatprep.subr.bf16.mxu0 %v4383
    %5590 = vmatpush1.bf16.msra.mxu0 %v4382
    %5591 = vmatprep.subr.bf16.mxu0 %v4376
    %5592 = vmatpush1.bf16.msra.mxu0 %v4375
    %5593 = vmatprep.subr.bf16.mxu0 %v4369
    %5594 = vmatpush1.bf16.msra.mxu0 %v4368
    %5595 = vmatprep.subr.bf16.mxu0 %v4362
    %5596 = vmatpush1.bf16.msra.mxu0 %v4361
    %5597 = vmatprep.subr.bf16.mxu0 %v4467
    %5598 = vmatpush2.bf16.msra.mxu0 %v4466
    %5599 = vmatprep.subr.bf16.mxu0 %v4460
    %5600 = vmatpush2.bf16.msra.mxu0 %v4459
    %5601 = vmatprep.subr.bf16.mxu0 %v4453
    %5602 = vmatpush2.bf16.msra.mxu0 %v4452
    %5603 = vmatprep.subr.bf16.mxu0 %v4446
    %5604 = vmatpush2.bf16.msra.mxu0 %v4445
    %5605 = vmatprep.subr.bf16.mxu0 %v4439
    %5606 = vmatpush2.bf16.msra.mxu0 %v4438
    %5607 = vmatprep.subr.bf16.mxu0 %v4432
    %5608 = vmatpush2.bf16.msra.mxu0 %v4431
    %5609 = vmatprep.subr.bf16.mxu0 %v4425
    %5610 = vmatpush2.bf16.msra.mxu0 %v4424
    %5611 = vmatprep.subr.bf16.mxu0 %v4418
    %5612 = vmatpush2.bf16.msra.mxu0 %v4417
    %5613 = vmatprep.mubr.bf16.mxu0 %v2393
    %5614 = vmatmul.mubr.bf16.gmra.mxu0 %v2392
    %v5615 = vpop.f32.mrf.mxu0
    %v5616 = vadd.f32 %v2933, %v5615
    %v5617 = vpop.f32.mrf.mxu0
    %v5618 = vadd.f32 %v2937, %v5617
    %v5619 = vpop.f32.mrf.mxu0
    %v5620 = vpop.f32.mrf.mxu0
    %5621 = vdwg.mxu0
    %5622 = vmatprep.subr.bf16.mxu0 %v4523
    %5623 = vmatpush1.bf16.msra.mxu0 %v4522
    %5624 = vmatprep.subr.bf16.mxu0 %v4516
    %5625 = vmatpush1.bf16.msra.mxu0 %v4515
    %5626 = vmatprep.subr.bf16.mxu0 %v4509
    %5627 = vmatpush1.bf16.msra.mxu0 %v4508
    %5628 = vmatprep.subr.bf16.mxu0 %v4502
    %5629 = vmatpush1.bf16.msra.mxu0 %v4501
    %5630 = vmatprep.subr.bf16.mxu0 %v4495
    %5631 = vmatpush1.bf16.msra.mxu0 %v4494
    %5632 = vmatprep.subr.bf16.mxu0 %v4488
    %5633 = vmatpush1.bf16.msra.mxu0 %v4487
    %5634 = vmatprep.subr.bf16.mxu0 %v4481
    %5635 = vmatpush1.bf16.msra.mxu0 %v4480
    %5636 = vmatprep.subr.bf16.mxu0 %v4474
    %5637 = vmatpush1.bf16.msra.mxu0 %v4473
    %5638 = vmatprep.subr.bf16.mxu0 %v4579
    %5639 = vmatpush2.bf16.msra.mxu0 %v4578
    %5640 = vmatprep.subr.bf16.mxu0 %v4572
    %5641 = vmatpush2.bf16.msra.mxu0 %v4571
    %5642 = vmatprep.subr.bf16.mxu0 %v4565
    %5643 = vmatpush2.bf16.msra.mxu0 %v4564
    %5644 = vmatprep.subr.bf16.mxu0 %v4558
    %5645 = vmatpush2.bf16.msra.mxu0 %v4557
    %5646 = vmatprep.subr.bf16.mxu0 %v4551
    %5647 = vmatpush2.bf16.msra.mxu0 %v4550
    %5648 = vmatprep.subr.bf16.mxu0 %v4544
    %5649 = vmatpush2.bf16.msra.mxu0 %v4543
    %5650 = vmatprep.subr.bf16.mxu0 %v4537
    %5651 = vmatpush2.bf16.msra.mxu0 %v4536
    %5652 = vmatprep.subr.bf16.mxu0 %v4530
    %5653 = vmatpush2.bf16.msra.mxu0 %v4529
    %5654 = vmatprep.mubr.bf16.mxu0 %v2395
    %5655 = vmatmul.mubr.bf16.gmra.mxu0 %v2394
    %v5656 = vpop.f32.mrf.mxu0
    %v5657 = vadd.f32 %v5616, %v5656
    %v5658 = vpop.f32.mrf.mxu0
    %v5659 = vadd.f32 %v5618, %v5658
    %v5660 = vpop.f32.mrf.mxu0
    %v5661 = vpop.f32.mrf.mxu0
    %5662 = vdwg.mxu0
    %5663 = vmatprep.subr.bf16.mxu0 %v4635
    %5664 = vmatpush1.bf16.msra.mxu0 %v4634
    %5665 = vmatprep.subr.bf16.mxu0 %v4628
    %5666 = vmatpush1.bf16.msra.mxu0 %v4627
    %5667 = vmatprep.subr.bf16.mxu0 %v4621
    %5668 = vmatpush1.bf16.msra.mxu0 %v4620
    %5669 = vmatprep.subr.bf16.mxu0 %v4614
    %5670 = vmatpush1.bf16.msra.mxu0 %v4613
    %5671 = vmatprep.subr.bf16.mxu0 %v4607
    %5672 = vmatpush1.bf16.msra.mxu0 %v4606
    %5673 = vmatprep.subr.bf16.mxu0 %v4600
    %5674 = vmatpush1.bf16.msra.mxu0 %v4599
    %5675 = vmatprep.subr.bf16.mxu0 %v4593
    %5676 = vmatpush1.bf16.msra.mxu0 %v4592
    %5677 = vmatprep.subr.bf16.mxu0 %v4586
    %5678 = vmatpush1.bf16.msra.mxu0 %v4585
    %5679 = vmatprep.subr.bf16.mxu0 %v4691
    %5680 = vmatpush2.bf16.msra.mxu0 %v4690
    %5681 = vmatprep.subr.bf16.mxu0 %v4684
    %5682 = vmatpush2.bf16.msra.mxu0 %v4683
    %5683 = vmatprep.subr.bf16.mxu0 %v4677
    %5684 = vmatpush2.bf16.msra.mxu0 %v4676
    %5685 = vmatprep.subr.bf16.mxu0 %v4670
    %5686 = vmatpush2.bf16.msra.mxu0 %v4669
    %5687 = vmatprep.subr.bf16.mxu0 %v4663
    %5688 = vmatpush2.bf16.msra.mxu0 %v4662
    %5689 = vmatprep.subr.bf16.mxu0 %v4656
    %5690 = vmatpush2.bf16.msra.mxu0 %v4655
    %5691 = vmatprep.subr.bf16.mxu0 %v4649
    %5692 = vmatpush2.bf16.msra.mxu0 %v4648
    %5693 = vmatprep.subr.bf16.mxu0 %v4642
    %5694 = vmatpush2.bf16.msra.mxu0 %v4641
    %5695 = vmatprep.mubr.bf16.mxu0 %v2397
    %5696 = vmatmul.mubr.bf16.gmra.mxu0 %v2396
    %v5697 = vpop.f32.mrf.mxu0
    %v5698 = vadd.f32 %v5657, %v5697
    %v5699 = vpop.f32.mrf.mxu0
    %v5700 = vadd.f32 %v5659, %v5699
    %v5701 = vpop.f32.mrf.mxu0
    %v5702 = vpop.f32.mrf.mxu0
    %5703 = vdwg.mxu0
    %5704 = vmatprep.subr.bf16.mxu0 %v4747
    %5705 = vmatpush1.bf16.msra.mxu0 %v4746
    %5706 = vmatprep.subr.bf16.mxu0 %v4740
    %5707 = vmatpush1.bf16.msra.mxu0 %v4739
    %5708 = vmatprep.subr.bf16.mxu0 %v4733
    %5709 = vmatpush1.bf16.msra.mxu0 %v4732
    %5710 = vmatprep.subr.bf16.mxu0 %v4726
    %5711 = vmatpush1.bf16.msra.mxu0 %v4725
    %5712 = vmatprep.subr.bf16.mxu0 %v4719
    %5713 = vmatpush1.bf16.msra.mxu0 %v4718
    %5714 = vmatprep.subr.bf16.mxu0 %v4712
    %5715 = vmatpush1.bf16.msra.mxu0 %v4711
    %5716 = vmatprep.subr.bf16.mxu0 %v4705
    %5717 = vmatpush1.bf16.msra.mxu0 %v4704
    %5718 = vmatprep.subr.bf16.mxu0 %v4698
    %5719 = vmatpush1.bf16.msra.mxu0 %v4697
    %5720 = vmatprep.subr.bf16.mxu0 %v4803
    %5721 = vmatpush2.bf16.msra.mxu0 %v4802
    %5722 = vmatprep.subr.bf16.mxu0 %v4796
    %5723 = vmatpush2.bf16.msra.mxu0 %v4795
    %5724 = vmatprep.subr.bf16.mxu0 %v4789
    %5725 = vmatpush2.bf16.msra.mxu0 %v4788
    %5726 = vmatprep.subr.bf16.mxu0 %v4782
    %5727 = vmatpush2.bf16.msra.mxu0 %v4781
    %5728 = vmatprep.subr.bf16.mxu0 %v4775
    %5729 = vmatpush2.bf16.msra.mxu0 %v4774
    %5730 = vmatprep.subr.bf16.mxu0 %v4768
    %5731 = vmatpush2.bf16.msra.mxu0 %v4767
    %5732 = vmatprep.subr.bf16.mxu0 %v4761
    %5733 = vmatpush2.bf16.msra.mxu0 %v4760
    %5734 = vmatprep.subr.bf16.mxu0 %v4754
    %5735 = vmatpush2.bf16.msra.mxu0 %v4753
    %5736 = vmatprep.mubr.bf16.mxu0 %v2399
    %5737 = vmatmul.mubr.bf16.gmra.mxu0 %v2398
    %v5738 = vpop.f32.mrf.mxu0
    %v5739 = vadd.f32 %v5698, %v5738
    %v5740 = vpop.f32.mrf.mxu0
    %v5741 = vadd.f32 %v5700, %v5740
    %v5742 = vpop.f32.mrf.mxu0
    %v5743 = vpop.f32.mrf.mxu0
    %5744 = vdwg.mxu0
    %5745 = vmatprep.subr.bf16.mxu0 0
    %5746 = vmatpush1.bf16.msra.mxu0 %v4412
    %5747 = vmatprep.subr.bf16.mxu0 0
    %5748 = vmatpush1.bf16.msra.mxu0 %v4405
    %5749 = vmatprep.subr.bf16.mxu0 0
    %5750 = vmatpush1.bf16.msra.mxu0 %v4398
    %5751 = vmatprep.subr.bf16.mxu0 0
    %5752 = vmatpush1.bf16.msra.mxu0 %v4391
    %5753 = vmatprep.subr.bf16.mxu0 0
    %5754 = vmatpush1.bf16.msra.mxu0 %v4384
    %5755 = vmatprep.subr.bf16.mxu0 0
    %5756 = vmatpush1.bf16.msra.mxu0 %v4377
    %5757 = vmatprep.subr.bf16.mxu0 0
    %5758 = vmatpush1.bf16.msra.mxu0 %v4370
    %5759 = vmatprep.subr.bf16.mxu0 0
    %5760 = vmatpush1.bf16.msra.mxu0 %v4363
    %5761 = vmatprep.subr.bf16.mxu0 0
    %5762 = vmatpush2.bf16.msra.mxu0 %v4468
    %5763 = vmatprep.subr.bf16.mxu0 0
    %5764 = vmatpush2.bf16.msra.mxu0 %v4461
    %5765 = vmatprep.subr.bf16.mxu0 0
    %5766 = vmatpush2.bf16.msra.mxu0 %v4454
    %5767 = vmatprep.subr.bf16.mxu0 0
    %5768 = vmatpush2.bf16.msra.mxu0 %v4447
    %5769 = vmatprep.subr.bf16.mxu0 0
    %5770 = vmatpush2.bf16.msra.mxu0 %v4440
    %5771 = vmatprep.subr.bf16.mxu0 0
    %5772 = vmatpush2.bf16.msra.mxu0 %v4433
    %5773 = vmatprep.subr.bf16.mxu0 0
    %5774 = vmatpush2.bf16.msra.mxu0 %v4426
    %5775 = vmatprep.subr.bf16.mxu0 0
    %5776 = vmatpush2.bf16.msra.mxu0 %v4419
    %5777 = vmatprep.mubr.bf16.mxu0 %v2393
    %5778 = vmatmul.mubr.bf16.gmra.mxu0 %v2392
    %v5779 = vpop.f32.mrf.mxu0
    %v5780 = vadd.f32 %v2941, %v5779
    %v5781 = vpop.f32.mrf.mxu0
    %v5782 = vpop.f32.mrf.mxu0
    %v5783 = vpop.f32.mrf.mxu0
    %5784 = vdwg.mxu0
    %5785 = vmatprep.subr.bf16.mxu0 0
    %5786 = vmatpush1.bf16.msra.mxu0 %v4524
    %5787 = vmatprep.subr.bf16.mxu0 0
    %5788 = vmatpush1.bf16.msra.mxu0 %v4517
    %5789 = vmatprep.subr.bf16.mxu0 0
    %5790 = vmatpush1.bf16.msra.mxu0 %v4510
    %5791 = vmatprep.subr.bf16.mxu0 0
    %5792 = vmatpush1.bf16.msra.mxu0 %v4503
    %5793 = vmatprep.subr.bf16.mxu0 0
    %5794 = vmatpush1.bf16.msra.mxu0 %v4496
    %5795 = vmatprep.subr.bf16.mxu0 0
    %5796 = vmatpush1.bf16.msra.mxu0 %v4489
    %5797 = vmatprep.subr.bf16.mxu0 0
    %5798 = vmatpush1.bf16.msra.mxu0 %v4482
    %5799 = vmatprep.subr.bf16.mxu0 0
    %5800 = vmatpush1.bf16.msra.mxu0 %v4475
    %5801 = vmatprep.subr.bf16.mxu0 0
    %5802 = vmatpush2.bf16.msra.mxu0 %v4580
    %5803 = vmatprep.subr.bf16.mxu0 0
    %5804 = vmatpush2.bf16.msra.mxu0 %v4573
    %5805 = vmatprep.subr.bf16.mxu0 0
    %5806 = vmatpush2.bf16.msra.mxu0 %v4566
    %5807 = vmatprep.subr.bf16.mxu0 0
    %5808 = vmatpush2.bf16.msra.mxu0 %v4559
    %5809 = vmatprep.subr.bf16.mxu0 0
    %5810 = vmatpush2.bf16.msra.mxu0 %v4552
    %5811 = vmatprep.subr.bf16.mxu0 0
    %5812 = vmatpush2.bf16.msra.mxu0 %v4545
    %5813 = vmatprep.subr.bf16.mxu0 0
    %5814 = vmatpush2.bf16.msra.mxu0 %v4538
    %5815 = vmatprep.subr.bf16.mxu0 0
    %5816 = vmatpush2.bf16.msra.mxu0 %v4531
    %5817 = vmatprep.mubr.bf16.mxu0 %v2395
    %5818 = vmatmul.mubr.bf16.gmra.mxu0 %v2394
    %v5819 = vpop.f32.mrf.mxu0
    %v5820 = vadd.f32 %v5780, %v5819
    %v5821 = vpop.f32.mrf.mxu0
    %v5822 = vpop.f32.mrf.mxu0
    %v5823 = vpop.f32.mrf.mxu0
    %5824 = vdwg.mxu0
    %5825 = vmatprep.subr.bf16.mxu0 0
    %5826 = vmatpush1.bf16.msra.mxu0 %v4636
    %5827 = vmatprep.subr.bf16.mxu0 0
    %5828 = vmatpush1.bf16.msra.mxu0 %v4629
    %5829 = vmatprep.subr.bf16.mxu0 0
    %5830 = vmatpush1.bf16.msra.mxu0 %v4622
    %5831 = vmatprep.subr.bf16.mxu0 0
    %5832 = vmatpush1.bf16.msra.mxu0 %v4615
    %5833 = vmatprep.subr.bf16.mxu0 0
    %5834 = vmatpush1.bf16.msra.mxu0 %v4608
    %5835 = vmatprep.subr.bf16.mxu0 0
    %5836 = vmatpush1.bf16.msra.mxu0 %v4601
    %5837 = vmatprep.subr.bf16.mxu0 0
    %5838 = vmatpush1.bf16.msra.mxu0 %v4594
    %5839 = vmatprep.subr.bf16.mxu0 0
    %5840 = vmatpush1.bf16.msra.mxu0 %v4587
    %5841 = vmatprep.subr.bf16.mxu0 0
    %5842 = vmatpush2.bf16.msra.mxu0 %v4692
    %5843 = vmatprep.subr.bf16.mxu0 0
    %5844 = vmatpush2.bf16.msra.mxu0 %v4685
    %5845 = vmatprep.subr.bf16.mxu0 0
    %5846 = vmatpush2.bf16.msra.mxu0 %v4678
    %5847 = vmatprep.subr.bf16.mxu0 0
    %5848 = vmatpush2.bf16.msra.mxu0 %v4671
    %5849 = vmatprep.subr.bf16.mxu0 0
    %5850 = vmatpush2.bf16.msra.mxu0 %v4664
    %5851 = vmatprep.subr.bf16.mxu0 0
    %5852 = vmatpush2.bf16.msra.mxu0 %v4657
    %5853 = vmatprep.subr.bf16.mxu0 0
    %5854 = vmatpush2.bf16.msra.mxu0 %v4650
    %5855 = vmatprep.subr.bf16.mxu0 0
    %5856 = vmatpush2.bf16.msra.mxu0 %v4643
    %5857 = vmatprep.mubr.bf16.mxu0 %v2397
    %5858 = vmatmul.mubr.bf16.gmra.mxu0 %v2396
    %v5859 = vpop.f32.mrf.mxu0
    %v5860 = vadd.f32 %v5820, %v5859
    %v5861 = vpop.f32.mrf.mxu0
    %v5862 = vpop.f32.mrf.mxu0
    %v5863 = vpop.f32.mrf.mxu0
    %5864 = vdwg.mxu0
    %5865 = vmatprep.subr.bf16.mxu0 0
    %5866 = vmatpush1.bf16.msra.mxu0 %v4748
    %5867 = vmatprep.subr.bf16.mxu0 0
    %5868 = vmatpush1.bf16.msra.mxu0 %v4741
    %5869 = vmatprep.subr.bf16.mxu0 0
    %5870 = vmatpush1.bf16.msra.mxu0 %v4734
    %5871 = vmatprep.subr.bf16.mxu0 0
    %5872 = vmatpush1.bf16.msra.mxu0 %v4727
    %5873 = vmatprep.subr.bf16.mxu0 0
    %5874 = vmatpush1.bf16.msra.mxu0 %v4720
    %5875 = vmatprep.subr.bf16.mxu0 0
    %5876 = vmatpush1.bf16.msra.mxu0 %v4713
    %5877 = vmatprep.subr.bf16.mxu0 0
    %5878 = vmatpush1.bf16.msra.mxu0 %v4706
    %5879 = vmatprep.subr.bf16.mxu0 0
    %5880 = vmatpush1.bf16.msra.mxu0 %v4699
    %5881 = vmatprep.subr.bf16.mxu0 0
    %5882 = vmatpush2.bf16.msra.mxu0 %v4804
    %5883 = vmatprep.subr.bf16.mxu0 0
    %5884 = vmatpush2.bf16.msra.mxu0 %v4797
    %5885 = vmatprep.subr.bf16.mxu0 0
    %5886 = vmatpush2.bf16.msra.mxu0 %v4790
    %5887 = vmatprep.subr.bf16.mxu0 0
    %5888 = vmatpush2.bf16.msra.mxu0 %v4783
    %5889 = vmatprep.subr.bf16.mxu0 0
    %5890 = vmatpush2.bf16.msra.mxu0 %v4776
    %5891 = vmatprep.subr.bf16.mxu0 0
    %5892 = vmatpush2.bf16.msra.mxu0 %v4769
    %5893 = vmatprep.subr.bf16.mxu0 0
    %5894 = vmatpush2.bf16.msra.mxu0 %v4762
    %5895 = vmatprep.subr.bf16.mxu0 0
    %5896 = vmatpush2.bf16.msra.mxu0 %v4755
    %5897 = vmatprep.mubr.bf16.mxu0 %v2399
    %5898 = vmatmul.mubr.bf16.gmra.mxu0 %v2398
    %v5899 = vpop.f32.mrf.mxu0
    %v5900 = vadd.f32 %v5860, %v5899
    %v5901 = vpop.f32.mrf.mxu0
    %v5902 = vpop.f32.mrf.mxu0
    %v5903 = vpop.f32.mrf.mxu0
    %5904 = vdwg.mxu0
    %v5905 = vmul.f32 %v5411, 0.5
    %v5906 = vmul.f32 %v5413, 0.5
    %v5907 = vmul.f32 %v5575, 0.5
    %v5908 = vmul.f32 %v5577, 0.5
    %v5909 = vmul.f32 %v5739, 0.5
    %v5910 = vmul.f32 %v5741, 0.5
    %v5911 = vmul.f32 %v5900, 0.5
    %v5912 = vtanh.pop %v5905
    %v5913 = vtanh.pop %v5906
    %v5914 = vtanh.pop %v5907
    %v5915 = vtanh.pop %v5908
    %v5916 = vtanh.pop %v5909
    %v5917 = vtanh.pop %v5910
    %v5918 = vtanh.pop %v5911
    %v5919 = vmul.f32 %v5912, 0.5
    %v5920 = vmul.f32 %v5913, 0.5
    %v5921 = vmul.f32 %v5914, 0.5
    %v5922 = vmul.f32 %v5915, 0.5
    %v5923 = vmul.f32 %v5916, 0.5
    %v5924 = vmul.f32 %v5917, 0.5
    %v5925 = vmul.f32 %v5918, 0.5
    %v5926 = vadd.f32 %v5919, 0.5
    %v5927 = vadd.f32 %v5920, 0.5
    %v5928 = vadd.f32 %v5921, 0.5
    %v5929 = vadd.f32 %v5922, 0.5
    %v5930 = vadd.f32 %v5923, 0.5
    %v5931 = vadd.f32 %v5924, 0.5
    %v5932 = vadd.f32 %v5925, 0.5
    %v5933 = vpack.c.bf16 %v5926, %v5926
    %v5934 = vpack.c.bf16 %v5927, %v5927
    %v5935 = vpack.c.bf16 %v5928, %v5928
    %v5936 = vpack.c.bf16 %v5929, %v5929
    %v5937 = vpack.c.bf16 %v5930, %v5930
    %v5938 = vpack.c.bf16 %v5931, %v5931
    %v5939 = vpack.c.bf16 %v5932, %v5932
    %v5947 = vunpack.c.l.b16 %v5933
    %v5948 = vunpack.c.l.b16 %v5934
    %v5949 = vunpack.c.l.b16 %v5935
    %v5950 = vunpack.c.l.b16 %v5936
    %v5951 = vunpack.c.l.b16 %v5937
    %v5952 = vunpack.c.l.b16 %v5938
    %v5953 = vunpack.c.l.b16 %v5939
    %v5954 = vpack.c.b16 %v5948, %v5947
    %v5955 = vpack.c.b16 %v5950, %v5949
    %v5956 = vpack.c.b16 %v5952, %v5951
    %v5957 = vpack.c.b16 %v5953, %v5953
    %5962 = vst [vmem:[#allocation14] sm:$0xff] %v5954
    %5963 = vst [vmem:[#allocation14 + $0x8] sm:$0xff] %v5955
    %5964 = vst [vmem:[#allocation14 + $0x10] sm:$0xff] %v5956
    %5965 = vst [vmem:[#allocation14 + $0x18] sm:$0xf] %v5957
    // Predicated region
    $region58: #{tpu_custom_call.1} parent=1 // pred_check
      _
    $region59: #{tpu_custom_call.1} parent=1 // pred_check_branch
      %5967 = sbr.rel (0) target = $region61
    $region60: #{tpu_custom_call.1} parent=1 // pred_region
      %s5969 = ssub.s32 448, 448
      %5970 = vsyncadd [#allocation4], %s5969
      %s5972 = sshll.u32 [#allocation14], 4
      %s5973 = int_to_ptr.vmem [resolvable:$true] %s5972
      %5975 = dma.vmem_to_hbm [thread:$0]  %s5973, 448, %s7, [#allocation4]
    $region61: #{tpu_custom_call.1} parent=1 // pred_fallthru
      _
    // Predicated region
    $region62: #{tpu_custom_call.1} parent=1 // pred_check
      _
    $region63: #{tpu_custom_call.1} parent=1 // pred_check_branch
      %5977 = sbr.rel (0) target = $region65
    $region64: #{tpu_custom_call.1} parent=1 // pred_region
      %5978 = dma.done [#allocation4], 448
    $region65: #{tpu_custom_call.1} parent=1 // pred_fallthru
      _
    %5979 = vsyncpa [#allocation3], 1
    %5980 = vsyncpa [#allocation6], 1
    %5981 = vsyncpa [#allocation9], 1
    %5982 = vsyncpa [#allocation12], 1
    %5983 = vsyncpa [#allocation4], 1

</llo_original>
